<compile_context>
chip_gen: v6e
topology: v6e:2x2x1
jax: 0.10.0
libtpu: 0.0.40
codegen_flags: <defaults>
</compile_context>

<pallas_src>
import jax
import jax.numpy as jnp
from jax import lax
from jax.experimental import pallas as pl
from jax.experimental.pallas import tpu as pltpu


# ----------------------------------------------------------------------------
# Pallas kernel: in-VMEM im2col + one MXU matmul + ReLU per (image, row tile)
# ----------------------------------------------------------------------------
def ppdm_kernel(w_ref, xa_ref, xb_ref, o_ref, xwin_ref, patch_ref, acc_ref):
    # w_ref    : (Cout, Kp)          effective 5x5 weight, K=25*Cin padded to Kp (80)
    # xa_ref   : (1, Cin, TH*Wp)     this tile's TH padded rows, row-major flat
    # xb_ref   : (1, Cin, 8*Wp)      next 8 padded rows (halo)
    # o_ref    : (1, Cout, TH, W)    output tile (NCHW)
    # xwin_ref : (Cin, (TH+8)*Wp)    VMEM: contiguous flattened window
    # patch_ref: (Kp, TH*Wp)         VMEM: im2col patch
    # acc_ref  : (Cout, TH*Wp)       VMEM: matmul result
    _, cin, m = xa_ref.shape          # m = TH * Wp
    _, cout, th, w_out = o_ref.shape
    wp = m // th
    kp = patch_ref.shape[0]
    k = 25 * cin

    # 1) contiguous flattened window: TH + 8 padded rows of this tile
    xwin_ref[:, :m] = xa_ref[0]
    xwin_ref[:, m:] = xb_ref[0]

    # 2) im2col in VMEM: 25 static lane-slices of the flattened window.
    #    patch[(kh*5+kw)*Cin + c, r*Wp + w] = xwin[c, (r+kh)*Wp + (w+kw)]
    for kh in range(5):
        for kw in range(5):
            tap = kh * 5 + kw
            s = kh * wp + kw
            patch_ref[tap * cin:(tap + 1) * cin, :] = xwin_ref[:, s:s + m]
    if kp > k:  # keep the (zero-weighted) pad rows deterministic every step
        patch_ref[k:kp, :] = jnp.zeros((kp - k, m), jnp.float32)

    # 3) one MXU matmul + ReLU, f32 operands at full precision
    acc_ref[...] = jnp.maximum(
        jnp.dot(w_ref[...], patch_ref[...],
                preferred_element_type=jnp.float32,
                precision=lax.Precision.HIGHEST),
        0.0)

    # 4) store only the valid W columns of each output row (skip garbage cols)
    for r in range(th):
        o_ref[0, :, r, :] = acc_ref[:, r * wp:r * wp + w_out].astype(o_ref.dtype)


def _round_up(v, m):
    return ((v + m - 1) // m) * m


def _pick_tile_rows(H, W):
    # ~16K output elements per grid step; multiple of 8; capped for the
    # unrolled per-row store loop and VMEM.
    th = 16384 // max(W, 1)
    th = max(8, min(64, (th // 8) * 8))
    return min(th, _round_up(H, 8))


def ppdm_pallas(x_nchw, w5_eff):
    """x_nchw: (N, Cin, H, W) f32.  w5_eff: (Cout, Cin, 5, 5) folded weight (already /4)."""
    N, Cin, H, W = x_nchw.shape
    Cout = w5_eff.shape[0]

    TH = _pick_tile_rows(H, W)            # output rows per grid step (multiple of 8)
    H_pad = _round_up(H, TH)
    T = H_pad // TH
    Wp = _round_up(W + 4, 16)             # 2+2 conv halo, padded so flat blocks are 128-aligned
    M = TH * Wp
    K = 25 * Cin
    Kp = _round_up(K, 8)

    # zero-pad (conv halo + alignment + halo-block slack) and flatten (rows, Wp)
    xp = jnp.pad(x_nchw.astype(jnp.float32),
                 ((0, 0), (0, 0), (2, H_pad - H + 6), (2, Wp - W - 2)))
    x_flat = xp.reshape(N, Cin, (H_pad + 8) * Wp)

    # effective 5x5 weight -> (Cout, K), tap-major (kh, kw, c) ordering, pad K -> Kp
    w_mat = jnp.transpose(w5_eff, (0, 2, 3, 1)).reshape(Cout, K)
    w_mat = jnp.pad(w_mat, ((0, 0), (0, Kp - K))).astype(jnp.float32)

    out = pl.pallas_call(
        ppdm_kernel,
        out_shape=jax.ShapeDtypeStruct((N, Cout, H_pad, W), jnp.float32),
        grid_spec=pltpu.PrefetchScalarGridSpec(
            num_scalar_prefetch=0,
            grid=(N, T),
            in_specs=[
                # tiny weight, VMEM resident
                pl.BlockSpec((Cout, Kp), lambda n, t: (0, 0)),
                # main rows of this tile (flattened, contiguous)
                pl.BlockSpec((1, Cin, M), lambda n, t: (n, 0, t)),
                # 8-row halo (same array, next rows)
                pl.BlockSpec((1, Cin, 8 * Wp),
                             lambda n, t: (n, 0, (t + 1) * (TH // 8))),
            ],
            out_specs=pl.BlockSpec((1, Cout, TH, W), lambda n, t: (n, 0, t, 0)),
            scratch_shapes=[
                pltpu.VMEM((Cin, (TH + 8) * Wp), jnp.float32),  # flattened window
                pltpu.VMEM((Kp, M), jnp.float32),               # im2col patch
                pltpu.VMEM((Cout, M), jnp.float32),             # matmul result
            ],
        ),
        compiler_params=pltpu.CompilerParams(
            dimension_semantics=("parallel", "parallel"),
            vmem_limit_bytes=48 * 1024 * 1024),
    )(w_mat, x_flat, x_flat)

    if H_pad != H:
        out = out[:, :, :H, :]
    return out


# ----------------------------------------------------------------------------
# Parameter setup: fold cv / cd / ad / rd into one effective 5x5 kernel
# ----------------------------------------------------------------------------
def build_effective_weight(w_cv, w_cd, w_ad, w_rd):
    """All inputs: (Cout, Cin, 3, 3).  Returns (Cout, Cin, 5, 5), includes the /4."""
    O, Ci = w_cv.shape[0], w_cv.shape[1]

    # cv: vanilla 3x3
    eff_cv = w_cv

    # cd: conv3x3(W) - conv1x1(sum(W))  ==  conv3x3 with center reduced by sum(W)
    eff_cd = w_cd.at[:, :, 1, 1].add(-w_cd.sum(axis=(2, 3)))

    # ad: angular difference permutation of the 3x3 kernel
    flat_ad = w_ad.reshape(O, Ci, 9)
    perm = jnp.array([3, 0, 1, 6, 4, 2, 7, 8, 5])
    eff_ad = (flat_ad - flat_ad[:, :, perm]).reshape(O, Ci, 3, 3)

    # rd: 3x3 weights scattered onto a 5x5 kernel (pad 2), as in pidinet
    flat_rd = w_rd.reshape(O, Ci, 9)
    buf = jnp.zeros((O, Ci, 25), jnp.float32)
    outer_idx = jnp.array([0, 2, 4, 10, 14, 20, 22, 24])
    inner_idx = jnp.array([6, 7, 8, 11, 13, 16, 17, 18])
    buf = buf.at[:, :, outer_idx].set(flat_rd[:, :, 1:])
    buf = buf.at[:, :, inner_idx].set(-flat_rd[:, :, 1:])
    eff_rd = buf.reshape(O, Ci, 5, 5)

    w5 = jnp.zeros((O, Ci, 5, 5), jnp.float32)
    w5 = w5.at[:, :, 1:4, 1:4].add(eff_cv + eff_cd + eff_ad)
    w5 = w5 + eff_rd
    return w5 / 4.0


# ----------------------------------------------------------------------------
# Pure-JAX reference (mirrors the PyTorch branch-by-branch semantics)
# ----------------------------------------------------------------------------
def _conv_nchw(x, w, pad):
    return lax.conv_general_dilated(
        x, w, window_strides=(1, 1),
        padding=((pad, pad), (pad, pad)),
        dimension_numbers=("NCHW", "OIHW", "NCHW"),
        precision=lax.Precision.HIGHEST)


def ppdm_reference(x, w_cv, w_cd, w_ad, w_rd):
    O, Ci = w_cv.shape[0], w_cv.shape[1]
    # cv
    y_cv = _conv_nchw(x, w_cv, 1)
    # cd
    w_c = w_cd.sum(axis=(2, 3), keepdims=True)
    y_cd = _conv_nchw(x, w_cd, 1) - _conv_nchw(x, w_c, 0)
    # ad
    flat = w_ad.reshape(O, Ci, 9)
    perm = jnp.array([3, 0, 1, 6, 4, 2, 7, 8, 5])
    w_ad_eff = (flat - flat[:, :, perm]).reshape(O, Ci, 3, 3)
    y_ad = _conv_nchw(x, w_ad_eff, 1)
    # rd
    flat_rd = w_rd.reshape(O, Ci, 9)
    buf = jnp.zeros((O, Ci, 25), jnp.float32)
    buf = buf.at[:, :, jnp.array([0, 2, 4, 10, 14, 20, 22, 24])].set(flat_rd[:, :, 1:])
    buf = buf.at[:, :, jnp.array([6, 7, 8, 11, 13, 16, 17, 18])].set(-flat_rd[:, :, 1:])
    y_rd = _conv_nchw(x, buf.reshape(O, Ci, 5, 5), 2)

    y = (y_ad + y_cd + y_cv + y_rd) / 4.0
    return jnp.maximum(y, 0.0)


# ----------------------------------------------------------------------------
if __name__ == "__main__":
    key = jax.random.PRNGKey(0)
    N, Cin, H, W = 2, 3, 16, 16
    ouplane = 8

    k_x, k_cv, k_cd, k_ad, k_rd = jax.random.split(key, 5)
    x = jax.random.normal(k_x, (N, Cin, H, W), jnp.float32)
    # deterministic synthetic init (PyTorch uses kaiming_uniform; exact init is not semantic)
    w_cv = jax.random.normal(k_cv, (ouplane, Cin, 3, 3), jnp.float32) * 0.2
    w_cd = jax.random.normal(k_cd, (ouplane, Cin, 3, 3), jnp.float32) * 0.2
    w_ad = jax.random.normal(k_ad, (ouplane, Cin, 3, 3), jnp.float32) * 0.2
    w_rd = jax.random.normal(k_rd, (ouplane, Cin, 3, 3), jnp.float32) * 0.2

    w5 = build_effective_weight(w_cv, w_cd, w_ad, w_rd)

    out = jax.block_until_ready(jax.jit(ppdm_pallas)(x, w5))
    ref = jax.block_until_ready(ppdm_reference(x, w_cv, w_cd, w_ad, w_rd))

    assert out.shape == (N, ouplane, H, W), out.shape
    assert jnp.allclose(out, ref, rtol=1e-4, atol=1e-4), float(jnp.max(jnp.abs(out - ref)))

    print("KERNEL_OK")
</pallas_src>

<mosaic_0001>
module attributes {stable_mosaic.version = 11 : i64} {
  func.func @ppdm_kernel(%arg0: i32, %arg1: i32, %arg2: memref<8x80xf32, #tpu.memory_space<vmem>>, %arg3: memref<1x3x512xf32, #tpu.memory_space<vmem>>, %arg4: memref<1x3x256xf32, #tpu.memory_space<vmem>>, %arg5: memref<1x8x16x16xf32, #tpu.memory_space<vmem>>, %arg6: memref<3x768xf32, #tpu.memory_space<vmem>>, %arg7: memref<80x512xf32, #tpu.memory_space<vmem>>, %arg8: memref<8x512xf32, #tpu.memory_space<vmem>>) attributes {dimension_semantics = [#tpu.dimension_semantics<parallel>, #tpu.dimension_semantics<parallel>], iteration_bounds = array<i64: 2, 1>, scalar_prefetch = 0 : i64, scratch_operands = 3 : i64, tpu.core_type = #tpu.core_type<tc>, window_params = [{pipeline_mode = #tpu.pipeline_mode<synchronous>, transform_indices = @transform_0, window_bounds = array<i64: 8, 80>}, {transform_indices = @transform_1, window_bounds = array<i64: 1, 3, 512>}, {transform_indices = @transform_2, window_bounds = array<i64: 1, 3, 256>}, {transform_indices = @transform_3, window_bounds = array<i64: 1, 8, 16, 16>}]} {
    %c0 = arith.constant 0 : index
    %c0_0 = arith.constant 0 : index
    %c0_1 = arith.constant 0 : index
    %0 = vector.load %arg3[%c0, %c0_0, %c0_1] : memref<1x3x512xf32, #tpu.memory_space<vmem>>, vector<1x3x512xf32>
    %1 = vector.shape_cast %0 : vector<1x3x512xf32> to vector<3x512xf32>
    %c0_2 = arith.constant 0 : index
    %c0_3 = arith.constant 0 : index
    %2 = vector.load %arg6[%c0_2, %c0_3] : memref<3x768xf32, #tpu.memory_space<vmem>>, vector<3x512xf32>
    tpu.vector_store %arg6[%c0_2, %c0_3], %1 {strides = array<i32>} : memref<3x768xf32, #tpu.memory_space<vmem>>, vector<3x512xf32>,
    %c0_4 = arith.constant 0 : index
    %c0_5 = arith.constant 0 : index
    %c0_6 = arith.constant 0 : index
    %3 = vector.load %arg4[%c0_4, %c0_5, %c0_6] : memref<1x3x256xf32, #tpu.memory_space<vmem>>, vector<1x3x256xf32>
    %4 = vector.shape_cast %3 : vector<1x3x256xf32> to vector<3x256xf32>
    %c0_7 = arith.constant 0 : index
    %c512 = arith.constant 512 : index
    %5 = vector.load %arg6[%c0_7, %c512] : memref<3x768xf32, #tpu.memory_space<vmem>>, vector<3x256xf32>
    tpu.vector_store %arg6[%c0_7, %c512], %4 {strides = array<i32>} : memref<3x768xf32, #tpu.memory_space<vmem>>, vector<3x256xf32>,
    %c0_8 = arith.constant 0 : index
    %c0_9 = arith.constant 0 : index
    %6 = vector.load %arg6[%c0_8, %c0_9] : memref<3x768xf32, #tpu.memory_space<vmem>>, vector<3x512xf32>
    %c0_10 = arith.constant 0 : index
    %c0_11 = arith.constant 0 : index
    %7 = vector.load %arg7[%c0_10, %c0_11] : memref<80x512xf32, #tpu.memory_space<vmem>>, vector<3x512xf32>
    tpu.vector_store %arg7[%c0_10, %c0_11], %6 {strides = array<i32>} : memref<80x512xf32, #tpu.memory_space<vmem>>, vector<3x512xf32>,
    %c0_12 = arith.constant 0 : index
    %c1 = arith.constant 1 : index
    %8 = vector.load %arg6[%c0_12, %c1] : memref<3x768xf32, #tpu.memory_space<vmem>>, vector<3x512xf32>
    %c3 = arith.constant 3 : index
    %c0_13 = arith.constant 0 : index
    %9 = vector.load %arg7[%c3, %c0_13] : memref<80x512xf32, #tpu.memory_space<vmem>>, vector<3x512xf32>
    tpu.vector_store %arg7[%c3, %c0_13], %8 {strides = array<i32>} : memref<80x512xf32, #tpu.memory_space<vmem>>, vector<3x512xf32>,
    %c0_14 = arith.constant 0 : index
    %c2 = arith.constant 2 : index
    %10 = vector.load %arg6[%c0_14, %c2] : memref<3x768xf32, #tpu.memory_space<vmem>>, vector<3x512xf32>
    %c6 = arith.constant 6 : index
    %c0_15 = arith.constant 0 : index
    %11 = vector.load %arg7[%c6, %c0_15] : memref<80x512xf32, #tpu.memory_space<vmem>>, vector<3x512xf32>
    tpu.vector_store %arg7[%c6, %c0_15], %10 {strides = array<i32>} : memref<80x512xf32, #tpu.memory_space<vmem>>, vector<3x512xf32>,
    %c0_16 = arith.constant 0 : index
    %c3_17 = arith.constant 3 : index
    %12 = vector.load %arg6[%c0_16, %c3_17] : memref<3x768xf32, #tpu.memory_space<vmem>>, vector<3x512xf32>
    %c9 = arith.constant 9 : index
    %c0_18 = arith.constant 0 : index
    %13 = vector.load %arg7[%c9, %c0_18] : memref<80x512xf32, #tpu.memory_space<vmem>>, vector<3x512xf32>
    tpu.vector_store %arg7[%c9, %c0_18], %12 {strides = array<i32>} : memref<80x512xf32, #tpu.memory_space<vmem>>, vector<3x512xf32>,
    %c0_19 = arith.constant 0 : index
    %c4 = arith.constant 4 : index
    %14 = vector.load %arg6[%c0_19, %c4] : memref<3x768xf32, #tpu.memory_space<vmem>>, vector<3x512xf32>
    %c12 = arith.constant 12 : index
    %c0_20 = arith.constant 0 : index
    %15 = vector.load %arg7[%c12, %c0_20] : memref<80x512xf32, #tpu.memory_space<vmem>>, vector<3x512xf32>
    tpu.vector_store %arg7[%c12, %c0_20], %14 {strides = array<i32>} : memref<80x512xf32, #tpu.memory_space<vmem>>, vector<3x512xf32>,
    %c0_21 = arith.constant 0 : index
    %c32 = arith.constant 32 : index
    %16 = vector.load %arg6[%c0_21, %c32] : memref<3x768xf32, #tpu.memory_space<vmem>>, vector<3x512xf32>
    %c15 = arith.constant 15 : index
    %c0_22 = arith.constant 0 : index
    %17 = vector.load %arg7[%c15, %c0_22] : memref<80x512xf32, #tpu.memory_space<vmem>>, vector<3x512xf32>
    tpu.vector_store %arg7[%c15, %c0_22], %16 {strides = array<i32>} : memref<80x512xf32, #tpu.memory_space<vmem>>, vector<3x512xf32>,
    %c0_23 = arith.constant 0 : index
    %c33 = arith.constant 33 : index
    %18 = vector.load %arg6[%c0_23, %c33] : memref<3x768xf32, #tpu.memory_space<vmem>>, vector<3x512xf32>
    %c18 = arith.constant 18 : index
    %c0_24 = arith.constant 0 : index
    %19 = vector.load %arg7[%c18, %c0_24] : memref<80x512xf32, #tpu.memory_space<vmem>>, vector<3x512xf32>
    tpu.vector_store %arg7[%c18, %c0_24], %18 {strides = array<i32>} : memref<80x512xf32, #tpu.memory_space<vmem>>, vector<3x512xf32>,
    %c0_25 = arith.constant 0 : index
    %c34 = arith.constant 34 : index
    %20 = vector.load %arg6[%c0_25, %c34] : memref<3x768xf32, #tpu.memory_space<vmem>>, vector<3x512xf32>
    %c21 = arith.constant 21 : index
    %c0_26 = arith.constant 0 : index
    %21 = vector.load %arg7[%c21, %c0_26] : memref<80x512xf32, #tpu.memory_space<vmem>>, vector<3x512xf32>
    tpu.vector_store %arg7[%c21, %c0_26], %20 {strides = array<i32>} : memref<80x512xf32, #tpu.memory_space<vmem>>, vector<3x512xf32>,
    %c0_27 = arith.constant 0 : index
    %c35 = arith.constant 35 : index
    %22 = vector.load %arg6[%c0_27, %c35] : memref<3x768xf32, #tpu.memory_space<vmem>>, vector<3x512xf32>
    %c24 = arith.constant 24 : index
    %c0_28 = arith.constant 0 : index
    %23 = vector.load %arg7[%c24, %c0_28] : memref<80x512xf32, #tpu.memory_space<vmem>>, vector<3x512xf32>
    tpu.vector_store %arg7[%c24, %c0_28], %22 {strides = array<i32>} : memref<80x512xf32, #tpu.memory_space<vmem>>, vector<3x512xf32>,
    %c0_29 = arith.constant 0 : index
    %c36 = arith.constant 36 : index
    %24 = vector.load %arg6[%c0_29, %c36] : memref<3x768xf32, #tpu.memory_space<vmem>>, vector<3x512xf32>
    %c27 = arith.constant 27 : index
    %c0_30 = arith.constant 0 : index
    %25 = vector.load %arg7[%c27, %c0_30] : memref<80x512xf32, #tpu.memory_space<vmem>>, vector<3x512xf32>
    tpu.vector_store %arg7[%c27, %c0_30], %24 {strides = array<i32>} : memref<80x512xf32, #tpu.memory_space<vmem>>, vector<3x512xf32>,
    %c0_31 = arith.constant 0 : index
    %c64 = arith.constant 64 : index
    %26 = vector.load %arg6[%c0_31, %c64] : memref<3x768xf32, #tpu.memory_space<vmem>>, vector<3x512xf32>
    %c30 = arith.constant 30 : index
    %c0_32 = arith.constant 0 : index
    %27 = vector.load %arg7[%c30, %c0_32] : memref<80x512xf32, #tpu.memory_space<vmem>>, vector<3x512xf32>
    tpu.vector_store %arg7[%c30, %c0_32], %26 {strides = array<i32>} : memref<80x512xf32, #tpu.memory_space<vmem>>, vector<3x512xf32>,
    %c0_33 = arith.constant 0 : index
    %c65 = arith.constant 65 : index
    %28 = vector.load %arg6[%c0_33, %c65] : memref<3x768xf32, #tpu.memory_space<vmem>>, vector<3x512xf32>
    %c33_34 = arith.constant 33 : index
    %c0_35 = arith.constant 0 : index
    %29 = vector.load %arg7[%c33_34, %c0_35] : memref<80x512xf32, #tpu.memory_space<vmem>>, vector<3x512xf32>
    tpu.vector_store %arg7[%c33_34, %c0_35], %28 {strides = array<i32>} : memref<80x512xf32, #tpu.memory_space<vmem>>, vector<3x512xf32>,
    %c0_36 = arith.constant 0 : index
    %c66 = arith.constant 66 : index
    %30 = vector.load %arg6[%c0_36, %c66] : memref<3x768xf32, #tpu.memory_space<vmem>>, vector<3x512xf32>
    %c36_37 = arith.constant 36 : index
    %c0_38 = arith.constant 0 : index
    %31 = vector.load %arg7[%c36_37, %c0_38] : memref<80x512xf32, #tpu.memory_space<vmem>>, vector<3x512xf32>
    tpu.vector_store %arg7[%c36_37, %c0_38], %30 {strides = array<i32>} : memref<80x512xf32, #tpu.memory_space<vmem>>, vector<3x512xf32>,
    %c0_39 = arith.constant 0 : index
    %c67 = arith.constant 67 : index
    %32 = vector.load %arg6[%c0_39, %c67] : memref<3x768xf32, #tpu.memory_space<vmem>>, vector<3x512xf32>
    %c39 = arith.constant 39 : index
    %c0_40 = arith.constant 0 : index
    %33 = vector.load %arg7[%c39, %c0_40] : memref<80x512xf32, #tpu.memory_space<vmem>>, vector<3x512xf32>
    tpu.vector_store %arg7[%c39, %c0_40], %32 {strides = array<i32>} : memref<80x512xf32, #tpu.memory_space<vmem>>, vector<3x512xf32>,
    %c0_41 = arith.constant 0 : index
    %c68 = arith.constant 68 : index
    %34 = vector.load %arg6[%c0_41, %c68] : memref<3x768xf32, #tpu.memory_space<vmem>>, vector<3x512xf32>
    %c42 = arith.constant 42 : index
    %c0_42 = arith.constant 0 : index
    %35 = vector.load %arg7[%c42, %c0_42] : memref<80x512xf32, #tpu.memory_space<vmem>>, vector<3x512xf32>
    tpu.vector_store %arg7[%c42, %c0_42], %34 {strides = array<i32>} : memref<80x512xf32, #tpu.memory_space<vmem>>, vector<3x512xf32>,
    %c0_43 = arith.constant 0 : index
    %c96 = arith.constant 96 : index
    %36 = vector.load %arg6[%c0_43, %c96] : memref<3x768xf32, #tpu.memory_space<vmem>>, vector<3x512xf32>
    %c45 = arith.constant 45 : index
    %c0_44 = arith.constant 0 : index
    %37 = vector.load %arg7[%c45, %c0_44] : memref<80x512xf32, #tpu.memory_space<vmem>>, vector<3x512xf32>
    tpu.vector_store %arg7[%c45, %c0_44], %36 {strides = array<i32>} : memref<80x512xf32, #tpu.memory_space<vmem>>, vector<3x512xf32>,
    %c0_45 = arith.constant 0 : index
    %c97 = arith.constant 97 : index
    %38 = vector.load %arg6[%c0_45, %c97] : memref<3x768xf32, #tpu.memory_space<vmem>>, vector<3x512xf32>
    %c48 = arith.constant 48 : index
    %c0_46 = arith.constant 0 : index
    %39 = vector.load %arg7[%c48, %c0_46] : memref<80x512xf32, #tpu.memory_space<vmem>>, vector<3x512xf32>
    tpu.vector_store %arg7[%c48, %c0_46], %38 {strides = array<i32>} : memref<80x512xf32, #tpu.memory_space<vmem>>, vector<3x512xf32>,
    %c0_47 = arith.constant 0 : index
    %c98 = arith.constant 98 : index
    %40 = vector.load %arg6[%c0_47, %c98] : memref<3x768xf32, #tpu.memory_space<vmem>>, vector<3x512xf32>
    %c51 = arith.constant 51 : index
    %c0_48 = arith.constant 0 : index
    %41 = vector.load %arg7[%c51, %c0_48] : memref<80x512xf32, #tpu.memory_space<vmem>>, vector<3x512xf32>
    tpu.vector_store %arg7[%c51, %c0_48], %40 {strides = array<i32>} : memref<80x512xf32, #tpu.memory_space<vmem>>, vector<3x512xf32>,
    %c0_49 = arith.constant 0 : index
    %c99 = arith.constant 99 : index
    %42 = vector.load %arg6[%c0_49, %c99] : memref<3x768xf32, #tpu.memory_space<vmem>>, vector<3x512xf32>
    %c54 = arith.constant 54 : index
    %c0_50 = arith.constant 0 : index
    %43 = vector.load %arg7[%c54, %c0_50] : memref<80x512xf32, #tpu.memory_space<vmem>>, vector<3x512xf32>
    tpu.vector_store %arg7[%c54, %c0_50], %42 {strides = array<i32>} : memref<80x512xf32, #tpu.memory_space<vmem>>, vector<3x512xf32>,
    %c0_51 = arith.constant 0 : index
    %c100 = arith.constant 100 : index
    %44 = vector.load %arg6[%c0_51, %c100] : memref<3x768xf32, #tpu.memory_space<vmem>>, vector<3x512xf32>
    %c57 = arith.constant 57 : index
    %c0_52 = arith.constant 0 : index
    %45 = vector.load %arg7[%c57, %c0_52] : memref<80x512xf32, #tpu.memory_space<vmem>>, vector<3x512xf32>
    tpu.vector_store %arg7[%c57, %c0_52], %44 {strides = array<i32>} : memref<80x512xf32, #tpu.memory_space<vmem>>, vector<3x512xf32>,
    %c0_53 = arith.constant 0 : index
    %c128 = arith.constant 128 : index
    %46 = vector.load %arg6[%c0_53, %c128] : memref<3x768xf32, #tpu.memory_space<vmem>>, vector<3x512xf32>
    %c60 = arith.constant 60 : index
    %c0_54 = arith.constant 0 : index
    %47 = vector.load %arg7[%c60, %c0_54] : memref<80x512xf32, #tpu.memory_space<vmem>>, vector<3x512xf32>
    tpu.vector_store %arg7[%c60, %c0_54], %46 {strides = array<i32>} : memref<80x512xf32, #tpu.memory_space<vmem>>, vector<3x512xf32>,
    %c0_55 = arith.constant 0 : index
    %c129 = arith.constant 129 : index
    %48 = vector.load %arg6[%c0_55, %c129] : memref<3x768xf32, #tpu.memory_space<vmem>>, vector<3x512xf32>
    %c63 = arith.constant 63 : index
    %c0_56 = arith.constant 0 : index
    %49 = vector.load %arg7[%c63, %c0_56] : memref<80x512xf32, #tpu.memory_space<vmem>>, vector<3x512xf32>
    tpu.vector_store %arg7[%c63, %c0_56], %48 {strides = array<i32>} : memref<80x512xf32, #tpu.memory_space<vmem>>, vector<3x512xf32>,
    %c0_57 = arith.constant 0 : index
    %c130 = arith.constant 130 : index
    %50 = vector.load %arg6[%c0_57, %c130] : memref<3x768xf32, #tpu.memory_space<vmem>>, vector<3x512xf32>
    %c66_58 = arith.constant 66 : index
    %c0_59 = arith.constant 0 : index
    %51 = vector.load %arg7[%c66_58, %c0_59] : memref<80x512xf32, #tpu.memory_space<vmem>>, vector<3x512xf32>
    tpu.vector_store %arg7[%c66_58, %c0_59], %50 {strides = array<i32>} : memref<80x512xf32, #tpu.memory_space<vmem>>, vector<3x512xf32>,
    %c0_60 = arith.constant 0 : index
    %c131 = arith.constant 131 : index
    %52 = vector.load %arg6[%c0_60, %c131] : memref<3x768xf32, #tpu.memory_space<vmem>>, vector<3x512xf32>
    %c69 = arith.constant 69 : index
    %c0_61 = arith.constant 0 : index
    %53 = vector.load %arg7[%c69, %c0_61] : memref<80x512xf32, #tpu.memory_space<vmem>>, vector<3x512xf32>
    tpu.vector_store %arg7[%c69, %c0_61], %52 {strides = array<i32>} : memref<80x512xf32, #tpu.memory_space<vmem>>, vector<3x512xf32>,
    %c0_62 = arith.constant 0 : index
    %c132 = arith.constant 132 : index
    %54 = vector.load %arg6[%c0_62, %c132] : memref<3x768xf32, #tpu.memory_space<vmem>>, vector<3x512xf32>
    %c72 = arith.constant 72 : index
    %c0_63 = arith.constant 0 : index
    %55 = vector.load %arg7[%c72, %c0_63] : memref<80x512xf32, #tpu.memory_space<vmem>>, vector<3x512xf32>
    tpu.vector_store %arg7[%c72, %c0_63], %54 {strides = array<i32>} : memref<80x512xf32, #tpu.memory_space<vmem>>, vector<3x512xf32>,
    %cst = arith.constant 0.000000e+00 : f32
    %56 = vector.broadcast %cst : f32 to vector<5x512xf32>
    %c75 = arith.constant 75 : index
    %c0_64 = arith.constant 0 : index
    %57 = vector.load %arg7[%c75, %c0_64] : memref<80x512xf32, #tpu.memory_space<vmem>>, vector<5x512xf32>
    tpu.vector_store %arg7[%c75, %c0_64], %56 {strides = array<i32>} : memref<80x512xf32, #tpu.memory_space<vmem>>, vector<5x512xf32>,
    %c0_65 = arith.constant 0 : index
    %c0_66 = arith.constant 0 : index
    %58 = vector.load %arg2[%c0_65, %c0_66] : memref<8x80xf32, #tpu.memory_space<vmem>>, vector<8x80xf32>
    %c0_67 = arith.constant 0 : index
    %c0_68 = arith.constant 0 : index
    %59 = vector.load %arg7[%c0_67, %c0_68] : memref<80x512xf32, #tpu.memory_space<vmem>>, vector<80x512xf32>
    %cst_69 = arith.constant dense<0.000000e+00> : vector<8x512xf32>
    %60 = tpu.matmul %58, %59, %cst_69 {dimension_numbers = #tpu.dot_dimension_numbers<[1], [0], [0], [1], [0, 0, 1, 1], [], []>, precision = #tpu.contract_precision<fp32>} : vector<8x80xf32>, vector<80x512xf32>, vector<8x512xf32> -> vector<8x512xf32>
    %cst_70 = arith.constant 0.000000e+00 : f32
    %61 = vector.broadcast %cst_70 : f32 to vector<8x512xf32>
    %62 = arith.maximumf %60, %61 : vector<8x512xf32>
    %c0_71 = arith.constant 0 : index
    %c0_72 = arith.constant 0 : index
    %63 = vector.load %arg8[%c0_71, %c0_72] : memref<8x512xf32, #tpu.memory_space<vmem>>, vector<8x512xf32>
    tpu.vector_store %arg8[%c0_71, %c0_72], %62 {strides = array<i32>} : memref<8x512xf32, #tpu.memory_space<vmem>>, vector<8x512xf32>,
    %c0_73 = arith.constant 0 : index
    %c0_74 = arith.constant 0 : index
    %64 = vector.load %arg8[%c0_73, %c0_74] : memref<8x512xf32, #tpu.memory_space<vmem>>, vector<8x16xf32>
    %c0_75 = arith.constant 0 : index
    %c0_76 = arith.constant 0 : index
    %c0_77 = arith.constant 0 : index
    %c0_78 = arith.constant 0 : index
    %65 = vector.load %arg5[%c0_75, %c0_76, %c0_77, %c0_78] : memref<1x8x16x16xf32, #tpu.memory_space<vmem>>, vector<1x8x1x16xf32>
    %66 = vector.shape_cast %65 : vector<1x8x1x16xf32> to vector<8x16xf32>
    %67 = vector.shape_cast %64 : vector<8x16xf32> to vector<1x8x1x16xf32>
    tpu.vector_store %arg5[%c0_75, %c0_76, %c0_77, %c0_78], %67 {strides = array<i32>} : memref<1x8x16x16xf32, #tpu.memory_space<vmem>>, vector<1x8x1x16xf32>,
    %c0_79 = arith.constant 0 : index
    %c32_80 = arith.constant 32 : index
    %68 = vector.load %arg8[%c0_79, %c32_80] : memref<8x512xf32, #tpu.memory_space<vmem>>, vector<8x16xf32>
    %c0_81 = arith.constant 0 : index
    %c0_82 = arith.constant 0 : index
    %c1_83 = arith.constant 1 : index
    %c0_84 = arith.constant 0 : index
    %69 = vector.load %arg5[%c0_81, %c0_82, %c1_83, %c0_84] : memref<1x8x16x16xf32, #tpu.memory_space<vmem>>, vector<1x8x1x16xf32>
    %70 = vector.shape_cast %69 : vector<1x8x1x16xf32> to vector<8x16xf32>
    %71 = vector.shape_cast %68 : vector<8x16xf32> to vector<1x8x1x16xf32>
    tpu.vector_store %arg5[%c0_81, %c0_82, %c1_83, %c0_84], %71 {strides = array<i32>} : memref<1x8x16x16xf32, #tpu.memory_space<vmem>>, vector<1x8x1x16xf32>,
    %c0_85 = arith.constant 0 : index
    %c64_86 = arith.constant 64 : index
    %72 = vector.load %arg8[%c0_85, %c64_86] : memref<8x512xf32, #tpu.memory_space<vmem>>, vector<8x16xf32>
    %c0_87 = arith.constant 0 : index
    %c0_88 = arith.constant 0 : index
    %c2_89 = arith.constant 2 : index
    %c0_90 = arith.constant 0 : index
    %73 = vector.load %arg5[%c0_87, %c0_88, %c2_89, %c0_90] : memref<1x8x16x16xf32, #tpu.memory_space<vmem>>, vector<1x8x1x16xf32>
    %74 = vector.shape_cast %73 : vector<1x8x1x16xf32> to vector<8x16xf32>
    %75 = vector.shape_cast %72 : vector<8x16xf32> to vector<1x8x1x16xf32>
    tpu.vector_store %arg5[%c0_87, %c0_88, %c2_89, %c0_90], %75 {strides = array<i32>} : memref<1x8x16x16xf32, #tpu.memory_space<vmem>>, vector<1x8x1x16xf32>,
    %c0_91 = arith.constant 0 : index
    %c96_92 = arith.constant 96 : index
    %76 = vector.load %arg8[%c0_91, %c96_92] : memref<8x512xf32, #tpu.memory_space<vmem>>, vector<8x16xf32>
    %c0_93 = arith.constant 0 : index
    %c0_94 = arith.constant 0 : index
    %c3_95 = arith.constant 3 : index
    %c0_96 = arith.constant 0 : index
    %77 = vector.load %arg5[%c0_93, %c0_94, %c3_95, %c0_96] : memref<1x8x16x16xf32, #tpu.memory_space<vmem>>, vector<1x8x1x16xf32>
    %78 = vector.shape_cast %77 : vector<1x8x1x16xf32> to vector<8x16xf32>
    %79 = vector.shape_cast %76 : vector<8x16xf32> to vector<1x8x1x16xf32>
    tpu.vector_store %arg5[%c0_93, %c0_94, %c3_95, %c0_96], %79 {strides = array<i32>} : memref<1x8x16x16xf32, #tpu.memory_space<vmem>>, vector<1x8x1x16xf32>,
    %c0_97 = arith.constant 0 : index
    %c128_98 = arith.constant 128 : index
    %80 = vector.load %arg8[%c0_97, %c128_98] : memref<8x512xf32, #tpu.memory_space<vmem>>, vector<8x16xf32>
    %c0_99 = arith.constant 0 : index
    %c0_100 = arith.constant 0 : index
    %c4_101 = arith.constant 4 : index
    %c0_102 = arith.constant 0 : index
    %81 = vector.load %arg5[%c0_99, %c0_100, %c4_101, %c0_102] : memref<1x8x16x16xf32, #tpu.memory_space<vmem>>, vector<1x8x1x16xf32>
    %82 = vector.shape_cast %81 : vector<1x8x1x16xf32> to vector<8x16xf32>
    %83 = vector.shape_cast %80 : vector<8x16xf32> to vector<1x8x1x16xf32>
    tpu.vector_store %arg5[%c0_99, %c0_100, %c4_101, %c0_102], %83 {strides = array<i32>} : memref<1x8x16x16xf32, #tpu.memory_space<vmem>>, vector<1x8x1x16xf32>,
    %c0_103 = arith.constant 0 : index
    %c160 = arith.constant 160 : index
    %84 = vector.load %arg8[%c0_103, %c160] : memref<8x512xf32, #tpu.memory_space<vmem>>, vector<8x16xf32>
    %c0_104 = arith.constant 0 : index
    %c0_105 = arith.constant 0 : index
    %c5 = arith.constant 5 : index
    %c0_106 = arith.constant 0 : index
    %85 = vector.load %arg5[%c0_104, %c0_105, %c5, %c0_106] : memref<1x8x16x16xf32, #tpu.memory_space<vmem>>, vector<1x8x1x16xf32>
    %86 = vector.shape_cast %85 : vector<1x8x1x16xf32> to vector<8x16xf32>
    %87 = vector.shape_cast %84 : vector<8x16xf32> to vector<1x8x1x16xf32>
    tpu.vector_store %arg5[%c0_104, %c0_105, %c5, %c0_106], %87 {strides = array<i32>} : memref<1x8x16x16xf32, #tpu.memory_space<vmem>>, vector<1x8x1x16xf32>,
    %c0_107 = arith.constant 0 : index
    %c192 = arith.constant 192 : index
    %88 = vector.load %arg8[%c0_107, %c192] : memref<8x512xf32, #tpu.memory_space<vmem>>, vector<8x16xf32>
    %c0_108 = arith.constant 0 : index
    %c0_109 = arith.constant 0 : index
    %c6_110 = arith.constant 6 : index
    %c0_111 = arith.constant 0 : index
    %89 = vector.load %arg5[%c0_108, %c0_109, %c6_110, %c0_111] : memref<1x8x16x16xf32, #tpu.memory_space<vmem>>, vector<1x8x1x16xf32>
    %90 = vector.shape_cast %89 : vector<1x8x1x16xf32> to vector<8x16xf32>
    %91 = vector.shape_cast %88 : vector<8x16xf32> to vector<1x8x1x16xf32>
    tpu.vector_store %arg5[%c0_108, %c0_109, %c6_110, %c0_111], %91 {strides = array<i32>} : memref<1x8x16x16xf32, #tpu.memory_space<vmem>>, vector<1x8x1x16xf32>,
    %c0_112 = arith.constant 0 : index
    %c224 = arith.constant 224 : index
    %92 = vector.load %arg8[%c0_112, %c224] : memref<8x512xf32, #tpu.memory_space<vmem>>, vector<8x16xf32>
    %c0_113 = arith.constant 0 : index
    %c0_114 = arith.constant 0 : index
    %c7 = arith.constant 7 : index
    %c0_115 = arith.constant 0 : index
    %93 = vector.load %arg5[%c0_113, %c0_114, %c7, %c0_115] : memref<1x8x16x16xf32, #tpu.memory_space<vmem>>, vector<1x8x1x16xf32>
    %94 = vector.shape_cast %93 : vector<1x8x1x16xf32> to vector<8x16xf32>
    %95 = vector.shape_cast %92 : vector<8x16xf32> to vector<1x8x1x16xf32>
    tpu.vector_store %arg5[%c0_113, %c0_114, %c7, %c0_115], %95 {strides = array<i32>} : memref<1x8x16x16xf32, #tpu.memory_space<vmem>>, vector<1x8x1x16xf32>,
    %c0_116 = arith.constant 0 : index
    %c256 = arith.constant 256 : index
    %96 = vector.load %arg8[%c0_116, %c256] : memref<8x512xf32, #tpu.memory_space<vmem>>, vector<8x16xf32>
    %c0_117 = arith.constant 0 : index
    %c0_118 = arith.constant 0 : index
    %c8 = arith.constant 8 : index
    %c0_119 = arith.constant 0 : index
    %97 = vector.load %arg5[%c0_117, %c0_118, %c8, %c0_119] : memref<1x8x16x16xf32, #tpu.memory_space<vmem>>, vector<1x8x1x16xf32>
    %98 = vector.shape_cast %97 : vector<1x8x1x16xf32> to vector<8x16xf32>
    %99 = vector.shape_cast %96 : vector<8x16xf32> to vector<1x8x1x16xf32>
    tpu.vector_store %arg5[%c0_117, %c0_118, %c8, %c0_119], %99 {strides = array<i32>} : memref<1x8x16x16xf32, #tpu.memory_space<vmem>>, vector<1x8x1x16xf32>,
    %c0_120 = arith.constant 0 : index
    %c288 = arith.constant 288 : index
    %100 = vector.load %arg8[%c0_120, %c288] : memref<8x512xf32, #tpu.memory_space<vmem>>, vector<8x16xf32>
    %c0_121 = arith.constant 0 : index
    %c0_122 = arith.constant 0 : index
    %c9_123 = arith.constant 9 : index
    %c0_124 = arith.constant 0 : index
    %101 = vector.load %arg5[%c0_121, %c0_122, %c9_123, %c0_124] : memref<1x8x16x16xf32, #tpu.memory_space<vmem>>, vector<1x8x1x16xf32>
    %102 = vector.shape_cast %101 : vector<1x8x1x16xf32> to vector<8x16xf32>
    %103 = vector.shape_cast %100 : vector<8x16xf32> to vector<1x8x1x16xf32>
    tpu.vector_store %arg5[%c0_121, %c0_122, %c9_123, %c0_124], %103 {strides = array<i32>} : memref<1x8x16x16xf32, #tpu.memory_space<vmem>>, vector<1x8x1x16xf32>,
    %c0_125 = arith.constant 0 : index
    %c320 = arith.constant 320 : index
    %104 = vector.load %arg8[%c0_125, %c320] : memref<8x512xf32, #tpu.memory_space<vmem>>, vector<8x16xf32>
    %c0_126 = arith.constant 0 : index
    %c0_127 = arith.constant 0 : index
    %c10 = arith.constant 10 : index
    %c0_128 = arith.constant 0 : index
    %105 = vector.load %arg5[%c0_126, %c0_127, %c10, %c0_128] : memref<1x8x16x16xf32, #tpu.memory_space<vmem>>, vector<1x8x1x16xf32>
    %106 = vector.shape_cast %105 : vector<1x8x1x16xf32> to vector<8x16xf32>
    %107 = vector.shape_cast %104 : vector<8x16xf32> to vector<1x8x1x16xf32>
    tpu.vector_store %arg5[%c0_126, %c0_127, %c10, %c0_128], %107 {strides = array<i32>} : memref<1x8x16x16xf32, #tpu.memory_space<vmem>>, vector<1x8x1x16xf32>,
    %c0_129 = arith.constant 0 : index
    %c352 = arith.constant 352 : index
    %108 = vector.load %arg8[%c0_129, %c352] : memref<8x512xf32, #tpu.memory_space<vmem>>, vector<8x16xf32>
    %c0_130 = arith.constant 0 : index
    %c0_131 = arith.constant 0 : index
    %c11 = arith.constant 11 : index
    %c0_132 = arith.constant 0 : index
    %109 = vector.load %arg5[%c0_130, %c0_131, %c11, %c0_132] : memref<1x8x16x16xf32, #tpu.memory_space<vmem>>, vector<1x8x1x16xf32>
    %110 = vector.shape_cast %109 : vector<1x8x1x16xf32> to vector<8x16xf32>
    %111 = vector.shape_cast %108 : vector<8x16xf32> to vector<1x8x1x16xf32>
    tpu.vector_store %arg5[%c0_130, %c0_131, %c11, %c0_132], %111 {strides = array<i32>} : memref<1x8x16x16xf32, #tpu.memory_space<vmem>>, vector<1x8x1x16xf32>,
    %c0_133 = arith.constant 0 : index
    %c384 = arith.constant 384 : index
    %112 = vector.load %arg8[%c0_133, %c384] : memref<8x512xf32, #tpu.memory_space<vmem>>, vector<8x16xf32>
    %c0_134 = arith.constant 0 : index
    %c0_135 = arith.constant 0 : index
    %c12_136 = arith.constant 12 : index
    %c0_137 = arith.constant 0 : index
    %113 = vector.load %arg5[%c0_134, %c0_135, %c12_136, %c0_137] : memref<1x8x16x16xf32, #tpu.memory_space<vmem>>, vector<1x8x1x16xf32>
    %114 = vector.shape_cast %113 : vector<1x8x1x16xf32> to vector<8x16xf32>
    %115 = vector.shape_cast %112 : vector<8x16xf32> to vector<1x8x1x16xf32>
    tpu.vector_store %arg5[%c0_134, %c0_135, %c12_136, %c0_137], %115 {strides = array<i32>} : memref<1x8x16x16xf32, #tpu.memory_space<vmem>>, vector<1x8x1x16xf32>,
    %c0_138 = arith.constant 0 : index
    %c416 = arith.constant 416 : index
    %116 = vector.load %arg8[%c0_138, %c416] : memref<8x512xf32, #tpu.memory_space<vmem>>, vector<8x16xf32>
    %c0_139 = arith.constant 0 : index
    %c0_140 = arith.constant 0 : index
    %c13 = arith.constant 13 : index
    %c0_141 = arith.constant 0 : index
    %117 = vector.load %arg5[%c0_139, %c0_140, %c13, %c0_141] : memref<1x8x16x16xf32, #tpu.memory_space<vmem>>, vector<1x8x1x16xf32>
    %118 = vector.shape_cast %117 : vector<1x8x1x16xf32> to vector<8x16xf32>
    %119 = vector.shape_cast %116 : vector<8x16xf32> to vector<1x8x1x16xf32>
    tpu.vector_store %arg5[%c0_139, %c0_140, %c13, %c0_141], %119 {strides = array<i32>} : memref<1x8x16x16xf32, #tpu.memory_space<vmem>>, vector<1x8x1x16xf32>,
    %c0_142 = arith.constant 0 : index
    %c448 = arith.constant 448 : index
    %120 = vector.load %arg8[%c0_142, %c448] : memref<8x512xf32, #tpu.memory_space<vmem>>, vector<8x16xf32>
    %c0_143 = arith.constant 0 : index
    %c0_144 = arith.constant 0 : index
    %c14 = arith.constant 14 : index
    %c0_145 = arith.constant 0 : index
    %121 = vector.load %arg5[%c0_143, %c0_144, %c14, %c0_145] : memref<1x8x16x16xf32, #tpu.memory_space<vmem>>, vector<1x8x1x16xf32>
    %122 = vector.shape_cast %121 : vector<1x8x1x16xf32> to vector<8x16xf32>
    %123 = vector.shape_cast %120 : vector<8x16xf32> to vector<1x8x1x16xf32>
    tpu.vector_store %arg5[%c0_143, %c0_144, %c14, %c0_145], %123 {strides = array<i32>} : memref<1x8x16x16xf32, #tpu.memory_space<vmem>>, vector<1x8x1x16xf32>,
    %c0_146 = arith.constant 0 : index
    %c480 = arith.constant 480 : index
    %124 = vector.load %arg8[%c0_146, %c480] : memref<8x512xf32, #tpu.memory_space<vmem>>, vector<8x16xf32>
    %c0_147 = arith.constant 0 : index
    %c0_148 = arith.constant 0 : index
    %c15_149 = arith.constant 15 : index
    %c0_150 = arith.constant 0 : index
    %125 = vector.load %arg5[%c0_147, %c0_148, %c15_149, %c0_150] : memref<1x8x16x16xf32, #tpu.memory_space<vmem>>, vector<1x8x1x16xf32>
    %126 = vector.shape_cast %125 : vector<1x8x1x16xf32> to vector<8x16xf32>
    %127 = vector.shape_cast %124 : vector<8x16xf32> to vector<1x8x1x16xf32>
    tpu.vector_store %arg5[%c0_147, %c0_148, %c15_149, %c0_150], %127 {strides = array<i32>} : memref<1x8x16x16xf32, #tpu.memory_space<vmem>>, vector<1x8x1x16xf32>,
    return
  }
  func.func @transform_0(%arg0: i32, %arg1: i32) -> (i32, i32) {
    %c0_i32 = arith.constant 0 : i32
    %c0_i32_0 = arith.constant 0 : i32
    %c0_i32_1 = arith.constant 0 : i32
    return %c0_i32, %c0_i32_0 : i32, i32
  }
  func.func @transform_1(%arg0: i32, %arg1: i32) -> (i32, i32, i32) {
    %c0_i32 = arith.constant 0 : i32
    %c0_i32_0 = arith.constant 0 : i32
    return %arg0, %c0_i32, %arg1 : i32, i32, i32
  }
  func.func @transform_2(%arg0: i32, %arg1: i32) -> (i32, i32, i32) {
    %c1_i32 = arith.constant 1 : i32
    %0 = arith.addi %arg1, %c1_i32 : i32
    %c2_i32 = arith.constant 2 : i32
    %1 = arith.muli %0, %c2_i32 : i32
    %c0_i32 = arith.constant 0 : i32
    %c0_i32_0 = arith.constant 0 : i32
    return %arg0, %c0_i32, %1 : i32, i32, i32
  }
  func.func @transform_3(%arg0: i32, %arg1: i32) -> (i32, i32, i32, i32) {
    %c0_i32 = arith.constant 0 : i32
    %c0_i32_0 = arith.constant 0 : i32
    %c0_i32_1 = arith.constant 0 : i32
    return %arg0, %c0_i32, %arg1, %c0_i32_0 : i32, i32, i32, i32
  }
}

</mosaic_0001>

<llo_original>
// kernel: ppdm_pallas.1
$region0: #{ppdm_pallas.1}
  #allocation0 [shape = 'u32[]', space=smem, size = 0x4, offset = 0x4, fixed_abs, tag = 'smem constant byte address 0x4 - core index']
  #allocation1 [shape = 'u32[144,128]{1,0:T(1,128)}', space=vmem, size = 0x12000, scoped, tag = 'internal scratch']
  #allocation2 [shape = 'f32[3,768]{1,0:T(4,128)}', space=vmem, size = 0x3000, scoped, tag = 'scratch operand']
  #allocation3 [shape = 'f32[80,512]{1,0:T(8,128)}', space=vmem, size = 0x28000, scoped, tag = 'scratch operand']
  #allocation4 [shape = 'f32[8,512]{1,0:T(8,128)}', space=vmem, size = 0x4000, scoped, tag = 'scratch operand']
  %s0 = inlined_call_operand.vmem [shape: f32[8,80], index: 0, kind: input, shape index: {}]
  %s1 = inlined_call_operand.vmem [shape: f32[2,3,768], index: 1, kind: input, shape index: {}, may-alias: {1,2}]
  %s2 = inlined_call_operand.vmem [shape: f32[2,3,768], index: 2, kind: input, shape index: {}, may-alias: {1,2}]
  %s3 = inlined_call_operand.hbm [shape: f32[2,8,16,16], index: 3, kind: output, shape index: {}]
  %s4 = sld [smem:[#allocation0]]
  $region45: #{ppdm_pallas.1} parent=0
    _
  %s6 = ssub.s32 1, %s4
  %s7 = scalar_select 0, %s6, %s4
  $region1: #{ppdm_pallas.1} parent=0
    #allocation5 [shape = 'u8[131072]{0}', space=vmem, size = 0x20000, scoped, tag = 'output window, operand 0']
    #allocation6 [shape = 's32[2]{0}', space=sflag, size = 0x8, scoped, tag = 'scoped memory for ppdm_pallas.1']
    %8 = vsyncpa [#allocation6], 0
    %s9 = scalar_lea.sflag [#allocation6], 1
    %10 = vsyncpa %s9, 0
    loop: start=0, step=1, limit=4
    $region2: #{ppdm_pallas.1} parent=1 // loop_pre_header
      _
    $region3: #{ppdm_pallas.1} parent=1 // loop_header
      %s12 = sphi 0, %s16
      %p13 = scmp.ge.s32.totalorder %s12, 4
      %s19 = sphi 0, %s31
      %s20 = sphi 0, %s27
      %s21 = sphi 0, %s19
      %s22 = sphi 0, %s20
      %s23 = sphi 0, %s21
      %s24 = sphi 0, %s22
      %s32 = sphi 0, %s32
      %s34 = sphi 0, %s32
      %s35 = sphi 0, %s34
      %s49 = sphi 0, %s35
      %s57 = sphi 0, %s59
      %s60 = sphi 0, %s57
      %s61 = sphi 0, %s60
      %s77 = sphi 0, %s61
      %s89 = sphi 0, %s91
      %s92 = sphi 0, %s89
      %s93 = sphi 0, %s92
      %s109 = sphi 0, %s93
      %s117 = sphi 0, %s119
      %s120 = sphi 0, %s117
      %s121 = sphi 0, %s120
      %s137 = sphi 0, %s121
    $region4: #{ppdm_pallas.1} parent=1 // loop_header_branch
      %15 = sbr.rel (%p13) target = $region8
    $region5: #{ppdm_pallas.1} parent=1 // loop_body
      %s17 = ssub.s32 %s12, 1
      %s18 = ssub.s32 %s12, 2
      %s25 = sadd.s32 1, %s20
      %p26 = scmp.ge.s32.totalorder %s25, 1
      %s27 = scalar_select %p26, 0, %s25
      %s28 = sadd.s32 1, %s19
      %s29 = scalar_select %p26, %s28, %s19
      %p30 = scmp.ge.s32.totalorder %s29, 2
      %s31 = scalar_select %p30, 0, %s29
      %s33 = sadd.s32 %s32, 1
      %p36 = scmp.eq.s32.totalorder %s12, 1
      %p37 = scmp.ne.s32.totalorder %s32, %s34
      %p38 = scmp.eq.s32.totalorder %s12, 0
      %p39 = por %p37, %p38
      %p40 = scmp.ne.s32.totalorder %s32, %s34
      %p41 = scmp.eq.s32.totalorder %s17, 1
      %p42 = por %p40, %p41
      %p43 = scmp.ne.s32.totalorder %s34, %s35
      %p44 = scmp.eq.s32.totalorder %s17, 0
      %p45 = por %p43, %p44
      %p46 = scmp.ne.s32.totalorder %s34, %s35
      %p47 = scmp.eq.s32.totalorder %s18, 1
      %p48 = por %p46, %p47
      %p50 = scmp.ne.s32.totalorder %s35, %s49
      %p51 = scmp.eq.s32.totalorder %s18, 0
      %p52 = por %p50, %p51
      %s53 = ssub.s32 %s19, %s31
      %s54 = ssub.s32 %s20, %s27
      %s55 = sor.u32 %s53, %s54
      %p56 = scmp.eq.s32.totalorder %s55, 0
      %s58 = sadd.s32 %s57, 1
      %s59 = scalar_select %p56, %s57, %s58
      %p62 = pneg %p56
      %p63 = scmp.eq.s32.totalorder %s12, 1
      %p64 = por %p62, %p63
      %p65 = scmp.ne.s32.totalorder %s57, %s60
      %p66 = scmp.eq.s32.totalorder %s12, 0
      %p67 = por %p65, %p66
      %p68 = scmp.ne.s32.totalorder %s57, %s60
      %p69 = scmp.eq.s32.totalorder %s17, 1
      %p70 = por %p68, %p69
      %p71 = scmp.ne.s32.totalorder %s60, %s61
      %p72 = scmp.eq.s32.totalorder %s17, 0
      %p73 = por %p71, %p72
      %p74 = scmp.ne.s32.totalorder %s60, %s61
      %p75 = scmp.eq.s32.totalorder %s18, 1
      %p76 = por %p74, %p75
      %p78 = scmp.ne.s32.totalorder %s61, %s77
      %p79 = scmp.eq.s32.totalorder %s18, 0
      %p80 = por %p78, %p79
      %s81 = sadd.s32 %s20, 1
      %s82 = smul.u32 %s81, 2
      %s83 = sadd.s32 %s27, 1
      %s84 = smul.u32 %s83, 2
      %s85 = ssub.s32 %s19, %s31
      %s86 = ssub.s32 %s82, %s84
      %s87 = sor.u32 %s85, %s86
      %p88 = scmp.eq.s32.totalorder %s87, 0
      %s90 = sadd.s32 %s89, 1
      %s91 = scalar_select %p88, %s89, %s90
      %p94 = pneg %p88
      %p95 = scmp.eq.s32.totalorder %s12, 1
      %p96 = por %p94, %p95
      %p97 = scmp.ne.s32.totalorder %s89, %s92
      %p98 = scmp.eq.s32.totalorder %s12, 0
      %p99 = por %p97, %p98
      %p100 = scmp.ne.s32.totalorder %s89, %s92
      %p101 = scmp.eq.s32.totalorder %s17, 1
      %p102 = por %p100, %p101
      %p103 = scmp.ne.s32.totalorder %s92, %s93
      %p104 = scmp.eq.s32.totalorder %s17, 0
      %p105 = por %p103, %p104
      %p106 = scmp.ne.s32.totalorder %s92, %s93
      %p107 = scmp.eq.s32.totalorder %s18, 1
      %p108 = por %p106, %p107
      %p110 = scmp.ne.s32.totalorder %s93, %s109
      %p111 = scmp.eq.s32.totalorder %s18, 0
      %p112 = por %p110, %p111
      %s113 = ssub.s32 %s19, %s31
      %s114 = ssub.s32 %s20, %s27
      %s115 = sor.u32 %s113, %s114
      %p116 = scmp.eq.s32.totalorder %s115, 0
      %s118 = sadd.s32 %s117, 1
      %s119 = scalar_select %p116, %s117, %s118
      %p122 = pneg %p116
      %p123 = scmp.eq.s32.totalorder %s12, 1
      %p124 = por %p122, %p123
      %p125 = scmp.ne.s32.totalorder %s117, %s120
      %p126 = scmp.eq.s32.totalorder %s12, 0
      %p127 = por %p125, %p126
      %p128 = scmp.ne.s32.totalorder %s117, %s120
      %p129 = scmp.eq.s32.totalorder %s17, 1
      %p130 = por %p128, %p129
      %p131 = scmp.ne.s32.totalorder %s120, %s121
      %p132 = scmp.eq.s32.totalorder %s17, 0
      %p133 = por %p131, %p132
      %p134 = scmp.ne.s32.totalorder %s120, %s121
      %p135 = scmp.eq.s32.totalorder %s18, 1
      %p136 = por %p134, %p135
      %p138 = scmp.ne.s32.totalorder %s121, %s137
      %p139 = scmp.eq.s32.totalorder %s18, 0
      %p140 = por %p138, %p139
      %p141 = scmp.le.s32.totalorder 1, %s12
      %p142 = scmp.lt.s32.totalorder %s12, 3
      %p143 = pnand %p141, %p142
      %p144 = pneg %p143
      // Predicated region
      $region9: #{ppdm_pallas.1} parent=5 // pred_check
        _
      $region10: #{ppdm_pallas.1} parent=5 // pred_check_branch
        %146 = sbr.rel (%p143) target = $region12
      $region11: #{ppdm_pallas.1} parent=5 // pred_region
        %s147 = ssub.s32 %s12, 1
        // Predicated region
        $region13: #{ppdm_pallas.1} parent=11 // pred_check
          %p148 = pneg %p45
        $region14: #{ppdm_pallas.1} parent=11 // pred_check_branch
          %150 = sbr.rel (%p148) target = $region16
        $region15: #{ppdm_pallas.1} parent=11 // pred_region
          _
        $region16: #{ppdm_pallas.1} parent=11 // pred_fallthru
          _
      $region12: #{ppdm_pallas.1} parent=5 // pred_fallthru
        _
      %p151 = scmp.lt.s32.totalorder %s12, 2
      // Predicated region
      $region17: #{ppdm_pallas.1} parent=5 // pred_check
        %p152 = pneg %p151
      $region18: #{ppdm_pallas.1} parent=5 // pred_check_branch
        %154 = sbr.rel (%p152) target = $region20
      $region19: #{ppdm_pallas.1} parent=5 // pred_region
        // Predicated region
        $region21: #{ppdm_pallas.1} parent=19 // pred_check
          %p155 = pneg %p67
        $region22: #{ppdm_pallas.1} parent=19 // pred_check_branch
          %157 = sbr.rel (%p155) target = $region24
        $region23: #{ppdm_pallas.1} parent=19 // pred_region
          %s158 = smul.u32 4, %s20
          %s159 = ssub.s32 6, %s158
          %p160 = scmp.lt.s32.totalorder %s159, 4
          %s161 = scalar_select %p160, %s159, 4
          %s162 = smul.u32 64, %s161
          %p163 = scmp.lt.s32.totalorder %s19, 1
          %s164 = scalar_select %p163, %s19, 1
          %p165 = scmp.lt.s32.totalorder %s158, 5
          %s166 = scalar_select %p165, %s158, 5
          %s167 = smul.addr %s164, 6
          %s168 = sadd.s32 %s166, %s167
          %s169 = smul.addr %s168, 4
          %s170 = scalar_lea.vmem %s1, %s169
          %s171 = smul.u32 4, %s20
          %s172 = ssub.s32 6, %s171
          %p173 = scmp.lt.s32.totalorder %s172, 4
          %s174 = scalar_select %p173, %s172, 4
          %s175 = smul.u32 64, %s174
        $region24: #{ppdm_pallas.1} parent=19 // pred_fallthru
          _
        // Predicated region
        $region25: #{ppdm_pallas.1} parent=19 // pred_check
          %p176 = pneg %p99
        $region26: #{ppdm_pallas.1} parent=19 // pred_check_branch
          %178 = sbr.rel (%p176) target = $region28
        $region27: #{ppdm_pallas.1} parent=19 // pred_region
          %s179 = sadd.s32 %s20, 1
          %s180 = smul.u32 %s179, 2
          %s181 = smul.u32 2, %s180
          %p182 = scmp.lt.s32.totalorder %s19, 1
          %s183 = scalar_select %p182, %s19, 1
          %p184 = scmp.lt.s32.totalorder %s181, 5
          %s185 = scalar_select %p184, %s181, 5
          %s186 = smul.addr %s183, 6
          %s187 = sadd.s32 %s185, %s186
          %s188 = smul.addr %s187, 4
          %s189 = scalar_lea.vmem %s2, %s188
          %s190 = sadd.s32 %s20, 1
          %s191 = smul.u32 %s190, 2
          %s192 = smul.u32 2, %s191
        $region28: #{ppdm_pallas.1} parent=19 // pred_fallthru
          _
      $region20: #{ppdm_pallas.1} parent=5 // pred_fallthru
        _
      %p193 = scmp.le.s32.totalorder 1, %s12
      %p194 = scmp.lt.s32.totalorder %s12, 3
      %p195 = pnand %p193, %p194
      %p196 = pneg %p195
      // Predicated region
      $region29: #{ppdm_pallas.1} parent=5 // pred_check
        _
      $region30: #{ppdm_pallas.1} parent=5 // pred_check_branch
        %198 = sbr.rel (%p195) target = $region32
      $region31: #{ppdm_pallas.1} parent=5 // pred_region
        %s199 = ssub.s32 %s12, 1
        %p200 = pneg %p45
        %p201 = pneg %p42
        %s202 = smul.u32 4, %s22
        %s203 = ssub.s32 6, %s202
        %p204 = scmp.lt.s32.totalorder %s203, 4
        %s205 = scalar_select %p204, %s203, 4
        %s206 = smul.u32 64, %s205
        %p207 = scmp.lt.s32.totalorder %s21, 1
        %s208 = scalar_select %p207, %s21, 1
        %p209 = scmp.lt.s32.totalorder %s202, 5
        %s210 = scalar_select %p209, %s202, 5
        %s211 = smul.addr %s208, 6
        %s212 = sadd.s32 %s210, %s211
        %s213 = smul.addr %s212, 4
        %s214 = scalar_lea.vmem %s1, %s213
        %p215 = pneg %p73
        %p216 = pneg %p70
        %s217 = sadd.s32 %s22, 1
        %s218 = smul.u32 %s217, 2
        %s219 = smul.u32 2, %s218
        %p220 = scmp.lt.s32.totalorder %s21, 1
        %s221 = scalar_select %p220, %s21, 1
        %p222 = scmp.lt.s32.totalorder %s219, 5
        %s223 = scalar_select %p222, %s219, 5
        %s224 = smul.addr %s221, 6
        %s225 = sadd.s32 %s223, %s224
        %s226 = smul.addr %s225, 4
        %s227 = scalar_lea.vmem %s2, %s226
        %p228 = pneg %p105
        %p229 = pneg %p102
        %p230 = pneg %p133
        %p231 = pneg %p130
        %s232 = sand.u32 %s120, 1
        %s233 = scalar_lea.sflag [#allocation6], %s232
        %s234 = sand.u32 %s120, 1
        %s235 = smul.addr %s234, 128
        %s236 = scalar_lea.vmem [#allocation5], %s235
        %s237 = smul.u32 4, %s22
        %s238 = ssub.s32 6, %s237
        %p239 = scmp.lt.s32.totalorder %s238, 4
        %s240 = scalar_select %p239, %s238, 4
        %s241 = smul.u32 64, %s240
        %p242 = scmp.lt.s32.totalorder %s21, 1
        %s243 = scalar_select %p242, %s21, 1
        %p244 = scmp.lt.s32.totalorder %s237, 5
        %s245 = scalar_select %p244, %s237, 5
        %s246 = smul.addr %s243, 6
        %s247 = sadd.s32 %s245, %s246
        %s248 = smul.addr %s247, 4
        %s249 = scalar_lea.vmem %s1, %s248
        %s250 = smul.u32 4, %s22
        %s251 = ssub.s32 6, %s250
        %p252 = scmp.lt.s32.totalorder %s251, 4
        %s253 = scalar_select %p252, %s251, 4
        %s254 = smul.u32 64, %s253
        %s255 = sadd.s32 %s22, 1
        %s256 = smul.u32 %s255, 2
        %s257 = smul.u32 2, %s256
        %p258 = scmp.lt.s32.totalorder %s21, 1
        %s259 = scalar_select %p258, %s21, 1
        %p260 = scmp.lt.s32.totalorder %s257, 5
        %s261 = scalar_select %p260, %s257, 5
        %s262 = smul.addr %s259, 6
        %s263 = sadd.s32 %s261, %s262
        %s264 = smul.addr %s263, 4
        %s265 = scalar_lea.vmem %s2, %s264
        %s266 = sadd.s32 %s22, 1
        %s267 = smul.u32 %s266, 2
        %s268 = smul.u32 2, %s267
        %s269 = smul.u32 2, %s22
        %v270 = vld [vmem:[%s249] sm:$0x77]
        %v271 = vld [vmem:[%s249 + $0x8] sm:$0x77]
        %272 = vst [vmem:[#allocation2] sm:$0x77] %v270
        %273 = vst [vmem:[#allocation2 + $0x8] sm:$0x77] %v271
        %v274 = vld [vmem:[%s265] sm:$0x77]
        %275 = vst [vmem:[#allocation2 + $0x10] sm:$0x77] %v274
        %v276 = vld [vmem:[#allocation2] sm:$0x77]
        %v277 = vld [vmem:[#allocation2 + $0x8] sm:$0x77]
        %v280 = vcombine.high %v276, %v276
        %v281 = vcombine.high %v277, %v277
        %284 = vst [vmem:[#allocation3] sm:$0x7] %v276
        %285 = vst [vmem:[#allocation3 + $0x8] sm:$0x7] %v280
        %286 = vst [vmem:[#allocation3 + $0x10] sm:$0x7] %v277
        %287 = vst [vmem:[#allocation3 + $0x18] sm:$0x7] %v281
        %v288 = vld [vmem:[#allocation2] sm:$0x77]
        %v289 = vld [vmem:[#allocation2 + $0x8] sm:$0x77]
        %v290 = vld [vmem:[#allocation2 + $0x10] sm:$0x7]
        %v294 = vcombine.high %v288, %v288
        %v295 = vcombine.high %v289, %v289
        %v296 = vrot.slane %v288, 5
        %v297 = vrot.slane %v294, 5
        %v298 = vrot.slane %v289, 5
        %v299 = vrot.slane %v295, 5
        %v300 = vrot.slane %v290, 5
        %301 = vrot.lane.b32.xlu0 %v296, 127
        %v302 = vpop.permute.xlu0 %301
        %303 = vrot.lane.b32.xlu0 %v297, 127
        %v304 = vpop.permute.xlu0 %303
        %305 = vrot.lane.b32.xlu0 %v298, 127
        %v306 = vpop.permute.xlu0 %305
        %307 = vrot.lane.b32.xlu0 %v299, 127
        %v308 = vpop.permute.xlu0 %307
        %309 = vrot.lane.b32.xlu0 %v300, 127
        %v310 = vpop.permute.xlu0 %309
        %vm311 = vcmask 1039360
        %v312 = vsel %vm311, %v302, %v304
        %v313 = vsel %vm311, %v304, %v306
        %v314 = vsel %vm311, %v306, %v308
        %v315 = vsel %vm311, %v308, %v310
        %320 = vst [vmem:[#allocation3] sm:$0x38] %v312
        %321 = vst [vmem:[#allocation3 + $0x8] sm:$0x38] %v313
        %322 = vst [vmem:[#allocation3 + $0x10] sm:$0x38] %v314
        %323 = vst [vmem:[#allocation3 + $0x18] sm:$0x38] %v315
        %v324 = vld [vmem:[#allocation2] sm:$0x77]
        %v325 = vld [vmem:[#allocation2 + $0x8] sm:$0x77]
        %v326 = vld [vmem:[#allocation2 + $0x10] sm:$0x7]
        %v330 = vcombine.high %v324, %v324
        %v331 = vcombine.high %v325, %v325
        %v332 = vrot.slane %v324, 2
        %v333 = vrot.slane %v330, 2
        %v334 = vrot.slane %v325, 2
        %v335 = vrot.slane %v331, 2
        %v336 = vrot.slane %v326, 2
        %337 = vrot.lane.b32.xlu0 %v332, 126
        %v338 = vpop.permute.xlu0 %337
        %339 = vrot.lane.b32.xlu0 %v333, 126
        %v340 = vpop.permute.xlu0 %339
        %341 = vrot.lane.b32.xlu0 %v334, 126
        %v342 = vpop.permute.xlu0 %341
        %343 = vrot.lane.b32.xlu0 %v335, 126
        %v344 = vpop.permute.xlu0 %343
        %345 = vrot.lane.b32.xlu0 %v336, 126
        %v346 = vpop.permute.xlu0 %345
        %vm347 = vcmask 1031168
        %v348 = vsel %vm347, %v338, %v340
        %v349 = vsel %vm347, %v340, %v342
        %v350 = vsel %vm347, %v342, %v344
        %v351 = vsel %vm347, %v344, %v346
        %356 = vst [vmem:[#allocation3] sm:$0xc0] %v348
        %357 = vst [vmem:[#allocation3 + $0x8] sm:$0xc0] %v349
        %358 = vst [vmem:[#allocation3 + $0x10] sm:$0xc0] %v350
        %359 = vst [vmem:[#allocation3 + $0x18] sm:$0xc0] %v351
        %360 = vst [vmem:[#allocation3 + $0x20] sm:$0x1] %v348
        %361 = vst [vmem:[#allocation3 + $0x28] sm:$0x1] %v349
        %362 = vst [vmem:[#allocation3 + $0x30] sm:$0x1] %v350
        %363 = vst [vmem:[#allocation3 + $0x38] sm:$0x1] %v351
        %v364 = vld [vmem:[#allocation2] sm:$0x77]
        %v365 = vld [vmem:[#allocation2 + $0x8] sm:$0x77]
        %v366 = vld [vmem:[#allocation2 + $0x10] sm:$0x7]
        %v370 = vcombine.high %v364, %v364
        %v371 = vcombine.high %v365, %v365
        %v372 = vrot.slane %v364, 7
        %v373 = vrot.slane %v370, 7
        %v374 = vrot.slane %v365, 7
        %v375 = vrot.slane %v371, 7
        %v376 = vrot.slane %v366, 7
        %377 = vrot.lane.b32.xlu0 %v372, 125
        %v378 = vpop.permute.xlu0 %377
        %379 = vrot.lane.b32.xlu0 %v373, 125
        %v380 = vpop.permute.xlu0 %379
        %381 = vrot.lane.b32.xlu0 %v374, 125
        %v382 = vpop.permute.xlu0 %381
        %383 = vrot.lane.b32.xlu0 %v375, 125
        %v384 = vpop.permute.xlu0 %383
        %385 = vrot.lane.b32.xlu0 %v376, 125
        %v386 = vpop.permute.xlu0 %385
        %vm387 = vcmask 1022976
        %v388 = vsel %vm387, %v378, %v380
        %v389 = vsel %vm387, %v380, %v382
        %v390 = vsel %vm387, %v382, %v384
        %v391 = vsel %vm387, %v384, %v386
        %396 = vst [vmem:[#allocation3 + $0x20] sm:$0xe] %v388
        %397 = vst [vmem:[#allocation3 + $0x28] sm:$0xe] %v389
        %398 = vst [vmem:[#allocation3 + $0x30] sm:$0xe] %v390
        %399 = vst [vmem:[#allocation3 + $0x38] sm:$0xe] %v391
        %v400 = vld [vmem:[#allocation2] sm:$0x77]
        %v401 = vld [vmem:[#allocation2 + $0x8] sm:$0x77]
        %v402 = vld [vmem:[#allocation2 + $0x10] sm:$0x7]
        %v406 = vcombine.low %v400, %v400
        %v407 = vcombine.low %v401, %v401
        %v408 = vcombine.low %v402, %v402
        %409 = vrot.lane.b32.xlu0 %v406, 124
        %v410 = vpop.permute.xlu0 %409
        %411 = vrot.lane.b32.xlu0 %v400, 124
        %v412 = vpop.permute.xlu0 %411
        %413 = vrot.lane.b32.xlu0 %v407, 124
        %v414 = vpop.permute.xlu0 %413
        %415 = vrot.lane.b32.xlu0 %v401, 124
        %v416 = vpop.permute.xlu0 %415
        %417 = vrot.lane.b32.xlu0 %v408, 124
        %v418 = vpop.permute.xlu0 %417
        %vm419 = vcmask 1014784
        %v420 = vsel %vm419, %v410, %v412
        %v421 = vsel %vm419, %v412, %v414
        %v422 = vsel %vm419, %v414, %v416
        %v423 = vsel %vm419, %v416, %v418
        %428 = vst [vmem:[#allocation3 + $0x20] sm:$0x70] %v420
        %429 = vst [vmem:[#allocation3 + $0x28] sm:$0x70] %v421
        %430 = vst [vmem:[#allocation3 + $0x30] sm:$0x70] %v422
        %431 = vst [vmem:[#allocation3 + $0x38] sm:$0x70] %v423
        %v432 = vld [vmem:[#allocation2] sm:$0x77]
        %v433 = vld [vmem:[#allocation2 + $0x8] sm:$0x77]
        %v434 = vld [vmem:[#allocation2 + $0x10] sm:$0x7]
        %v438 = vcombine.high %v432, %v432
        %v439 = vcombine.high %v433, %v433
        %v440 = vrot.slane %v432, 1
        %v441 = vrot.slane %v438, 1
        %v442 = vrot.slane %v433, 1
        %v443 = vrot.slane %v439, 1
        %v444 = vrot.slane %v434, 1
        %445 = vrot.lane.b32.xlu0 %v440, 96
        %v446 = vpop.permute.xlu0 %445
        %447 = vrot.lane.b32.xlu0 %v441, 96
        %v448 = vpop.permute.xlu0 %447
        %449 = vrot.lane.b32.xlu0 %v442, 96
        %v450 = vpop.permute.xlu0 %449
        %451 = vrot.lane.b32.xlu0 %v443, 96
        %v452 = vpop.permute.xlu0 %451
        %453 = vrot.lane.b32.xlu0 %v444, 96
        %v454 = vpop.permute.xlu0 %453
        %vm455 = vcmask 785408
        %v456 = vsel %vm455, %v446, %v448
        %v457 = vsel %vm455, %v448, %v450
        %v458 = vsel %vm455, %v450, %v452
        %v459 = vsel %vm455, %v452, %v454
        %464 = vst [vmem:[#allocation3 + $0x20] sm:$0x80] %v456
        %465 = vst [vmem:[#allocation3 + $0x28] sm:$0x80] %v457
        %466 = vst [vmem:[#allocation3 + $0x30] sm:$0x80] %v458
        %467 = vst [vmem:[#allocation3 + $0x38] sm:$0x80] %v459
        %468 = vst [vmem:[#allocation3 + $0x40] sm:$0x3] %v456
        %469 = vst [vmem:[#allocation3 + $0x48] sm:$0x3] %v457
        %470 = vst [vmem:[#allocation3 + $0x50] sm:$0x3] %v458
        %471 = vst [vmem:[#allocation3 + $0x58] sm:$0x3] %v459
        %v472 = vld [vmem:[#allocation2] sm:$0x77]
        %v473 = vld [vmem:[#allocation2 + $0x8] sm:$0x77]
        %v474 = vld [vmem:[#allocation2 + $0x10] sm:$0x7]
        %v478 = vcombine.high %v472, %v472
        %v479 = vcombine.high %v473, %v473
        %v480 = vrot.slane %v472, 6
        %v481 = vrot.slane %v478, 6
        %v482 = vrot.slane %v473, 6
        %v483 = vrot.slane %v479, 6
        %v484 = vrot.slane %v474, 6
        %485 = vrot.lane.b32.xlu0 %v480, 95
        %v486 = vpop.permute.xlu0 %485
        %487 = vrot.lane.b32.xlu0 %v481, 95
        %v488 = vpop.permute.xlu0 %487
        %489 = vrot.lane.b32.xlu0 %v482, 95
        %v490 = vpop.permute.xlu0 %489
        %491 = vrot.lane.b32.xlu0 %v483, 95
        %v492 = vpop.permute.xlu0 %491
        %493 = vrot.lane.b32.xlu0 %v484, 95
        %v494 = vpop.permute.xlu0 %493
        %vm495 = vcmask 777216
        %v496 = vsel %vm495, %v486, %v488
        %v497 = vsel %vm495, %v488, %v490
        %v498 = vsel %vm495, %v490, %v492
        %v499 = vsel %vm495, %v492, %v494
        %504 = vst [vmem:[#allocation3 + $0x40] sm:$0x1c] %v496
        %505 = vst [vmem:[#allocation3 + $0x48] sm:$0x1c] %v497
        %506 = vst [vmem:[#allocation3 + $0x50] sm:$0x1c] %v498
        %507 = vst [vmem:[#allocation3 + $0x58] sm:$0x1c] %v499
        %v508 = vld [vmem:[#allocation2] sm:$0x77]
        %v509 = vld [vmem:[#allocation2 + $0x8] sm:$0x77]
        %v510 = vld [vmem:[#allocation2 + $0x10] sm:$0x7]
        %v514 = vcombine.high %v508, %v508
        %v515 = vcombine.high %v509, %v509
        %v516 = vrot.slane %v508, 3
        %v517 = vrot.slane %v514, 3
        %v518 = vrot.slane %v509, 3
        %v519 = vrot.slane %v515, 3
        %v520 = vrot.slane %v510, 3
        %521 = vrot.lane.b32.xlu0 %v516, 94
        %v522 = vpop.permute.xlu0 %521
        %523 = vrot.lane.b32.xlu0 %v517, 94
        %v524 = vpop.permute.xlu0 %523
        %525 = vrot.lane.b32.xlu0 %v518, 94
        %v526 = vpop.permute.xlu0 %525
        %527 = vrot.lane.b32.xlu0 %v519, 94
        %v528 = vpop.permute.xlu0 %527
        %529 = vrot.lane.b32.xlu0 %v520, 94
        %v530 = vpop.permute.xlu0 %529
        %vm531 = vcmask 769024
        %v532 = vsel %vm531, %v522, %v524
        %v533 = vsel %vm531, %v524, %v526
        %v534 = vsel %vm531, %v526, %v528
        %v535 = vsel %vm531, %v528, %v530
        %540 = vst [vmem:[#allocation3 + $0x40] sm:$0xe0] %v532
        %541 = vst [vmem:[#allocation3 + $0x48] sm:$0xe0] %v533
        %542 = vst [vmem:[#allocation3 + $0x50] sm:$0xe0] %v534
        %543 = vst [vmem:[#allocation3 + $0x58] sm:$0xe0] %v535
        %v544 = vld [vmem:[#allocation2] sm:$0x77]
        %v545 = vld [vmem:[#allocation2 + $0x8] sm:$0x77]
        %v546 = vld [vmem:[#allocation2 + $0x10] sm:$0x7]
        %v550 = vcombine.high %v544, %v544
        %v551 = vcombine.high %v545, %v545
        %552 = vrot.lane.b32.xlu0 %v544, 93
        %v553 = vpop.permute.xlu0 %552
        %554 = vrot.lane.b32.xlu0 %v550, 93
        %v555 = vpop.permute.xlu0 %554
        %556 = vrot.lane.b32.xlu0 %v545, 93
        %v557 = vpop.permute.xlu0 %556
        %558 = vrot.lane.b32.xlu0 %v551, 93
        %v559 = vpop.permute.xlu0 %558
        %560 = vrot.lane.b32.xlu0 %v546, 93
        %v561 = vpop.permute.xlu0 %560
        %vm562 = vcmask 760832
        %v563 = vsel %vm562, %v553, %v555
        %v564 = vsel %vm562, %v555, %v557
        %v565 = vsel %vm562, %v557, %v559
        %v566 = vsel %vm562, %v559, %v561
        %571 = vst [vmem:[#allocation3 + $0x60] sm:$0x7] %v563
        %572 = vst [vmem:[#allocation3 + $0x68] sm:$0x7] %v564
        %573 = vst [vmem:[#allocation3 + $0x70] sm:$0x7] %v565
        %574 = vst [vmem:[#allocation3 + $0x78] sm:$0x7] %v566
        %v575 = vld [vmem:[#allocation2] sm:$0x77]
        %v576 = vld [vmem:[#allocation2 + $0x8] sm:$0x77]
        %v577 = vld [vmem:[#allocation2 + $0x10] sm:$0x7]
        %v581 = vcombine.high %v575, %v575
        %v582 = vcombine.high %v576, %v576
        %v583 = vrot.slane %v575, 5
        %v584 = vrot.slane %v581, 5
        %v585 = vrot.slane %v576, 5
        %v586 = vrot.slane %v582, 5
        %v587 = vrot.slane %v577, 5
        %588 = vrot.lane.b32.xlu0 %v583, 92
        %v589 = vpop.permute.xlu0 %588
        %590 = vrot.lane.b32.xlu0 %v584, 92
        %v591 = vpop.permute.xlu0 %590
        %592 = vrot.lane.b32.xlu0 %v585, 92
        %v593 = vpop.permute.xlu0 %592
        %594 = vrot.lane.b32.xlu0 %v586, 92
        %v595 = vpop.permute.xlu0 %594
        %596 = vrot.lane.b32.xlu0 %v587, 92
        %v597 = vpop.permute.xlu0 %596
        %vm598 = vcmask 752640
        %v599 = vsel %vm598, %v589, %v591
        %v600 = vsel %vm598, %v591, %v593
        %v601 = vsel %vm598, %v593, %v595
        %v602 = vsel %vm598, %v595, %v597
        %607 = vst [vmem:[#allocation3 + $0x60] sm:$0x38] %v599
        %608 = vst [vmem:[#allocation3 + $0x68] sm:$0x38] %v600
        %609 = vst [vmem:[#allocation3 + $0x70] sm:$0x38] %v601
        %610 = vst [vmem:[#allocation3 + $0x78] sm:$0x38] %v602
        %v611 = vld [vmem:[#allocation2] sm:$0x77]
        %v612 = vld [vmem:[#allocation2 + $0x8] sm:$0x77]
        %v613 = vld [vmem:[#allocation2 + $0x10] sm:$0x7]
        %v617 = vcombine.high %v611, %v611
        %v618 = vcombine.high %v612, %v612
        %v619 = vrot.slane %v611, 2
        %v620 = vrot.slane %v617, 2
        %v621 = vrot.slane %v612, 2
        %v622 = vrot.slane %v618, 2
        %v623 = vrot.slane %v613, 2
        %624 = vrot.lane.b32.xlu0 %v619, 64
        %v625 = vpop.permute.xlu0 %624
        %626 = vrot.lane.b32.xlu0 %v620, 64
        %v627 = vpop.permute.xlu0 %626
        %628 = vrot.lane.b32.xlu0 %v621, 64
        %v629 = vpop.permute.xlu0 %628
        %630 = vrot.lane.b32.xlu0 %v622, 64
        %v631 = vpop.permute.xlu0 %630
        %632 = vrot.lane.b32.xlu0 %v623, 64
        %v633 = vpop.permute.xlu0 %632
        %vm634 = vcmask 523264
        %v635 = vsel %vm634, %v625, %v627
        %v636 = vsel %vm634, %v627, %v629
        %v637 = vsel %vm634, %v629, %v631
        %v638 = vsel %vm634, %v631, %v633
        %643 = vst [vmem:[#allocation3 + $0x60] sm:$0xc0] %v635
        %644 = vst [vmem:[#allocation3 + $0x68] sm:$0xc0] %v636
        %645 = vst [vmem:[#allocation3 + $0x70] sm:$0xc0] %v637
        %646 = vst [vmem:[#allocation3 + $0x78] sm:$0xc0] %v638
        %647 = vst [vmem:[#allocation3 + $0x80] sm:$0x1] %v635
        %648 = vst [vmem:[#allocation3 + $0x88] sm:$0x1] %v636
        %649 = vst [vmem:[#allocation3 + $0x90] sm:$0x1] %v637
        %650 = vst [vmem:[#allocation3 + $0x98] sm:$0x1] %v638
        %v651 = vld [vmem:[#allocation2] sm:$0x77]
        %v652 = vld [vmem:[#allocation2 + $0x8] sm:$0x77]
        %v653 = vld [vmem:[#allocation2 + $0x10] sm:$0x7]
        %v657 = vcombine.high %v651, %v651
        %v658 = vcombine.high %v652, %v652
        %v659 = vrot.slane %v651, 7
        %v660 = vrot.slane %v657, 7
        %v661 = vrot.slane %v652, 7
        %v662 = vrot.slane %v658, 7
        %v663 = vrot.slane %v653, 7
        %664 = vrot.lane.b32.xlu0 %v659, 63
        %v665 = vpop.permute.xlu0 %664
        %666 = vrot.lane.b32.xlu0 %v660, 63
        %v667 = vpop.permute.xlu0 %666
        %668 = vrot.lane.b32.xlu0 %v661, 63
        %v669 = vpop.permute.xlu0 %668
        %670 = vrot.lane.b32.xlu0 %v662, 63
        %v671 = vpop.permute.xlu0 %670
        %672 = vrot.lane.b32.xlu0 %v663, 63
        %v673 = vpop.permute.xlu0 %672
        %vm674 = vcmask 515072
        %v675 = vsel %vm674, %v665, %v667
        %v676 = vsel %vm674, %v667, %v669
        %v677 = vsel %vm674, %v669, %v671
        %v678 = vsel %vm674, %v671, %v673
        %683 = vst [vmem:[#allocation3 + $0x80] sm:$0xe] %v675
        %684 = vst [vmem:[#allocation3 + $0x88] sm:$0xe] %v676
        %685 = vst [vmem:[#allocation3 + $0x90] sm:$0xe] %v677
        %686 = vst [vmem:[#allocation3 + $0x98] sm:$0xe] %v678
        %v687 = vld [vmem:[#allocation2] sm:$0x77]
        %v688 = vld [vmem:[#allocation2 + $0x8] sm:$0x77]
        %v689 = vld [vmem:[#allocation2 + $0x10] sm:$0x7]
        %v693 = vcombine.low %v687, %v687
        %v694 = vcombine.low %v688, %v688
        %v695 = vcombine.low %v689, %v689
        %696 = vrot.lane.b32.xlu0 %v693, 62
        %v697 = vpop.permute.xlu0 %696
        %698 = vrot.lane.b32.xlu0 %v687, 62
        %v699 = vpop.permute.xlu0 %698
        %700 = vrot.lane.b32.xlu0 %v694, 62
        %v701 = vpop.permute.xlu0 %700
        %702 = vrot.lane.b32.xlu0 %v688, 62
        %v703 = vpop.permute.xlu0 %702
        %704 = vrot.lane.b32.xlu0 %v695, 62
        %v705 = vpop.permute.xlu0 %704
        %vm706 = vcmask 506880
        %v707 = vsel %vm706, %v697, %v699
        %v708 = vsel %vm706, %v699, %v701
        %v709 = vsel %vm706, %v701, %v703
        %v710 = vsel %vm706, %v703, %v705
        %715 = vst [vmem:[#allocation3 + $0x80] sm:$0x70] %v707
        %716 = vst [vmem:[#allocation3 + $0x88] sm:$0x70] %v708
        %717 = vst [vmem:[#allocation3 + $0x90] sm:$0x70] %v709
        %718 = vst [vmem:[#allocation3 + $0x98] sm:$0x70] %v710
        %v719 = vld [vmem:[#allocation2] sm:$0x77]
        %v720 = vld [vmem:[#allocation2 + $0x8] sm:$0x77]
        %v721 = vld [vmem:[#allocation2 + $0x10] sm:$0x7]
        %v725 = vcombine.high %v719, %v719
        %v726 = vcombine.high %v720, %v720
        %v727 = vrot.slane %v719, 1
        %v728 = vrot.slane %v725, 1
        %v729 = vrot.slane %v720, 1
        %v730 = vrot.slane %v726, 1
        %v731 = vrot.slane %v721, 1
        %732 = vrot.lane.b32.xlu0 %v727, 61
        %v733 = vpop.permute.xlu0 %732
        %734 = vrot.lane.b32.xlu0 %v728, 61
        %v735 = vpop.permute.xlu0 %734
        %736 = vrot.lane.b32.xlu0 %v729, 61
        %v737 = vpop.permute.xlu0 %736
        %738 = vrot.lane.b32.xlu0 %v730, 61
        %v739 = vpop.permute.xlu0 %738
        %740 = vrot.lane.b32.xlu0 %v731, 61
        %v741 = vpop.permute.xlu0 %740
        %vm742 = vcmask 498688
        %v743 = vsel %vm742, %v733, %v735
        %v744 = vsel %vm742, %v735, %v737
        %v745 = vsel %vm742, %v737, %v739
        %v746 = vsel %vm742, %v739, %v741
        %751 = vst [vmem:[#allocation3 + $0x80] sm:$0x80] %v743
        %752 = vst [vmem:[#allocation3 + $0x88] sm:$0x80] %v744
        %753 = vst [vmem:[#allocation3 + $0x90] sm:$0x80] %v745
        %754 = vst [vmem:[#allocation3 + $0x98] sm:$0x80] %v746
        %755 = vst [vmem:[#allocation3 + $0xa0] sm:$0x3] %v743
        %756 = vst [vmem:[#allocation3 + $0xa8] sm:$0x3] %v744
        %757 = vst [vmem:[#allocation3 + $0xb0] sm:$0x3] %v745
        %758 = vst [vmem:[#allocation3 + $0xb8] sm:$0x3] %v746
        %v759 = vld [vmem:[#allocation2] sm:$0x77]
        %v760 = vld [vmem:[#allocation2 + $0x8] sm:$0x77]
        %v761 = vld [vmem:[#allocation2 + $0x10] sm:$0x7]
        %v765 = vcombine.high %v759, %v759
        %v766 = vcombine.high %v760, %v760
        %v767 = vrot.slane %v759, 6
        %v768 = vrot.slane %v765, 6
        %v769 = vrot.slane %v760, 6
        %v770 = vrot.slane %v766, 6
        %v771 = vrot.slane %v761, 6
        %772 = vrot.lane.b32.xlu0 %v767, 60
        %v773 = vpop.permute.xlu0 %772
        %774 = vrot.lane.b32.xlu0 %v768, 60
        %v775 = vpop.permute.xlu0 %774
        %776 = vrot.lane.b32.xlu0 %v769, 60
        %v777 = vpop.permute.xlu0 %776
        %778 = vrot.lane.b32.xlu0 %v770, 60
        %v779 = vpop.permute.xlu0 %778
        %780 = vrot.lane.b32.xlu0 %v771, 60
        %v781 = vpop.permute.xlu0 %780
        %vm782 = vcmask 490496
        %v783 = vsel %vm782, %v773, %v775
        %v784 = vsel %vm782, %v775, %v777
        %v785 = vsel %vm782, %v777, %v779
        %v786 = vsel %vm782, %v779, %v781
        %791 = vst [vmem:[#allocation3 + $0xa0] sm:$0x1c] %v783
        %792 = vst [vmem:[#allocation3 + $0xa8] sm:$0x1c] %v784
        %793 = vst [vmem:[#allocation3 + $0xb0] sm:$0x1c] %v785
        %794 = vst [vmem:[#allocation3 + $0xb8] sm:$0x1c] %v786
        %v795 = vld [vmem:[#allocation2] sm:$0x77]
        %v796 = vld [vmem:[#allocation2 + $0x8] sm:$0x77]
        %v797 = vld [vmem:[#allocation2 + $0x10] sm:$0x7]
        %v801 = vcombine.high %v795, %v795
        %v802 = vcombine.high %v796, %v796
        %v803 = vrot.slane %v795, 3
        %v804 = vrot.slane %v801, 3
        %v805 = vrot.slane %v796, 3
        %v806 = vrot.slane %v802, 3
        %v807 = vrot.slane %v797, 3
        %808 = vrot.lane.b32.xlu0 %v803, 32
        %v809 = vpop.permute.xlu0 %808
        %810 = vrot.lane.b32.xlu0 %v804, 32
        %v811 = vpop.permute.xlu0 %810
        %812 = vrot.lane.b32.xlu0 %v805, 32
        %v813 = vpop.permute.xlu0 %812
        %814 = vrot.lane.b32.xlu0 %v806, 32
        %v815 = vpop.permute.xlu0 %814
        %816 = vrot.lane.b32.xlu0 %v807, 32
        %v817 = vpop.permute.xlu0 %816
        %vm818 = vcmask 261120
        %v819 = vsel %vm818, %v809, %v811
        %v820 = vsel %vm818, %v811, %v813
        %v821 = vsel %vm818, %v813, %v815
        %v822 = vsel %vm818, %v815, %v817
        %827 = vst [vmem:[#allocation3 + $0xa0] sm:$0xe0] %v819
        %828 = vst [vmem:[#allocation3 + $0xa8] sm:$0xe0] %v820
        %829 = vst [vmem:[#allocation3 + $0xb0] sm:$0xe0] %v821
        %830 = vst [vmem:[#allocation3 + $0xb8] sm:$0xe0] %v822
        %v831 = vld [vmem:[#allocation2] sm:$0x77]
        %v832 = vld [vmem:[#allocation2 + $0x8] sm:$0x77]
        %v833 = vld [vmem:[#allocation2 + $0x10] sm:$0x7]
        %v837 = vcombine.high %v831, %v831
        %v838 = vcombine.high %v832, %v832
        %839 = vrot.lane.b32.xlu0 %v831, 31
        %v840 = vpop.permute.xlu0 %839
        %841 = vrot.lane.b32.xlu0 %v837, 31
        %v842 = vpop.permute.xlu0 %841
        %843 = vrot.lane.b32.xlu0 %v832, 31
        %v844 = vpop.permute.xlu0 %843
        %845 = vrot.lane.b32.xlu0 %v838, 31
        %v846 = vpop.permute.xlu0 %845
        %847 = vrot.lane.b32.xlu0 %v833, 31
        %v848 = vpop.permute.xlu0 %847
        %vm849 = vcmask 252928
        %v850 = vsel %vm849, %v840, %v842
        %v851 = vsel %vm849, %v842, %v844
        %v852 = vsel %vm849, %v844, %v846
        %v853 = vsel %vm849, %v846, %v848
        %858 = vst [vmem:[#allocation3 + $0xc0] sm:$0x7] %v850
        %859 = vst [vmem:[#allocation3 + $0xc8] sm:$0x7] %v851
        %860 = vst [vmem:[#allocation3 + $0xd0] sm:$0x7] %v852
        %861 = vst [vmem:[#allocation3 + $0xd8] sm:$0x7] %v853
        %v862 = vld [vmem:[#allocation2] sm:$0x77]
        %v863 = vld [vmem:[#allocation2 + $0x8] sm:$0x77]
        %v864 = vld [vmem:[#allocation2 + $0x10] sm:$0x7]
        %v868 = vcombine.high %v862, %v862
        %v869 = vcombine.high %v863, %v863
        %v870 = vrot.slane %v862, 5
        %v871 = vrot.slane %v868, 5
        %v872 = vrot.slane %v863, 5
        %v873 = vrot.slane %v869, 5
        %v874 = vrot.slane %v864, 5
        %875 = vrot.lane.b32.xlu0 %v870, 30
        %v876 = vpop.permute.xlu0 %875
        %877 = vrot.lane.b32.xlu0 %v871, 30
        %v878 = vpop.permute.xlu0 %877
        %879 = vrot.lane.b32.xlu0 %v872, 30
        %v880 = vpop.permute.xlu0 %879
        %881 = vrot.lane.b32.xlu0 %v873, 30
        %v882 = vpop.permute.xlu0 %881
        %883 = vrot.lane.b32.xlu0 %v874, 30
        %v884 = vpop.permute.xlu0 %883
        %vm885 = vcmask 244736
        %v886 = vsel %vm885, %v876, %v878
        %v887 = vsel %vm885, %v878, %v880
        %v888 = vsel %vm885, %v880, %v882
        %v889 = vsel %vm885, %v882, %v884
        %894 = vst [vmem:[#allocation3 + $0xc0] sm:$0x38] %v886
        %895 = vst [vmem:[#allocation3 + $0xc8] sm:$0x38] %v887
        %896 = vst [vmem:[#allocation3 + $0xd0] sm:$0x38] %v888
        %897 = vst [vmem:[#allocation3 + $0xd8] sm:$0x38] %v889
        %v898 = vld [vmem:[#allocation2] sm:$0x77]
        %v899 = vld [vmem:[#allocation2 + $0x8] sm:$0x77]
        %v900 = vld [vmem:[#allocation2 + $0x10] sm:$0x7]
        %v904 = vcombine.high %v898, %v898
        %v905 = vcombine.high %v899, %v899
        %v906 = vrot.slane %v898, 2
        %v907 = vrot.slane %v904, 2
        %v908 = vrot.slane %v899, 2
        %v909 = vrot.slane %v905, 2
        %v910 = vrot.slane %v900, 2
        %911 = vrot.lane.b32.xlu0 %v906, 29
        %v912 = vpop.permute.xlu0 %911
        %913 = vrot.lane.b32.xlu0 %v907, 29
        %v914 = vpop.permute.xlu0 %913
        %915 = vrot.lane.b32.xlu0 %v908, 29
        %v916 = vpop.permute.xlu0 %915
        %917 = vrot.lane.b32.xlu0 %v909, 29
        %v918 = vpop.permute.xlu0 %917
        %919 = vrot.lane.b32.xlu0 %v910, 29
        %v920 = vpop.permute.xlu0 %919
        %vm921 = vcmask 236544
        %v922 = vsel %vm921, %v912, %v914
        %v923 = vsel %vm921, %v914, %v916
        %v924 = vsel %vm921, %v916, %v918
        %v925 = vsel %vm921, %v918, %v920
        %930 = vst [vmem:[#allocation3 + $0xc0] sm:$0xc0] %v922
        %931 = vst [vmem:[#allocation3 + $0xc8] sm:$0xc0] %v923
        %932 = vst [vmem:[#allocation3 + $0xd0] sm:$0xc0] %v924
        %933 = vst [vmem:[#allocation3 + $0xd8] sm:$0xc0] %v925
        %934 = vst [vmem:[#allocation3 + $0xe0] sm:$0x1] %v922
        %935 = vst [vmem:[#allocation3 + $0xe8] sm:$0x1] %v923
        %936 = vst [vmem:[#allocation3 + $0xf0] sm:$0x1] %v924
        %937 = vst [vmem:[#allocation3 + $0xf8] sm:$0x1] %v925
        %v938 = vld [vmem:[#allocation2] sm:$0x77]
        %v939 = vld [vmem:[#allocation2 + $0x8] sm:$0x77]
        %v940 = vld [vmem:[#allocation2 + $0x10] sm:$0x7]
        %v944 = vcombine.high %v938, %v938
        %v945 = vcombine.high %v939, %v939
        %v946 = vrot.slane %v938, 7
        %v947 = vrot.slane %v944, 7
        %v948 = vrot.slane %v939, 7
        %v949 = vrot.slane %v945, 7
        %v950 = vrot.slane %v940, 7
        %951 = vrot.lane.b32.xlu0 %v946, 28
        %v952 = vpop.permute.xlu0 %951
        %953 = vrot.lane.b32.xlu0 %v947, 28
        %v954 = vpop.permute.xlu0 %953
        %955 = vrot.lane.b32.xlu0 %v948, 28
        %v956 = vpop.permute.xlu0 %955
        %957 = vrot.lane.b32.xlu0 %v949, 28
        %v958 = vpop.permute.xlu0 %957
        %959 = vrot.lane.b32.xlu0 %v950, 28
        %v960 = vpop.permute.xlu0 %959
        %vm961 = vcmask 228352
        %v962 = vsel %vm961, %v952, %v954
        %v963 = vsel %vm961, %v954, %v956
        %v964 = vsel %vm961, %v956, %v958
        %v965 = vsel %vm961, %v958, %v960
        %970 = vst [vmem:[#allocation3 + $0xe0] sm:$0xe] %v962
        %971 = vst [vmem:[#allocation3 + $0xe8] sm:$0xe] %v963
        %972 = vst [vmem:[#allocation3 + $0xf0] sm:$0xe] %v964
        %973 = vst [vmem:[#allocation3 + $0xf8] sm:$0xe] %v965
        %v974 = vld [vmem:[#allocation2 + $0x4] sm:$0x77]
        %v975 = vld [vmem:[#allocation2 + $0xc] sm:$0x77]
        %v978 = vcombine.low %v974, %v974
        %v979 = vcombine.low %v975, %v975
        %982 = vst [vmem:[#allocation3 + $0xe0] sm:$0x70] %v978
        %983 = vst [vmem:[#allocation3 + $0xe8] sm:$0x70] %v974
        %984 = vst [vmem:[#allocation3 + $0xf0] sm:$0x70] %v979
        %985 = vst [vmem:[#allocation3 + $0xf8] sm:$0x70] %v975
        %v986 = vld [vmem:[#allocation2 + $0x4] sm:$0x77]
        %v987 = vld [vmem:[#allocation2 + $0xc] sm:$0x77]
        %v988 = vld [vmem:[#allocation2 + $0x14] sm:$0x7]
        %v992 = vcombine.high %v986, %v986
        %v993 = vcombine.high %v987, %v987
        %v994 = vrot.slane %v986, 1
        %v995 = vrot.slane %v992, 1
        %v996 = vrot.slane %v987, 1
        %v997 = vrot.slane %v993, 1
        %v998 = vrot.slane %v988, 1
        %999 = vrot.lane.b32.xlu0 %v994, 127
        %v1000 = vpop.permute.xlu0 %999
        %1001 = vrot.lane.b32.xlu0 %v995, 127
        %v1002 = vpop.permute.xlu0 %1001
        %1003 = vrot.lane.b32.xlu0 %v996, 127
        %v1004 = vpop.permute.xlu0 %1003
        %1005 = vrot.lane.b32.xlu0 %v997, 127
        %v1006 = vpop.permute.xlu0 %1005
        %1007 = vrot.lane.b32.xlu0 %v998, 127
        %v1008 = vpop.permute.xlu0 %1007
        %v1009 = vsel %vm311, %v1000, %v1002
        %v1010 = vsel %vm311, %v1002, %v1004
        %v1011 = vsel %vm311, %v1004, %v1006
        %v1012 = vsel %vm311, %v1006, %v1008
        %1017 = vst [vmem:[#allocation3 + $0xe0] sm:$0x80] %v1009
        %1018 = vst [vmem:[#allocation3 + $0xe8] sm:$0x80] %v1010
        %1019 = vst [vmem:[#allocation3 + $0xf0] sm:$0x80] %v1011
        %1020 = vst [vmem:[#allocation3 + $0xf8] sm:$0x80] %v1012
        %1021 = vst [vmem:[#allocation3 + $0x100] sm:$0x3] %v1009
        %1022 = vst [vmem:[#allocation3 + $0x108] sm:$0x3] %v1010
        %1023 = vst [vmem:[#allocation3 + $0x110] sm:$0x3] %v1011
        %1024 = vst [vmem:[#allocation3 + $0x118] sm:$0x3] %v1012
        %v1025 = vld [vmem:[#allocation2 + $0x4] sm:$0x77]
        %v1026 = vld [vmem:[#allocation2 + $0xc] sm:$0x77]
        %v1027 = vld [vmem:[#allocation2 + $0x14] sm:$0x7]
        %v1031 = vcombine.high %v1025, %v1025
        %v1032 = vcombine.high %v1026, %v1026
        %v1033 = vrot.slane %v1025, 6
        %v1034 = vrot.slane %v1031, 6
        %v1035 = vrot.slane %v1026, 6
        %v1036 = vrot.slane %v1032, 6
        %v1037 = vrot.slane %v1027, 6
        %1038 = vrot.lane.b32.xlu0 %v1033, 126
        %v1039 = vpop.permute.xlu0 %1038
        %1040 = vrot.lane.b32.xlu0 %v1034, 126
        %v1041 = vpop.permute.xlu0 %1040
        %1042 = vrot.lane.b32.xlu0 %v1035, 126
        %v1043 = vpop.permute.xlu0 %1042
        %1044 = vrot.lane.b32.xlu0 %v1036, 126
        %v1045 = vpop.permute.xlu0 %1044
        %1046 = vrot.lane.b32.xlu0 %v1037, 126
        %v1047 = vpop.permute.xlu0 %1046
        %v1048 = vsel %vm347, %v1039, %v1041
        %v1049 = vsel %vm347, %v1041, %v1043
        %v1050 = vsel %vm347, %v1043, %v1045
        %v1051 = vsel %vm347, %v1045, %v1047
        %1056 = vst [vmem:[#allocation3 + $0x100] sm:$0x1c] %v1048
        %1057 = vst [vmem:[#allocation3 + $0x108] sm:$0x1c] %v1049
        %1058 = vst [vmem:[#allocation3 + $0x110] sm:$0x1c] %v1050
        %1059 = vst [vmem:[#allocation3 + $0x118] sm:$0x1c] %v1051
        %v1060 = vld [vmem:[#allocation2 + $0x4] sm:$0x77]
        %v1061 = vld [vmem:[#allocation2 + $0xc] sm:$0x77]
        %v1062 = vld [vmem:[#allocation2 + $0x14] sm:$0x7]
        %v1066 = vcombine.high %v1060, %v1060
        %v1067 = vcombine.high %v1061, %v1061
        %v1068 = vrot.slane %v1060, 3
        %v1069 = vrot.slane %v1066, 3
        %v1070 = vrot.slane %v1061, 3
        %v1071 = vrot.slane %v1067, 3
        %v1072 = vrot.slane %v1062, 3
        %1073 = vrot.lane.b32.xlu0 %v1068, 125
        %v1074 = vpop.permute.xlu0 %1073
        %1075 = vrot.lane.b32.xlu0 %v1069, 125
        %v1076 = vpop.permute.xlu0 %1075
        %1077 = vrot.lane.b32.xlu0 %v1070, 125
        %v1078 = vpop.permute.xlu0 %1077
        %1079 = vrot.lane.b32.xlu0 %v1071, 125
        %v1080 = vpop.permute.xlu0 %1079
        %1081 = vrot.lane.b32.xlu0 %v1072, 125
        %v1082 = vpop.permute.xlu0 %1081
        %v1083 = vsel %vm387, %v1074, %v1076
        %v1084 = vsel %vm387, %v1076, %v1078
        %v1085 = vsel %vm387, %v1078, %v1080
        %v1086 = vsel %vm387, %v1080, %v1082
        %1091 = vst [vmem:[#allocation3 + $0x100] sm:$0xe0] %v1083
        %1092 = vst [vmem:[#allocation3 + $0x108] sm:$0xe0] %v1084
        %1093 = vst [vmem:[#allocation3 + $0x110] sm:$0xe0] %v1085
        %1094 = vst [vmem:[#allocation3 + $0x118] sm:$0xe0] %v1086
        %v1095 = vld [vmem:[#allocation2 + $0x4] sm:$0x77]
        %v1096 = vld [vmem:[#allocation2 + $0xc] sm:$0x77]
        %v1097 = vld [vmem:[#allocation2 + $0x14] sm:$0x7]
        %v1101 = vcombine.high %v1095, %v1095
        %v1102 = vcombine.high %v1096, %v1096
        %1103 = vrot.lane.b32.xlu0 %v1095, 124
        %v1104 = vpop.permute.xlu0 %1103
        %1105 = vrot.lane.b32.xlu0 %v1101, 124
        %v1106 = vpop.permute.xlu0 %1105
        %1107 = vrot.lane.b32.xlu0 %v1096, 124
        %v1108 = vpop.permute.xlu0 %1107
        %1109 = vrot.lane.b32.xlu0 %v1102, 124
        %v1110 = vpop.permute.xlu0 %1109
        %1111 = vrot.lane.b32.xlu0 %v1097, 124
        %v1112 = vpop.permute.xlu0 %1111
        %v1113 = vsel %vm419, %v1104, %v1106
        %v1114 = vsel %vm419, %v1106, %v1108
        %v1115 = vsel %vm419, %v1108, %v1110
        %v1116 = vsel %vm419, %v1110, %v1112
        %1121 = vst [vmem:[#allocation3 + $0x120] sm:$0x7] %v1113
        %1122 = vst [vmem:[#allocation3 + $0x128] sm:$0x7] %v1114
        %1123 = vst [vmem:[#allocation3 + $0x130] sm:$0x7] %v1115
        %1124 = vst [vmem:[#allocation3 + $0x138] sm:$0x7] %v1116
        %1125 = vst [vmem:[#allocation3 + $0x120] sm:$0xf8] 0.0
        %1126 = vst [vmem:[#allocation3 + $0x128] sm:$0xf8] 0.0
        %1127 = vst [vmem:[#allocation3 + $0x130] sm:$0xf8] 0.0
        %1128 = vst [vmem:[#allocation3 + $0x138] sm:$0xf8] 0.0
        %v1129 = vld [vmem:[%s0] sm:$0xff]
        %v1130 = vld [vmem:[#allocation3] sm:$0xff]
        %v1131 = vld [vmem:[#allocation3 + $0x8] sm:$0xff]
        %v1132 = vld [vmem:[#allocation3 + $0x10] sm:$0xff]
        %v1133 = vld [vmem:[#allocation3 + $0x18] sm:$0xff]
        %v1134 = vld [vmem:[#allocation3 + $0x20] sm:$0xff]
        %v1135 = vld [vmem:[#allocation3 + $0x28] sm:$0xff]
        %v1136 = vld [vmem:[#allocation3 + $0x30] sm:$0xff]
        %v1137 = vld [vmem:[#allocation3 + $0x38] sm:$0xff]
        %v1138 = vld [vmem:[#allocation3 + $0x40] sm:$0xff]
        %v1139 = vld [vmem:[#allocation3 + $0x48] sm:$0xff]
        %v1140 = vld [vmem:[#allocation3 + $0x50] sm:$0xff]
        %v1141 = vld [vmem:[#allocation3 + $0x58] sm:$0xff]
        %v1142 = vld [vmem:[#allocation3 + $0x60] sm:$0xff]
        %v1143 = vld [vmem:[#allocation3 + $0x68] sm:$0xff]
        %v1144 = vld [vmem:[#allocation3 + $0x70] sm:$0xff]
        %v1145 = vld [vmem:[#allocation3 + $0x78] sm:$0xff]
        %v1146 = vld [vmem:[#allocation3 + $0x80] sm:$0xff]
        %v1147 = vld [vmem:[#allocation3 + $0x88] sm:$0xff]
        %v1148 = vld [vmem:[#allocation3 + $0x90] sm:$0xff]
        %v1149 = vld [vmem:[#allocation3 + $0x98] sm:$0xff]
        %v1150 = vld [vmem:[#allocation3 + $0xa0] sm:$0xff]
        %v1151 = vld [vmem:[#allocation3 + $0xa8] sm:$0xff]
        %v1152 = vld [vmem:[#allocation3 + $0xb0] sm:$0xff]
        %v1153 = vld [vmem:[#allocation3 + $0xb8] sm:$0xff]
        %v1154 = vld [vmem:[#allocation3 + $0xc0] sm:$0xff]
        %v1155 = vld [vmem:[#allocation3 + $0xc8] sm:$0xff]
        %v1156 = vld [vmem:[#allocation3 + $0xd0] sm:$0xff]
        %v1157 = vld [vmem:[#allocation3 + $0xd8] sm:$0xff]
        %v1158 = vld [vmem:[#allocation3 + $0xe0] sm:$0xff]
        %v1159 = vld [vmem:[#allocation3 + $0xe8] sm:$0xff]
        %v1160 = vld [vmem:[#allocation3 + $0xf0] sm:$0xff]
        %v1161 = vld [vmem:[#allocation3 + $0xf8] sm:$0xff]
        %v1162 = vld [vmem:[#allocation3 + $0x100] sm:$0xff]
        %v1163 = vld [vmem:[#allocation3 + $0x108] sm:$0xff]
        %v1164 = vld [vmem:[#allocation3 + $0x110] sm:$0xff]
        %v1165 = vld [vmem:[#allocation3 + $0x118] sm:$0xff]
        %v1166 = vld [vmem:[#allocation3 + $0x120] sm:$0xff]
        %v1167 = vld [vmem:[#allocation3 + $0x128] sm:$0xff]
        %v1168 = vld [vmem:[#allocation3 + $0x130] sm:$0xff]
        %v1169 = vld [vmem:[#allocation3 + $0x138] sm:$0xff]
        %vm1170 = vcmask 654336
        %v1172 = vsel %vm1170, %v1129, 0
        %1174 = vmatprep.subr.mxu0 0.0
        %1175 = vmatpush1.msra.mxu0 0.0
        %1176 = vmatprep.subr.mxu0 0.0
        %1177 = vmatpush1.msra.mxu0 0.0
        %1178 = vmatprep.subr.mxu0 0.0
        %1179 = vmatpush1.msra.mxu0 0.0
        %1180 = vmatprep.subr.mxu0 0.0
        %1181 = vmatpush1.msra.mxu0 0.0
        %1182 = vmatprep.subr.mxu0 0.0
        %1183 = vmatpush1.msra.mxu0 0.0
        %1184 = vmatprep.subr.mxu0 0.0
        %1185 = vmatpush1.msra.mxu0 0.0
        %v1186 = vand.u32 %v1167, 4294901760
        %1187 = vmatprep.subr.mxu0 %v1186
        %v1188 = vand.u32 %v1166, 4294901760
        %1189 = vmatpush1.msra.mxu0 %v1188
        %v1190 = vand.u32 %v1163, 4294901760
        %1191 = vmatprep.subr.mxu0 %v1190
        %v1192 = vand.u32 %v1162, 4294901760
        %1193 = vmatpush1.msra.mxu0 %v1192
        %v1194 = vand.u32 %v1159, 4294901760
        %1195 = vmatprep.subr.mxu0 %v1194
        %v1196 = vand.u32 %v1158, 4294901760
        %1197 = vmatpush1.msra.mxu0 %v1196
        %v1198 = vand.u32 %v1155, 4294901760
        %1199 = vmatprep.subr.mxu0 %v1198
        %v1200 = vand.u32 %v1154, 4294901760
        %1201 = vmatpush1.msra.mxu0 %v1200
        %v1202 = vand.u32 %v1151, 4294901760
        %1203 = vmatprep.subr.mxu0 %v1202
        %v1204 = vand.u32 %v1150, 4294901760
        %1205 = vmatpush1.msra.mxu0 %v1204
        %v1206 = vand.u32 %v1147, 4294901760
        %1207 = vmatprep.subr.mxu0 %v1206
        %v1208 = vand.u32 %v1146, 4294901760
        %1209 = vmatpush1.msra.mxu0 %v1208
        %v1210 = vand.u32 %v1143, 4294901760
        %1211 = vmatprep.subr.mxu0 %v1210
        %v1212 = vand.u32 %v1142, 4294901760
        %1213 = vmatpush1.msra.mxu0 %v1212
        %v1214 = vand.u32 %v1139, 4294901760
        %1215 = vmatprep.subr.mxu0 %v1214
        %v1216 = vand.u32 %v1138, 4294901760
        %1217 = vmatpush1.msra.mxu0 %v1216
        %v1218 = vand.u32 %v1135, 4294901760
        %1219 = vmatprep.subr.mxu0 %v1218
        %v1220 = vand.u32 %v1134, 4294901760
        %1221 = vmatpush1.msra.mxu0 %v1220
        %v1222 = vand.u32 %v1131, 4294901760
        %1223 = vmatprep.subr.mxu0 %v1222
        %v1224 = vand.u32 %v1130, 4294901760
        %1225 = vmatpush1.msra.mxu0 %v1224
        %1226 = vmatprep.subr.mxu0 0.0
        %1227 = vmatpush2.msra.mxu0 0.0
        %1228 = vmatprep.subr.mxu0 0.0
        %1229 = vmatpush2.msra.mxu0 0.0
        %1230 = vmatprep.subr.mxu0 0.0
        %1231 = vmatpush2.msra.mxu0 0.0
        %1232 = vmatprep.subr.mxu0 0.0
        %1233 = vmatpush2.msra.mxu0 0.0
        %1234 = vmatprep.subr.mxu0 0.0
        %1235 = vmatpush2.msra.mxu0 0.0
        %1236 = vmatprep.subr.mxu0 0.0
        %1237 = vmatpush2.msra.mxu0 0.0
        %1238 = vmatprep.subr.mxu0 0.0
        %1239 = vmatpush2.msra.mxu0 0.0
        %1240 = vmatprep.subr.mxu0 0.0
        %1241 = vmatpush2.msra.mxu0 0.0
        %1242 = vmatprep.subr.mxu0 0.0
        %1243 = vmatpush2.msra.mxu0 0.0
        %1244 = vmatprep.subr.mxu0 0.0
        %1245 = vmatpush2.msra.mxu0 0.0
        %1246 = vmatprep.subr.mxu0 0.0
        %1247 = vmatpush2.msra.mxu0 0.0
        %1248 = vmatprep.subr.mxu0 0.0
        %1249 = vmatpush2.msra.mxu0 0.0
        %1250 = vmatprep.subr.mxu0 0.0
        %1251 = vmatpush2.msra.mxu0 0.0
        %1252 = vmatprep.subr.mxu0 0.0
        %1253 = vmatpush2.msra.mxu0 0.0
        %1254 = vmatprep.subr.mxu0 0.0
        %1255 = vmatpush2.msra.mxu0 0.0
        %1256 = vmatprep.subr.mxu0 0.0
        %1257 = vmatpush2.msra.mxu0 0.0
        %1258 = vmatprep.mubr.f32.mxu0 0.0
        %v1259 = vand.u32 %v1172, 4294901760
        %v1260 = vsub.f32 %v1172, %v1259
        %v1261 = vand.u32 %v1260, 4294901760
        %v1262 = vsub.f32 %v1260, %v1261
        %v1263 = vand.u32 %v1262, 4294901760
        %1264 = vmatmul.mubr.f32.gmra.mxu0 %v1263
        %v1265 = vpop.f32.mrf.mxu0
        %v1266 = vadd.f32 0.0, %v1265
        %v1267 = vpop.f32.mrf.mxu0
        %v1268 = vadd.f32 0.0, %v1267
        %1269 = vdwg.mxu0
        %1270 = vmatprep.subr.mxu0 0.0
        %1271 = vmatpush1.msra.mxu0 0.0
        %1272 = vmatprep.subr.mxu0 0.0
        %1273 = vmatpush1.msra.mxu0 0.0
        %1274 = vmatprep.subr.mxu0 0.0
        %1275 = vmatpush1.msra.mxu0 0.0
        %1276 = vmatprep.subr.mxu0 0.0
        %1277 = vmatpush1.msra.mxu0 0.0
        %1278 = vmatprep.subr.mxu0 0.0
        %1279 = vmatpush1.msra.mxu0 0.0
        %1280 = vmatprep.subr.mxu0 0.0
        %1281 = vmatpush1.msra.mxu0 0.0
        %v1282 = vand.u32 %v1167, 4294901760
        %v1283 = vsub.f32 %v1167, %v1282
        %v1284 = vand.u32 %v1283, 4294901760
        %v1285 = vsub.f32 %v1283, %v1284
        %v1286 = vand.u32 %v1285, 4294901760
        %1287 = vmatprep.subr.mxu0 %v1286
        %v1288 = vand.u32 %v1166, 4294901760
        %v1289 = vsub.f32 %v1166, %v1288
        %v1290 = vand.u32 %v1289, 4294901760
        %v1291 = vsub.f32 %v1289, %v1290
        %v1292 = vand.u32 %v1291, 4294901760
        %1293 = vmatpush1.msra.mxu0 %v1292
        %v1294 = vand.u32 %v1163, 4294901760
        %v1295 = vsub.f32 %v1163, %v1294
        %v1296 = vand.u32 %v1295, 4294901760
        %v1297 = vsub.f32 %v1295, %v1296
        %v1298 = vand.u32 %v1297, 4294901760
        %1299 = vmatprep.subr.mxu0 %v1298
        %v1300 = vand.u32 %v1162, 4294901760
        %v1301 = vsub.f32 %v1162, %v1300
        %v1302 = vand.u32 %v1301, 4294901760
        %v1303 = vsub.f32 %v1301, %v1302
        %v1304 = vand.u32 %v1303, 4294901760
        %1305 = vmatpush1.msra.mxu0 %v1304
        %v1306 = vand.u32 %v1159, 4294901760
        %v1307 = vsub.f32 %v1159, %v1306
        %v1308 = vand.u32 %v1307, 4294901760
        %v1309 = vsub.f32 %v1307, %v1308
        %v1310 = vand.u32 %v1309, 4294901760
        %1311 = vmatprep.subr.mxu0 %v1310
        %v1312 = vand.u32 %v1158, 4294901760
        %v1313 = vsub.f32 %v1158, %v1312
        %v1314 = vand.u32 %v1313, 4294901760
        %v1315 = vsub.f32 %v1313, %v1314
        %v1316 = vand.u32 %v1315, 4294901760
        %1317 = vmatpush1.msra.mxu0 %v1316
        %v1318 = vand.u32 %v1155, 4294901760
        %v1319 = vsub.f32 %v1155, %v1318
        %v1320 = vand.u32 %v1319, 4294901760
        %v1321 = vsub.f32 %v1319, %v1320
        %v1322 = vand.u32 %v1321, 4294901760
        %1323 = vmatprep.subr.mxu0 %v1322
        %v1324 = vand.u32 %v1154, 4294901760
        %v1325 = vsub.f32 %v1154, %v1324
        %v1326 = vand.u32 %v1325, 4294901760
        %v1327 = vsub.f32 %v1325, %v1326
        %v1328 = vand.u32 %v1327, 4294901760
        %1329 = vmatpush1.msra.mxu0 %v1328
        %v1330 = vand.u32 %v1151, 4294901760
        %v1331 = vsub.f32 %v1151, %v1330
        %v1332 = vand.u32 %v1331, 4294901760
        %v1333 = vsub.f32 %v1331, %v1332
        %v1334 = vand.u32 %v1333, 4294901760
        %1335 = vmatprep.subr.mxu0 %v1334
        %v1336 = vand.u32 %v1150, 4294901760
        %v1337 = vsub.f32 %v1150, %v1336
        %v1338 = vand.u32 %v1337, 4294901760
        %v1339 = vsub.f32 %v1337, %v1338
        %v1340 = vand.u32 %v1339, 4294901760
        %1341 = vmatpush1.msra.mxu0 %v1340
        %v1342 = vand.u32 %v1147, 4294901760
        %v1343 = vsub.f32 %v1147, %v1342
        %v1344 = vand.u32 %v1343, 4294901760
        %v1345 = vsub.f32 %v1343, %v1344
        %v1346 = vand.u32 %v1345, 4294901760
        %1347 = vmatprep.subr.mxu0 %v1346
        %v1348 = vand.u32 %v1146, 4294901760
        %v1349 = vsub.f32 %v1146, %v1348
        %v1350 = vand.u32 %v1349, 4294901760
        %v1351 = vsub.f32 %v1349, %v1350
        %v1352 = vand.u32 %v1351, 4294901760
        %1353 = vmatpush1.msra.mxu0 %v1352
        %v1354 = vand.u32 %v1143, 4294901760
        %v1355 = vsub.f32 %v1143, %v1354
        %v1356 = vand.u32 %v1355, 4294901760
        %v1357 = vsub.f32 %v1355, %v1356
        %v1358 = vand.u32 %v1357, 4294901760
        %1359 = vmatprep.subr.mxu0 %v1358
        %v1360 = vand.u32 %v1142, 4294901760
        %v1361 = vsub.f32 %v1142, %v1360
        %v1362 = vand.u32 %v1361, 4294901760
        %v1363 = vsub.f32 %v1361, %v1362
        %v1364 = vand.u32 %v1363, 4294901760
        %1365 = vmatpush1.msra.mxu0 %v1364
        %v1366 = vand.u32 %v1139, 4294901760
        %v1367 = vsub.f32 %v1139, %v1366
        %v1368 = vand.u32 %v1367, 4294901760
        %v1369 = vsub.f32 %v1367, %v1368
        %v1370 = vand.u32 %v1369, 4294901760
        %1371 = vmatprep.subr.mxu0 %v1370
        %v1372 = vand.u32 %v1138, 4294901760
        %v1373 = vsub.f32 %v1138, %v1372
        %v1374 = vand.u32 %v1373, 4294901760
        %v1375 = vsub.f32 %v1373, %v1374
        %v1376 = vand.u32 %v1375, 4294901760
        %1377 = vmatpush1.msra.mxu0 %v1376
        %v1378 = vand.u32 %v1135, 4294901760
        %v1379 = vsub.f32 %v1135, %v1378
        %v1380 = vand.u32 %v1379, 4294901760
        %v1381 = vsub.f32 %v1379, %v1380
        %v1382 = vand.u32 %v1381, 4294901760
        %1383 = vmatprep.subr.mxu0 %v1382
        %v1384 = vand.u32 %v1134, 4294901760
        %v1385 = vsub.f32 %v1134, %v1384
        %v1386 = vand.u32 %v1385, 4294901760
        %v1387 = vsub.f32 %v1385, %v1386
        %v1388 = vand.u32 %v1387, 4294901760
        %1389 = vmatpush1.msra.mxu0 %v1388
        %v1390 = vand.u32 %v1131, 4294901760
        %v1391 = vsub.f32 %v1131, %v1390
        %v1392 = vand.u32 %v1391, 4294901760
        %v1393 = vsub.f32 %v1391, %v1392
        %v1394 = vand.u32 %v1393, 4294901760
        %1395 = vmatprep.subr.mxu0 %v1394
        %v1396 = vand.u32 %v1130, 4294901760
        %v1397 = vsub.f32 %v1130, %v1396
        %v1398 = vand.u32 %v1397, 4294901760
        %v1399 = vsub.f32 %v1397, %v1398
        %v1400 = vand.u32 %v1399, 4294901760
        %1401 = vmatpush1.msra.mxu0 %v1400
        %1402 = vmatprep.subr.mxu0 0.0
        %1403 = vmatpush2.msra.mxu0 0.0
        %1404 = vmatprep.subr.mxu0 0.0
        %1405 = vmatpush2.msra.mxu0 0.0
        %1406 = vmatprep.subr.mxu0 0.0
        %1407 = vmatpush2.msra.mxu0 0.0
        %1408 = vmatprep.subr.mxu0 0.0
        %1409 = vmatpush2.msra.mxu0 0.0
        %1410 = vmatprep.subr.mxu0 0.0
        %1411 = vmatpush2.msra.mxu0 0.0
        %1412 = vmatprep.subr.mxu0 0.0
        %1413 = vmatpush2.msra.mxu0 0.0
        %1414 = vmatprep.subr.mxu0 0.0
        %1415 = vmatpush2.msra.mxu0 0.0
        %1416 = vmatprep.subr.mxu0 0.0
        %1417 = vmatpush2.msra.mxu0 0.0
        %1418 = vmatprep.subr.mxu0 0.0
        %1419 = vmatpush2.msra.mxu0 0.0
        %1420 = vmatprep.subr.mxu0 0.0
        %1421 = vmatpush2.msra.mxu0 0.0
        %1422 = vmatprep.subr.mxu0 0.0
        %1423 = vmatpush2.msra.mxu0 0.0
        %1424 = vmatprep.subr.mxu0 0.0
        %1425 = vmatpush2.msra.mxu0 0.0
        %1426 = vmatprep.subr.mxu0 0.0
        %1427 = vmatpush2.msra.mxu0 0.0
        %1428 = vmatprep.subr.mxu0 0.0
        %1429 = vmatpush2.msra.mxu0 0.0
        %1430 = vmatprep.subr.mxu0 0.0
        %1431 = vmatpush2.msra.mxu0 0.0
        %1432 = vmatprep.subr.mxu0 0.0
        %1433 = vmatpush2.msra.mxu0 0.0
        %1434 = vmatprep.mubr.f32.mxu0 0.0
        %v1435 = vand.u32 %v1172, 4294901760
        %1436 = vmatmul.mubr.f32.gmra.mxu0 %v1435
        %v1437 = vpop.f32.mrf.mxu0
        %v1438 = vadd.f32 %v1266, %v1437
        %v1439 = vpop.f32.mrf.mxu0
        %v1440 = vadd.f32 %v1268, %v1439
        %1441 = vdwg.mxu0
        %1442 = vmatprep.subr.mxu0 0.0
        %1443 = vmatpush1.msra.mxu0 0.0
        %1444 = vmatprep.subr.mxu0 0.0
        %1445 = vmatpush1.msra.mxu0 0.0
        %1446 = vmatprep.subr.mxu0 0.0
        %1447 = vmatpush1.msra.mxu0 0.0
        %1448 = vmatprep.subr.mxu0 0.0
        %1449 = vmatpush1.msra.mxu0 0.0
        %1450 = vmatprep.subr.mxu0 0.0
        %1451 = vmatpush1.msra.mxu0 0.0
        %1452 = vmatprep.subr.mxu0 0.0
        %1453 = vmatpush1.msra.mxu0 0.0
        %v1454 = vand.u32 %v1167, 4294901760
        %v1455 = vsub.f32 %v1167, %v1454
        %1456 = vmatprep.subr.mxu0 %v1455
        %v1457 = vand.u32 %v1166, 4294901760
        %v1458 = vsub.f32 %v1166, %v1457
        %1459 = vmatpush1.msra.mxu0 %v1458
        %v1460 = vand.u32 %v1163, 4294901760
        %v1461 = vsub.f32 %v1163, %v1460
        %1462 = vmatprep.subr.mxu0 %v1461
        %v1463 = vand.u32 %v1162, 4294901760
        %v1464 = vsub.f32 %v1162, %v1463
        %1465 = vmatpush1.msra.mxu0 %v1464
        %v1466 = vand.u32 %v1159, 4294901760
        %v1467 = vsub.f32 %v1159, %v1466
        %1468 = vmatprep.subr.mxu0 %v1467
        %v1469 = vand.u32 %v1158, 4294901760
        %v1470 = vsub.f32 %v1158, %v1469
        %1471 = vmatpush1.msra.mxu0 %v1470
        %v1472 = vand.u32 %v1155, 4294901760
        %v1473 = vsub.f32 %v1155, %v1472
        %1474 = vmatprep.subr.mxu0 %v1473
        %v1475 = vand.u32 %v1154, 4294901760
        %v1476 = vsub.f32 %v1154, %v1475
        %1477 = vmatpush1.msra.mxu0 %v1476
        %v1478 = vand.u32 %v1151, 4294901760
        %v1479 = vsub.f32 %v1151, %v1478
        %1480 = vmatprep.subr.mxu0 %v1479
        %v1481 = vand.u32 %v1150, 4294901760
        %v1482 = vsub.f32 %v1150, %v1481
        %1483 = vmatpush1.msra.mxu0 %v1482
        %v1484 = vand.u32 %v1147, 4294901760
        %v1485 = vsub.f32 %v1147, %v1484
        %1486 = vmatprep.subr.mxu0 %v1485
        %v1487 = vand.u32 %v1146, 4294901760
        %v1488 = vsub.f32 %v1146, %v1487
        %1489 = vmatpush1.msra.mxu0 %v1488
        %v1490 = vand.u32 %v1143, 4294901760
        %v1491 = vsub.f32 %v1143, %v1490
        %1492 = vmatprep.subr.mxu0 %v1491
        %v1493 = vand.u32 %v1142, 4294901760
        %v1494 = vsub.f32 %v1142, %v1493
        %1495 = vmatpush1.msra.mxu0 %v1494
        %v1496 = vand.u32 %v1139, 4294901760
        %v1497 = vsub.f32 %v1139, %v1496
        %1498 = vmatprep.subr.mxu0 %v1497
        %v1499 = vand.u32 %v1138, 4294901760
        %v1500 = vsub.f32 %v1138, %v1499
        %1501 = vmatpush1.msra.mxu0 %v1500
        %v1502 = vand.u32 %v1135, 4294901760
        %v1503 = vsub.f32 %v1135, %v1502
        %1504 = vmatprep.subr.mxu0 %v1503
        %v1505 = vand.u32 %v1134, 4294901760
        %v1506 = vsub.f32 %v1134, %v1505
        %1507 = vmatpush1.msra.mxu0 %v1506
        %v1508 = vand.u32 %v1131, 4294901760
        %v1509 = vsub.f32 %v1131, %v1508
        %1510 = vmatprep.subr.mxu0 %v1509
        %v1511 = vand.u32 %v1130, 4294901760
        %v1512 = vsub.f32 %v1130, %v1511
        %1513 = vmatpush1.msra.mxu0 %v1512
        %1514 = vmatprep.subr.mxu0 0.0
        %1515 = vmatpush2.msra.mxu0 0.0
        %1516 = vmatprep.subr.mxu0 0.0
        %1517 = vmatpush2.msra.mxu0 0.0
        %1518 = vmatprep.subr.mxu0 0.0
        %1519 = vmatpush2.msra.mxu0 0.0
        %1520 = vmatprep.subr.mxu0 0.0
        %1521 = vmatpush2.msra.mxu0 0.0
        %1522 = vmatprep.subr.mxu0 0.0
        %1523 = vmatpush2.msra.mxu0 0.0
        %1524 = vmatprep.subr.mxu0 0.0
        %1525 = vmatpush2.msra.mxu0 0.0
        %1526 = vmatprep.subr.mxu0 0.0
        %1527 = vmatpush2.msra.mxu0 0.0
        %1528 = vmatprep.subr.mxu0 0.0
        %1529 = vmatpush2.msra.mxu0 0.0
        %1530 = vmatprep.subr.mxu0 0.0
        %1531 = vmatpush2.msra.mxu0 0.0
        %1532 = vmatprep.subr.mxu0 0.0
        %1533 = vmatpush2.msra.mxu0 0.0
        %1534 = vmatprep.subr.mxu0 0.0
        %1535 = vmatpush2.msra.mxu0 0.0
        %1536 = vmatprep.subr.mxu0 0.0
        %1537 = vmatpush2.msra.mxu0 0.0
        %1538 = vmatprep.subr.mxu0 0.0
        %1539 = vmatpush2.msra.mxu0 0.0
        %1540 = vmatprep.subr.mxu0 0.0
        %1541 = vmatpush2.msra.mxu0 0.0
        %1542 = vmatprep.subr.mxu0 0.0
        %1543 = vmatpush2.msra.mxu0 0.0
        %1544 = vmatprep.subr.mxu0 0.0
        %1545 = vmatpush2.msra.mxu0 0.0
        %1546 = vmatprep.mubr.f32.mxu0 0.0
        %v1547 = vand.u32 %v1172, 4294901760
        %v1548 = vsub.f32 %v1172, %v1547
        %1549 = vmatmul.mubr.f32.gmra.mxu0 %v1548
        %v1550 = vpop.f32.mrf.mxu0
        %v1551 = vadd.f32 %v1438, %v1550
        %v1552 = vpop.f32.mrf.mxu0
        %v1553 = vadd.f32 %v1440, %v1552
        %1554 = vdwg.mxu0
        %1555 = vmatprep.subr.mxu0 0.0
        %1556 = vmatpush1.msra.mxu0 0.0
        %1557 = vmatprep.subr.mxu0 0.0
        %1558 = vmatpush1.msra.mxu0 0.0
        %1559 = vmatprep.subr.mxu0 0.0
        %1560 = vmatpush1.msra.mxu0 0.0
        %1561 = vmatprep.subr.mxu0 0.0
        %1562 = vmatpush1.msra.mxu0 0.0
        %1563 = vmatprep.subr.mxu0 0.0
        %1564 = vmatpush1.msra.mxu0 0.0
        %1565 = vmatprep.subr.mxu0 0.0
        %1566 = vmatpush1.msra.mxu0 0.0
        %v1567 = vand.u32 %v1167, 4294901760
        %1568 = vmatprep.subr.mxu0 %v1567
        %v1569 = vand.u32 %v1166, 4294901760
        %1570 = vmatpush1.msra.mxu0 %v1569
        %v1571 = vand.u32 %v1163, 4294901760
        %1572 = vmatprep.subr.mxu0 %v1571
        %v1573 = vand.u32 %v1162, 4294901760
        %1574 = vmatpush1.msra.mxu0 %v1573
        %v1575 = vand.u32 %v1159, 4294901760
        %1576 = vmatprep.subr.mxu0 %v1575
        %v1577 = vand.u32 %v1158, 4294901760
        %1578 = vmatpush1.msra.mxu0 %v1577
        %v1579 = vand.u32 %v1155, 4294901760
        %1580 = vmatprep.subr.mxu0 %v1579
        %v1581 = vand.u32 %v1154, 4294901760
        %1582 = vmatpush1.msra.mxu0 %v1581
        %v1583 = vand.u32 %v1151, 4294901760
        %1584 = vmatprep.subr.mxu0 %v1583
        %v1585 = vand.u32 %v1150, 4294901760
        %1586 = vmatpush1.msra.mxu0 %v1585
        %v1587 = vand.u32 %v1147, 4294901760
        %1588 = vmatprep.subr.mxu0 %v1587
        %v1589 = vand.u32 %v1146, 4294901760
        %1590 = vmatpush1.msra.mxu0 %v1589
        %v1591 = vand.u32 %v1143, 4294901760
        %1592 = vmatprep.subr.mxu0 %v1591
        %v1593 = vand.u32 %v1142, 4294901760
        %1594 = vmatpush1.msra.mxu0 %v1593
        %v1595 = vand.u32 %v1139, 4294901760
        %1596 = vmatprep.subr.mxu0 %v1595
        %v1597 = vand.u32 %v1138, 4294901760
        %1598 = vmatpush1.msra.mxu0 %v1597
        %v1599 = vand.u32 %v1135, 4294901760
        %1600 = vmatprep.subr.mxu0 %v1599
        %v1601 = vand.u32 %v1134, 4294901760
        %1602 = vmatpush1.msra.mxu0 %v1601
        %v1603 = vand.u32 %v1131, 4294901760
        %1604 = vmatprep.subr.mxu0 %v1603
        %v1605 = vand.u32 %v1130, 4294901760
        %1606 = vmatpush1.msra.mxu0 %v1605
        %1607 = vmatprep.subr.mxu0 0.0
        %1608 = vmatpush2.msra.mxu0 0.0
        %1609 = vmatprep.subr.mxu0 0.0
        %1610 = vmatpush2.msra.mxu0 0.0
        %1611 = vmatprep.subr.mxu0 0.0
        %1612 = vmatpush2.msra.mxu0 0.0
        %1613 = vmatprep.subr.mxu0 0.0
        %1614 = vmatpush2.msra.mxu0 0.0
        %1615 = vmatprep.subr.mxu0 0.0
        %1616 = vmatpush2.msra.mxu0 0.0
        %1617 = vmatprep.subr.mxu0 0.0
        %1618 = vmatpush2.msra.mxu0 0.0
        %1619 = vmatprep.subr.mxu0 0.0
        %1620 = vmatpush2.msra.mxu0 0.0
        %1621 = vmatprep.subr.mxu0 0.0
        %1622 = vmatpush2.msra.mxu0 0.0
        %1623 = vmatprep.subr.mxu0 0.0
        %1624 = vmatpush2.msra.mxu0 0.0
        %1625 = vmatprep.subr.mxu0 0.0
        %1626 = vmatpush2.msra.mxu0 0.0
        %1627 = vmatprep.subr.mxu0 0.0
        %1628 = vmatpush2.msra.mxu0 0.0
        %1629 = vmatprep.subr.mxu0 0.0
        %1630 = vmatpush2.msra.mxu0 0.0
        %1631 = vmatprep.subr.mxu0 0.0
        %1632 = vmatpush2.msra.mxu0 0.0
        %1633 = vmatprep.subr.mxu0 0.0
        %1634 = vmatpush2.msra.mxu0 0.0
        %1635 = vmatprep.subr.mxu0 0.0
        %1636 = vmatpush2.msra.mxu0 0.0
        %1637 = vmatprep.subr.mxu0 0.0
        %1638 = vmatpush2.msra.mxu0 0.0
        %1639 = vmatprep.mubr.f32.mxu0 0.0
        %v1640 = vand.u32 %v1172, 4294901760
        %v1641 = vsub.f32 %v1172, %v1640
        %v1642 = vand.u32 %v1641, 4294901760
        %1643 = vmatmul.mubr.f32.gmra.mxu0 %v1642
        %v1644 = vpop.f32.mrf.mxu0
        %v1645 = vadd.f32 %v1551, %v1644
        %v1646 = vpop.f32.mrf.mxu0
        %v1647 = vadd.f32 %v1553, %v1646
        %1648 = vdwg.mxu0
        %1649 = vmatprep.subr.mxu0 0.0
        %1650 = vmatpush1.msra.mxu0 0.0
        %1651 = vmatprep.subr.mxu0 0.0
        %1652 = vmatpush1.msra.mxu0 0.0
        %1653 = vmatprep.subr.mxu0 0.0
        %1654 = vmatpush1.msra.mxu0 0.0
        %1655 = vmatprep.subr.mxu0 0.0
        %1656 = vmatpush1.msra.mxu0 0.0
        %1657 = vmatprep.subr.mxu0 0.0
        %1658 = vmatpush1.msra.mxu0 0.0
        %1659 = vmatprep.subr.mxu0 0.0
        %1660 = vmatpush1.msra.mxu0 0.0
        %v1661 = vand.u32 %v1167, 4294901760
        %v1662 = vsub.f32 %v1167, %v1661
        %v1663 = vand.u32 %v1662, 4294901760
        %1664 = vmatprep.subr.mxu0 %v1663
        %v1665 = vand.u32 %v1166, 4294901760
        %v1666 = vsub.f32 %v1166, %v1665
        %v1667 = vand.u32 %v1666, 4294901760
        %1668 = vmatpush1.msra.mxu0 %v1667
        %v1669 = vand.u32 %v1163, 4294901760
        %v1670 = vsub.f32 %v1163, %v1669
        %v1671 = vand.u32 %v1670, 4294901760
        %1672 = vmatprep.subr.mxu0 %v1671
        %v1673 = vand.u32 %v1162, 4294901760
        %v1674 = vsub.f32 %v1162, %v1673
        %v1675 = vand.u32 %v1674, 4294901760
        %1676 = vmatpush1.msra.mxu0 %v1675
        %v1677 = vand.u32 %v1159, 4294901760
        %v1678 = vsub.f32 %v1159, %v1677
        %v1679 = vand.u32 %v1678, 4294901760
        %1680 = vmatprep.subr.mxu0 %v1679
        %v1681 = vand.u32 %v1158, 4294901760
        %v1682 = vsub.f32 %v1158, %v1681
        %v1683 = vand.u32 %v1682, 4294901760
        %1684 = vmatpush1.msra.mxu0 %v1683
        %v1685 = vand.u32 %v1155, 4294901760
        %v1686 = vsub.f32 %v1155, %v1685
        %v1687 = vand.u32 %v1686, 4294901760
        %1688 = vmatprep.subr.mxu0 %v1687
        %v1689 = vand.u32 %v1154, 4294901760
        %v1690 = vsub.f32 %v1154, %v1689
        %v1691 = vand.u32 %v1690, 4294901760
        %1692 = vmatpush1.msra.mxu0 %v1691
        %v1693 = vand.u32 %v1151, 4294901760
        %v1694 = vsub.f32 %v1151, %v1693
        %v1695 = vand.u32 %v1694, 4294901760
        %1696 = vmatprep.subr.mxu0 %v1695
        %v1697 = vand.u32 %v1150, 4294901760
        %v1698 = vsub.f32 %v1150, %v1697
        %v1699 = vand.u32 %v1698, 4294901760
        %1700 = vmatpush1.msra.mxu0 %v1699
        %v1701 = vand.u32 %v1147, 4294901760
        %v1702 = vsub.f32 %v1147, %v1701
        %v1703 = vand.u32 %v1702, 4294901760
        %1704 = vmatprep.subr.mxu0 %v1703
        %v1705 = vand.u32 %v1146, 4294901760
        %v1706 = vsub.f32 %v1146, %v1705
        %v1707 = vand.u32 %v1706, 4294901760
        %1708 = vmatpush1.msra.mxu0 %v1707
        %v1709 = vand.u32 %v1143, 4294901760
        %v1710 = vsub.f32 %v1143, %v1709
        %v1711 = vand.u32 %v1710, 4294901760
        %1712 = vmatprep.subr.mxu0 %v1711
        %v1713 = vand.u32 %v1142, 4294901760
        %v1714 = vsub.f32 %v1142, %v1713
        %v1715 = vand.u32 %v1714, 4294901760
        %1716 = vmatpush1.msra.mxu0 %v1715
        %v1717 = vand.u32 %v1139, 4294901760
        %v1718 = vsub.f32 %v1139, %v1717
        %v1719 = vand.u32 %v1718, 4294901760
        %1720 = vmatprep.subr.mxu0 %v1719
        %v1721 = vand.u32 %v1138, 4294901760
        %v1722 = vsub.f32 %v1138, %v1721
        %v1723 = vand.u32 %v1722, 4294901760
        %1724 = vmatpush1.msra.mxu0 %v1723
        %v1725 = vand.u32 %v1135, 4294901760
        %v1726 = vsub.f32 %v1135, %v1725
        %v1727 = vand.u32 %v1726, 4294901760
        %1728 = vmatprep.subr.mxu0 %v1727
        %v1729 = vand.u32 %v1134, 4294901760
        %v1730 = vsub.f32 %v1134, %v1729
        %v1731 = vand.u32 %v1730, 4294901760
        %1732 = vmatpush1.msra.mxu0 %v1731
        %v1733 = vand.u32 %v1131, 4294901760
        %v1734 = vsub.f32 %v1131, %v1733
        %v1735 = vand.u32 %v1734, 4294901760
        %1736 = vmatprep.subr.mxu0 %v1735
        %v1737 = vand.u32 %v1130, 4294901760
        %v1738 = vsub.f32 %v1130, %v1737
        %v1739 = vand.u32 %v1738, 4294901760
        %1740 = vmatpush1.msra.mxu0 %v1739
        %1741 = vmatprep.subr.mxu0 0.0
        %1742 = vmatpush2.msra.mxu0 0.0
        %1743 = vmatprep.subr.mxu0 0.0
        %1744 = vmatpush2.msra.mxu0 0.0
        %1745 = vmatprep.subr.mxu0 0.0
        %1746 = vmatpush2.msra.mxu0 0.0
        %1747 = vmatprep.subr.mxu0 0.0
        %1748 = vmatpush2.msra.mxu0 0.0
        %1749 = vmatprep.subr.mxu0 0.0
        %1750 = vmatpush2.msra.mxu0 0.0
        %1751 = vmatprep.subr.mxu0 0.0
        %1752 = vmatpush2.msra.mxu0 0.0
        %1753 = vmatprep.subr.mxu0 0.0
        %1754 = vmatpush2.msra.mxu0 0.0
        %1755 = vmatprep.subr.mxu0 0.0
        %1756 = vmatpush2.msra.mxu0 0.0
        %1757 = vmatprep.subr.mxu0 0.0
        %1758 = vmatpush2.msra.mxu0 0.0
        %1759 = vmatprep.subr.mxu0 0.0
        %1760 = vmatpush2.msra.mxu0 0.0
        %1761 = vmatprep.subr.mxu0 0.0
        %1762 = vmatpush2.msra.mxu0 0.0
        %1763 = vmatprep.subr.mxu0 0.0
        %1764 = vmatpush2.msra.mxu0 0.0
        %1765 = vmatprep.subr.mxu0 0.0
        %1766 = vmatpush2.msra.mxu0 0.0
        %1767 = vmatprep.subr.mxu0 0.0
        %1768 = vmatpush2.msra.mxu0 0.0
        %1769 = vmatprep.subr.mxu0 0.0
        %1770 = vmatpush2.msra.mxu0 0.0
        %1771 = vmatprep.subr.mxu0 0.0
        %1772 = vmatpush2.msra.mxu0 0.0
        %1773 = vmatprep.mubr.f32.mxu0 0.0
        %v1774 = vand.u32 %v1172, 4294901760
        %1775 = vmatmul.mubr.f32.gmra.mxu0 %v1774
        %v1776 = vpop.f32.mrf.mxu0
        %v1777 = vadd.f32 %v1645, %v1776
        %v1778 = vpop.f32.mrf.mxu0
        %v1779 = vadd.f32 %v1647, %v1778
        %1780 = vdwg.mxu0
        %1781 = vmatprep.subr.mxu0 0.0
        %1782 = vmatpush1.msra.mxu0 0.0
        %1783 = vmatprep.subr.mxu0 0.0
        %1784 = vmatpush1.msra.mxu0 0.0
        %1785 = vmatprep.subr.mxu0 0.0
        %1786 = vmatpush1.msra.mxu0 0.0
        %1787 = vmatprep.subr.mxu0 0.0
        %1788 = vmatpush1.msra.mxu0 0.0
        %1789 = vmatprep.subr.mxu0 0.0
        %1790 = vmatpush1.msra.mxu0 0.0
        %1791 = vmatprep.subr.mxu0 0.0
        %1792 = vmatpush1.msra.mxu0 0.0
        %v1793 = vand.u32 %v1167, 4294901760
        %1794 = vmatprep.subr.mxu0 %v1793
        %v1795 = vand.u32 %v1166, 4294901760
        %1796 = vmatpush1.msra.mxu0 %v1795
        %v1797 = vand.u32 %v1163, 4294901760
        %1798 = vmatprep.subr.mxu0 %v1797
        %v1799 = vand.u32 %v1162, 4294901760
        %1800 = vmatpush1.msra.mxu0 %v1799
        %v1801 = vand.u32 %v1159, 4294901760
        %1802 = vmatprep.subr.mxu0 %v1801
        %v1803 = vand.u32 %v1158, 4294901760
        %1804 = vmatpush1.msra.mxu0 %v1803
        %v1805 = vand.u32 %v1155, 4294901760
        %1806 = vmatprep.subr.mxu0 %v1805
        %v1807 = vand.u32 %v1154, 4294901760
        %1808 = vmatpush1.msra.mxu0 %v1807
        %v1809 = vand.u32 %v1151, 4294901760
        %1810 = vmatprep.subr.mxu0 %v1809
        %v1811 = vand.u32 %v1150, 4294901760
        %1812 = vmatpush1.msra.mxu0 %v1811
        %v1813 = vand.u32 %v1147, 4294901760
        %1814 = vmatprep.subr.mxu0 %v1813
        %v1815 = vand.u32 %v1146, 4294901760
        %1816 = vmatpush1.msra.mxu0 %v1815
        %v1817 = vand.u32 %v1143, 4294901760
        %1818 = vmatprep.subr.mxu0 %v1817
        %v1819 = vand.u32 %v1142, 4294901760
        %1820 = vmatpush1.msra.mxu0 %v1819
        %v1821 = vand.u32 %v1139, 4294901760
        %1822 = vmatprep.subr.mxu0 %v1821
        %v1823 = vand.u32 %v1138, 4294901760
        %1824 = vmatpush1.msra.mxu0 %v1823
        %v1825 = vand.u32 %v1135, 4294901760
        %1826 = vmatprep.subr.mxu0 %v1825
        %v1827 = vand.u32 %v1134, 4294901760
        %1828 = vmatpush1.msra.mxu0 %v1827
        %v1829 = vand.u32 %v1131, 4294901760
        %1830 = vmatprep.subr.mxu0 %v1829
        %v1831 = vand.u32 %v1130, 4294901760
        %1832 = vmatpush1.msra.mxu0 %v1831
        %1833 = vmatprep.subr.mxu0 0.0
        %1834 = vmatpush2.msra.mxu0 0.0
        %1835 = vmatprep.subr.mxu0 0.0
        %1836 = vmatpush2.msra.mxu0 0.0
        %1837 = vmatprep.subr.mxu0 0.0
        %1838 = vmatpush2.msra.mxu0 0.0
        %1839 = vmatprep.subr.mxu0 0.0
        %1840 = vmatpush2.msra.mxu0 0.0
        %1841 = vmatprep.subr.mxu0 0.0
        %1842 = vmatpush2.msra.mxu0 0.0
        %1843 = vmatprep.subr.mxu0 0.0
        %1844 = vmatpush2.msra.mxu0 0.0
        %1845 = vmatprep.subr.mxu0 0.0
        %1846 = vmatpush2.msra.mxu0 0.0
        %1847 = vmatprep.subr.mxu0 0.0
        %1848 = vmatpush2.msra.mxu0 0.0
        %1849 = vmatprep.subr.mxu0 0.0
        %1850 = vmatpush2.msra.mxu0 0.0
        %1851 = vmatprep.subr.mxu0 0.0
        %1852 = vmatpush2.msra.mxu0 0.0
        %1853 = vmatprep.subr.mxu0 0.0
        %1854 = vmatpush2.msra.mxu0 0.0
        %1855 = vmatprep.subr.mxu0 0.0
        %1856 = vmatpush2.msra.mxu0 0.0
        %1857 = vmatprep.subr.mxu0 0.0
        %1858 = vmatpush2.msra.mxu0 0.0
        %1859 = vmatprep.subr.mxu0 0.0
        %1860 = vmatpush2.msra.mxu0 0.0
        %1861 = vmatprep.subr.mxu0 0.0
        %1862 = vmatpush2.msra.mxu0 0.0
        %1863 = vmatprep.subr.mxu0 0.0
        %1864 = vmatpush2.msra.mxu0 0.0
        %1865 = vmatprep.mubr.f32.mxu0 0.0
        %v1866 = vand.u32 %v1172, 4294901760
        %1867 = vmatmul.mubr.f32.gmra.mxu0 %v1866
        %v1868 = vpop.f32.mrf.mxu0
        %v1869 = vadd.f32 %v1777, %v1868
        %v1870 = vpop.f32.mrf.mxu0
        %v1871 = vadd.f32 %v1779, %v1870
        %1872 = vdwg.mxu0
        %1873 = vmatprep.subr.mxu0 0.0
        %1874 = vmatpush1.msra.mxu0 0.0
        %1875 = vmatprep.subr.mxu0 0.0
        %1876 = vmatpush1.msra.mxu0 0.0
        %1877 = vmatprep.subr.mxu0 0.0
        %1878 = vmatpush1.msra.mxu0 0.0
        %1879 = vmatprep.subr.mxu0 0.0
        %1880 = vmatpush1.msra.mxu0 0.0
        %1881 = vmatprep.subr.mxu0 0.0
        %1882 = vmatpush1.msra.mxu0 0.0
        %1883 = vmatprep.subr.mxu0 0.0
        %1884 = vmatpush1.msra.mxu0 0.0
        %v1885 = vand.u32 %v1169, 4294901760
        %1886 = vmatprep.subr.mxu0 %v1885
        %v1887 = vand.u32 %v1168, 4294901760
        %1888 = vmatpush1.msra.mxu0 %v1887
        %v1889 = vand.u32 %v1165, 4294901760
        %1890 = vmatprep.subr.mxu0 %v1889
        %v1891 = vand.u32 %v1164, 4294901760
        %1892 = vmatpush1.msra.mxu0 %v1891
        %v1893 = vand.u32 %v1161, 4294901760
        %1894 = vmatprep.subr.mxu0 %v1893
        %v1895 = vand.u32 %v1160, 4294901760
        %1896 = vmatpush1.msra.mxu0 %v1895
        %v1897 = vand.u32 %v1157, 4294901760
        %1898 = vmatprep.subr.mxu0 %v1897
        %v1899 = vand.u32 %v1156, 4294901760
        %1900 = vmatpush1.msra.mxu0 %v1899
        %v1901 = vand.u32 %v1153, 4294901760
        %1902 = vmatprep.subr.mxu0 %v1901
        %v1903 = vand.u32 %v1152, 4294901760
        %1904 = vmatpush1.msra.mxu0 %v1903
        %v1905 = vand.u32 %v1149, 4294901760
        %1906 = vmatprep.subr.mxu0 %v1905
        %v1907 = vand.u32 %v1148, 4294901760
        %1908 = vmatpush1.msra.mxu0 %v1907
        %v1909 = vand.u32 %v1145, 4294901760
        %1910 = vmatprep.subr.mxu0 %v1909
        %v1911 = vand.u32 %v1144, 4294901760
        %1912 = vmatpush1.msra.mxu0 %v1911
        %v1913 = vand.u32 %v1141, 4294901760
        %1914 = vmatprep.subr.mxu0 %v1913
        %v1915 = vand.u32 %v1140, 4294901760
        %1916 = vmatpush1.msra.mxu0 %v1915
        %v1917 = vand.u32 %v1137, 4294901760
        %1918 = vmatprep.subr.mxu0 %v1917
        %v1919 = vand.u32 %v1136, 4294901760
        %1920 = vmatpush1.msra.mxu0 %v1919
        %v1921 = vand.u32 %v1133, 4294901760
        %1922 = vmatprep.subr.mxu0 %v1921
        %v1923 = vand.u32 %v1132, 4294901760
        %1924 = vmatpush1.msra.mxu0 %v1923
        %1925 = vmatprep.subr.mxu0 0.0
        %1926 = vmatpush2.msra.mxu0 0.0
        %1927 = vmatprep.subr.mxu0 0.0
        %1928 = vmatpush2.msra.mxu0 0.0
        %1929 = vmatprep.subr.mxu0 0.0
        %1930 = vmatpush2.msra.mxu0 0.0
        %1931 = vmatprep.subr.mxu0 0.0
        %1932 = vmatpush2.msra.mxu0 0.0
        %1933 = vmatprep.subr.mxu0 0.0
        %1934 = vmatpush2.msra.mxu0 0.0
        %1935 = vmatprep.subr.mxu0 0.0
        %1936 = vmatpush2.msra.mxu0 0.0
        %1937 = vmatprep.subr.mxu0 0.0
        %1938 = vmatpush2.msra.mxu0 0.0
        %1939 = vmatprep.subr.mxu0 0.0
        %1940 = vmatpush2.msra.mxu0 0.0
        %1941 = vmatprep.subr.mxu0 0.0
        %1942 = vmatpush2.msra.mxu0 0.0
        %1943 = vmatprep.subr.mxu0 0.0
        %1944 = vmatpush2.msra.mxu0 0.0
        %1945 = vmatprep.subr.mxu0 0.0
        %1946 = vmatpush2.msra.mxu0 0.0
        %1947 = vmatprep.subr.mxu0 0.0
        %1948 = vmatpush2.msra.mxu0 0.0
        %1949 = vmatprep.subr.mxu0 0.0
        %1950 = vmatpush2.msra.mxu0 0.0
        %1951 = vmatprep.subr.mxu0 0.0
        %1952 = vmatpush2.msra.mxu0 0.0
        %1953 = vmatprep.subr.mxu0 0.0
        %1954 = vmatpush2.msra.mxu0 0.0
        %1955 = vmatprep.subr.mxu0 0.0
        %1956 = vmatpush2.msra.mxu0 0.0
        %1957 = vmatprep.mubr.f32.mxu0 0.0
        %v1958 = vand.u32 %v1172, 4294901760
        %v1959 = vsub.f32 %v1172, %v1958
        %v1960 = vand.u32 %v1959, 4294901760
        %v1961 = vsub.f32 %v1959, %v1960
        %v1962 = vand.u32 %v1961, 4294901760
        %1963 = vmatmul.mubr.f32.gmra.mxu0 %v1962
        %v1964 = vpop.f32.mrf.mxu0
        %v1965 = vadd.f32 0.0, %v1964
        %v1966 = vpop.f32.mrf.mxu0
        %v1967 = vadd.f32 0.0, %v1966
        %1968 = vdwg.mxu0
        %1969 = vmatprep.subr.mxu0 0.0
        %1970 = vmatpush1.msra.mxu0 0.0
        %1971 = vmatprep.subr.mxu0 0.0
        %1972 = vmatpush1.msra.mxu0 0.0
        %1973 = vmatprep.subr.mxu0 0.0
        %1974 = vmatpush1.msra.mxu0 0.0
        %1975 = vmatprep.subr.mxu0 0.0
        %1976 = vmatpush1.msra.mxu0 0.0
        %1977 = vmatprep.subr.mxu0 0.0
        %1978 = vmatpush1.msra.mxu0 0.0
        %1979 = vmatprep.subr.mxu0 0.0
        %1980 = vmatpush1.msra.mxu0 0.0
        %v1981 = vand.u32 %v1169, 4294901760
        %v1982 = vsub.f32 %v1169, %v1981
        %v1983 = vand.u32 %v1982, 4294901760
        %v1984 = vsub.f32 %v1982, %v1983
        %v1985 = vand.u32 %v1984, 4294901760
        %1986 = vmatprep.subr.mxu0 %v1985
        %v1987 = vand.u32 %v1168, 4294901760
        %v1988 = vsub.f32 %v1168, %v1987
        %v1989 = vand.u32 %v1988, 4294901760
        %v1990 = vsub.f32 %v1988, %v1989
        %v1991 = vand.u32 %v1990, 4294901760
        %1992 = vmatpush1.msra.mxu0 %v1991
        %v1993 = vand.u32 %v1165, 4294901760
        %v1994 = vsub.f32 %v1165, %v1993
        %v1995 = vand.u32 %v1994, 4294901760
        %v1996 = vsub.f32 %v1994, %v1995
        %v1997 = vand.u32 %v1996, 4294901760
        %1998 = vmatprep.subr.mxu0 %v1997
        %v1999 = vand.u32 %v1164, 4294901760
        %v2000 = vsub.f32 %v1164, %v1999
        %v2001 = vand.u32 %v2000, 4294901760
        %v2002 = vsub.f32 %v2000, %v2001
        %v2003 = vand.u32 %v2002, 4294901760
        %2004 = vmatpush1.msra.mxu0 %v2003
        %v2005 = vand.u32 %v1161, 4294901760
        %v2006 = vsub.f32 %v1161, %v2005
        %v2007 = vand.u32 %v2006, 4294901760
        %v2008 = vsub.f32 %v2006, %v2007
        %v2009 = vand.u32 %v2008, 4294901760
        %2010 = vmatprep.subr.mxu0 %v2009
        %v2011 = vand.u32 %v1160, 4294901760
        %v2012 = vsub.f32 %v1160, %v2011
        %v2013 = vand.u32 %v2012, 4294901760
        %v2014 = vsub.f32 %v2012, %v2013
        %v2015 = vand.u32 %v2014, 4294901760
        %2016 = vmatpush1.msra.mxu0 %v2015
        %v2017 = vand.u32 %v1157, 4294901760
        %v2018 = vsub.f32 %v1157, %v2017
        %v2019 = vand.u32 %v2018, 4294901760
        %v2020 = vsub.f32 %v2018, %v2019
        %v2021 = vand.u32 %v2020, 4294901760
        %2022 = vmatprep.subr.mxu0 %v2021
        %v2023 = vand.u32 %v1156, 4294901760
        %v2024 = vsub.f32 %v1156, %v2023
        %v2025 = vand.u32 %v2024, 4294901760
        %v2026 = vsub.f32 %v2024, %v2025
        %v2027 = vand.u32 %v2026, 4294901760
        %2028 = vmatpush1.msra.mxu0 %v2027
        %v2029 = vand.u32 %v1153, 4294901760
        %v2030 = vsub.f32 %v1153, %v2029
        %v2031 = vand.u32 %v2030, 4294901760
        %v2032 = vsub.f32 %v2030, %v2031
        %v2033 = vand.u32 %v2032, 4294901760
        %2034 = vmatprep.subr.mxu0 %v2033
        %v2035 = vand.u32 %v1152, 4294901760
        %v2036 = vsub.f32 %v1152, %v2035
        %v2037 = vand.u32 %v2036, 4294901760
        %v2038 = vsub.f32 %v2036, %v2037
        %v2039 = vand.u32 %v2038, 4294901760
        %2040 = vmatpush1.msra.mxu0 %v2039
        %v2041 = vand.u32 %v1149, 4294901760
        %v2042 = vsub.f32 %v1149, %v2041
        %v2043 = vand.u32 %v2042, 4294901760
        %v2044 = vsub.f32 %v2042, %v2043
        %v2045 = vand.u32 %v2044, 4294901760
        %2046 = vmatprep.subr.mxu0 %v2045
        %v2047 = vand.u32 %v1148, 4294901760
        %v2048 = vsub.f32 %v1148, %v2047
        %v2049 = vand.u32 %v2048, 4294901760
        %v2050 = vsub.f32 %v2048, %v2049
        %v2051 = vand.u32 %v2050, 4294901760
        %2052 = vmatpush1.msra.mxu0 %v2051
        %v2053 = vand.u32 %v1145, 4294901760
        %v2054 = vsub.f32 %v1145, %v2053
        %v2055 = vand.u32 %v2054, 4294901760
        %v2056 = vsub.f32 %v2054, %v2055
        %v2057 = vand.u32 %v2056, 4294901760
        %2058 = vmatprep.subr.mxu0 %v2057
        %v2059 = vand.u32 %v1144, 4294901760
        %v2060 = vsub.f32 %v1144, %v2059
        %v2061 = vand.u32 %v2060, 4294901760
        %v2062 = vsub.f32 %v2060, %v2061
        %v2063 = vand.u32 %v2062, 4294901760
        %2064 = vmatpush1.msra.mxu0 %v2063
        %v2065 = vand.u32 %v1141, 4294901760
        %v2066 = vsub.f32 %v1141, %v2065
        %v2067 = vand.u32 %v2066, 4294901760
        %v2068 = vsub.f32 %v2066, %v2067
        %v2069 = vand.u32 %v2068, 4294901760
        %2070 = vmatprep.subr.mxu0 %v2069
        %v2071 = vand.u32 %v1140, 4294901760
        %v2072 = vsub.f32 %v1140, %v2071
        %v2073 = vand.u32 %v2072, 4294901760
        %v2074 = vsub.f32 %v2072, %v2073
        %v2075 = vand.u32 %v2074, 4294901760
        %2076 = vmatpush1.msra.mxu0 %v2075
        %v2077 = vand.u32 %v1137, 4294901760
        %v2078 = vsub.f32 %v1137, %v2077
        %v2079 = vand.u32 %v2078, 4294901760
        %v2080 = vsub.f32 %v2078, %v2079
        %v2081 = vand.u32 %v2080, 4294901760
        %2082 = vmatprep.subr.mxu0 %v2081
        %v2083 = vand.u32 %v1136, 4294901760
        %v2084 = vsub.f32 %v1136, %v2083
        %v2085 = vand.u32 %v2084, 4294901760
        %v2086 = vsub.f32 %v2084, %v2085
        %v2087 = vand.u32 %v2086, 4294901760
        %2088 = vmatpush1.msra.mxu0 %v2087
        %v2089 = vand.u32 %v1133, 4294901760
        %v2090 = vsub.f32 %v1133, %v2089
        %v2091 = vand.u32 %v2090, 4294901760
        %v2092 = vsub.f32 %v2090, %v2091
        %v2093 = vand.u32 %v2092, 4294901760
        %2094 = vmatprep.subr.mxu0 %v2093
        %v2095 = vand.u32 %v1132, 4294901760
        %v2096 = vsub.f32 %v1132, %v2095
        %v2097 = vand.u32 %v2096, 4294901760
        %v2098 = vsub.f32 %v2096, %v2097
        %v2099 = vand.u32 %v2098, 4294901760
        %2100 = vmatpush1.msra.mxu0 %v2099
        %2101 = vmatprep.subr.mxu0 0.0
        %2102 = vmatpush2.msra.mxu0 0.0
        %2103 = vmatprep.subr.mxu0 0.0
        %2104 = vmatpush2.msra.mxu0 0.0
        %2105 = vmatprep.subr.mxu0 0.0
        %2106 = vmatpush2.msra.mxu0 0.0
        %2107 = vmatprep.subr.mxu0 0.0
        %2108 = vmatpush2.msra.mxu0 0.0
        %2109 = vmatprep.subr.mxu0 0.0
        %2110 = vmatpush2.msra.mxu0 0.0
        %2111 = vmatprep.subr.mxu0 0.0
        %2112 = vmatpush2.msra.mxu0 0.0
        %2113 = vmatprep.subr.mxu0 0.0
        %2114 = vmatpush2.msra.mxu0 0.0
        %2115 = vmatprep.subr.mxu0 0.0
        %2116 = vmatpush2.msra.mxu0 0.0
        %2117 = vmatprep.subr.mxu0 0.0
        %2118 = vmatpush2.msra.mxu0 0.0
        %2119 = vmatprep.subr.mxu0 0.0
        %2120 = vmatpush2.msra.mxu0 0.0
        %2121 = vmatprep.subr.mxu0 0.0
        %2122 = vmatpush2.msra.mxu0 0.0
        %2123 = vmatprep.subr.mxu0 0.0
        %2124 = vmatpush2.msra.mxu0 0.0
        %2125 = vmatprep.subr.mxu0 0.0
        %2126 = vmatpush2.msra.mxu0 0.0
        %2127 = vmatprep.subr.mxu0 0.0
        %2128 = vmatpush2.msra.mxu0 0.0
        %2129 = vmatprep.subr.mxu0 0.0
        %2130 = vmatpush2.msra.mxu0 0.0
        %2131 = vmatprep.subr.mxu0 0.0
        %2132 = vmatpush2.msra.mxu0 0.0
        %2133 = vmatprep.mubr.f32.mxu0 0.0
        %v2134 = vand.u32 %v1172, 4294901760
        %2135 = vmatmul.mubr.f32.gmra.mxu0 %v2134
        %v2136 = vpop.f32.mrf.mxu0
        %v2137 = vadd.f32 %v1965, %v2136
        %v2138 = vpop.f32.mrf.mxu0
        %v2139 = vadd.f32 %v1967, %v2138
        %2140 = vdwg.mxu0
        %2141 = vmatprep.subr.mxu0 0.0
        %2142 = vmatpush1.msra.mxu0 0.0
        %2143 = vmatprep.subr.mxu0 0.0
        %2144 = vmatpush1.msra.mxu0 0.0
        %2145 = vmatprep.subr.mxu0 0.0
        %2146 = vmatpush1.msra.mxu0 0.0
        %2147 = vmatprep.subr.mxu0 0.0
        %2148 = vmatpush1.msra.mxu0 0.0
        %2149 = vmatprep.subr.mxu0 0.0
        %2150 = vmatpush1.msra.mxu0 0.0
        %2151 = vmatprep.subr.mxu0 0.0
        %2152 = vmatpush1.msra.mxu0 0.0
        %v2153 = vand.u32 %v1169, 4294901760
        %v2154 = vsub.f32 %v1169, %v2153
        %2155 = vmatprep.subr.mxu0 %v2154
        %v2156 = vand.u32 %v1168, 4294901760
        %v2157 = vsub.f32 %v1168, %v2156
        %2158 = vmatpush1.msra.mxu0 %v2157
        %v2159 = vand.u32 %v1165, 4294901760
        %v2160 = vsub.f32 %v1165, %v2159
        %2161 = vmatprep.subr.mxu0 %v2160
        %v2162 = vand.u32 %v1164, 4294901760
        %v2163 = vsub.f32 %v1164, %v2162
        %2164 = vmatpush1.msra.mxu0 %v2163
        %v2165 = vand.u32 %v1161, 4294901760
        %v2166 = vsub.f32 %v1161, %v2165
        %2167 = vmatprep.subr.mxu0 %v2166
        %v2168 = vand.u32 %v1160, 4294901760
        %v2169 = vsub.f32 %v1160, %v2168
        %2170 = vmatpush1.msra.mxu0 %v2169
        %v2171 = vand.u32 %v1157, 4294901760
        %v2172 = vsub.f32 %v1157, %v2171
        %2173 = vmatprep.subr.mxu0 %v2172
        %v2174 = vand.u32 %v1156, 4294901760
        %v2175 = vsub.f32 %v1156, %v2174
        %2176 = vmatpush1.msra.mxu0 %v2175
        %v2177 = vand.u32 %v1153, 4294901760
        %v2178 = vsub.f32 %v1153, %v2177
        %2179 = vmatprep.subr.mxu0 %v2178
        %v2180 = vand.u32 %v1152, 4294901760
        %v2181 = vsub.f32 %v1152, %v2180
        %2182 = vmatpush1.msra.mxu0 %v2181
        %v2183 = vand.u32 %v1149, 4294901760
        %v2184 = vsub.f32 %v1149, %v2183
        %2185 = vmatprep.subr.mxu0 %v2184
        %v2186 = vand.u32 %v1148, 4294901760
        %v2187 = vsub.f32 %v1148, %v2186
        %2188 = vmatpush1.msra.mxu0 %v2187
        %v2189 = vand.u32 %v1145, 4294901760
        %v2190 = vsub.f32 %v1145, %v2189
        %2191 = vmatprep.subr.mxu0 %v2190
        %v2192 = vand.u32 %v1144, 4294901760
        %v2193 = vsub.f32 %v1144, %v2192
        %2194 = vmatpush1.msra.mxu0 %v2193
        %v2195 = vand.u32 %v1141, 4294901760
        %v2196 = vsub.f32 %v1141, %v2195
        %2197 = vmatprep.subr.mxu0 %v2196
        %v2198 = vand.u32 %v1140, 4294901760
        %v2199 = vsub.f32 %v1140, %v2198
        %2200 = vmatpush1.msra.mxu0 %v2199
        %v2201 = vand.u32 %v1137, 4294901760
        %v2202 = vsub.f32 %v1137, %v2201
        %2203 = vmatprep.subr.mxu0 %v2202
        %v2204 = vand.u32 %v1136, 4294901760
        %v2205 = vsub.f32 %v1136, %v2204
        %2206 = vmatpush1.msra.mxu0 %v2205
        %v2207 = vand.u32 %v1133, 4294901760
        %v2208 = vsub.f32 %v1133, %v2207
        %2209 = vmatprep.subr.mxu0 %v2208
        %v2210 = vand.u32 %v1132, 4294901760
        %v2211 = vsub.f32 %v1132, %v2210
        %2212 = vmatpush1.msra.mxu0 %v2211
        %2213 = vmatprep.subr.mxu0 0.0
        %2214 = vmatpush2.msra.mxu0 0.0
        %2215 = vmatprep.subr.mxu0 0.0
        %2216 = vmatpush2.msra.mxu0 0.0
        %2217 = vmatprep.subr.mxu0 0.0
        %2218 = vmatpush2.msra.mxu0 0.0
        %2219 = vmatprep.subr.mxu0 0.0
        %2220 = vmatpush2.msra.mxu0 0.0
        %2221 = vmatprep.subr.mxu0 0.0
        %2222 = vmatpush2.msra.mxu0 0.0
        %2223 = vmatprep.subr.mxu0 0.0
        %2224 = vmatpush2.msra.mxu0 0.0
        %2225 = vmatprep.subr.mxu0 0.0
        %2226 = vmatpush2.msra.mxu0 0.0
        %2227 = vmatprep.subr.mxu0 0.0
        %2228 = vmatpush2.msra.mxu0 0.0
        %2229 = vmatprep.subr.mxu0 0.0
        %2230 = vmatpush2.msra.mxu0 0.0
        %2231 = vmatprep.subr.mxu0 0.0
        %2232 = vmatpush2.msra.mxu0 0.0
        %2233 = vmatprep.subr.mxu0 0.0
        %2234 = vmatpush2.msra.mxu0 0.0
        %2235 = vmatprep.subr.mxu0 0.0
        %2236 = vmatpush2.msra.mxu0 0.0
        %2237 = vmatprep.subr.mxu0 0.0
        %2238 = vmatpush2.msra.mxu0 0.0
        %2239 = vmatprep.subr.mxu0 0.0
        %2240 = vmatpush2.msra.mxu0 0.0
        %2241 = vmatprep.subr.mxu0 0.0
        %2242 = vmatpush2.msra.mxu0 0.0
        %2243 = vmatprep.subr.mxu0 0.0
        %2244 = vmatpush2.msra.mxu0 0.0
        %2245 = vmatprep.mubr.f32.mxu0 0.0
        %v2246 = vand.u32 %v1172, 4294901760
        %v2247 = vsub.f32 %v1172, %v2246
        %2248 = vmatmul.mubr.f32.gmra.mxu0 %v2247
        %v2249 = vpop.f32.mrf.mxu0
        %v2250 = vadd.f32 %v2137, %v2249
        %v2251 = vpop.f32.mrf.mxu0
        %v2252 = vadd.f32 %v2139, %v2251
        %2253 = vdwg.mxu0
        %2254 = vmatprep.subr.mxu0 0.0
        %2255 = vmatpush1.msra.mxu0 0.0
        %2256 = vmatprep.subr.mxu0 0.0
        %2257 = vmatpush1.msra.mxu0 0.0
        %2258 = vmatprep.subr.mxu0 0.0
        %2259 = vmatpush1.msra.mxu0 0.0
        %2260 = vmatprep.subr.mxu0 0.0
        %2261 = vmatpush1.msra.mxu0 0.0
        %2262 = vmatprep.subr.mxu0 0.0
        %2263 = vmatpush1.msra.mxu0 0.0
        %2264 = vmatprep.subr.mxu0 0.0
        %2265 = vmatpush1.msra.mxu0 0.0
        %v2266 = vand.u32 %v1169, 4294901760
        %2267 = vmatprep.subr.mxu0 %v2266
        %v2268 = vand.u32 %v1168, 4294901760
        %2269 = vmatpush1.msra.mxu0 %v2268
        %v2270 = vand.u32 %v1165, 4294901760
        %2271 = vmatprep.subr.mxu0 %v2270
        %v2272 = vand.u32 %v1164, 4294901760
        %2273 = vmatpush1.msra.mxu0 %v2272
        %v2274 = vand.u32 %v1161, 4294901760
        %2275 = vmatprep.subr.mxu0 %v2274
        %v2276 = vand.u32 %v1160, 4294901760
        %2277 = vmatpush1.msra.mxu0 %v2276
        %v2278 = vand.u32 %v1157, 4294901760
        %2279 = vmatprep.subr.mxu0 %v2278
        %v2280 = vand.u32 %v1156, 4294901760
        %2281 = vmatpush1.msra.mxu0 %v2280
        %v2282 = vand.u32 %v1153, 4294901760
        %2283 = vmatprep.subr.mxu0 %v2282
        %v2284 = vand.u32 %v1152, 4294901760
        %2285 = vmatpush1.msra.mxu0 %v2284
        %v2286 = vand.u32 %v1149, 4294901760
        %2287 = vmatprep.subr.mxu0 %v2286
        %v2288 = vand.u32 %v1148, 4294901760
        %2289 = vmatpush1.msra.mxu0 %v2288
        %v2290 = vand.u32 %v1145, 4294901760
        %2291 = vmatprep.subr.mxu0 %v2290
        %v2292 = vand.u32 %v1144, 4294901760
        %2293 = vmatpush1.msra.mxu0 %v2292
        %v2294 = vand.u32 %v1141, 4294901760
        %2295 = vmatprep.subr.mxu0 %v2294
        %v2296 = vand.u32 %v1140, 4294901760
        %2297 = vmatpush1.msra.mxu0 %v2296
        %v2298 = vand.u32 %v1137, 4294901760
        %2299 = vmatprep.subr.mxu0 %v2298
        %v2300 = vand.u32 %v1136, 4294901760
        %2301 = vmatpush1.msra.mxu0 %v2300
        %v2302 = vand.u32 %v1133, 4294901760
        %2303 = vmatprep.subr.mxu0 %v2302
        %v2304 = vand.u32 %v1132, 4294901760
        %2305 = vmatpush1.msra.mxu0 %v2304
        %2306 = vmatprep.subr.mxu0 0.0
        %2307 = vmatpush2.msra.mxu0 0.0
        %2308 = vmatprep.subr.mxu0 0.0
        %2309 = vmatpush2.msra.mxu0 0.0
        %2310 = vmatprep.subr.mxu0 0.0
        %2311 = vmatpush2.msra.mxu0 0.0
        %2312 = vmatprep.subr.mxu0 0.0
        %2313 = vmatpush2.msra.mxu0 0.0
        %2314 = vmatprep.subr.mxu0 0.0
        %2315 = vmatpush2.msra.mxu0 0.0
        %2316 = vmatprep.subr.mxu0 0.0
        %2317 = vmatpush2.msra.mxu0 0.0
        %2318 = vmatprep.subr.mxu0 0.0
        %2319 = vmatpush2.msra.mxu0 0.0
        %2320 = vmatprep.subr.mxu0 0.0
        %2321 = vmatpush2.msra.mxu0 0.0
        %2322 = vmatprep.subr.mxu0 0.0
        %2323 = vmatpush2.msra.mxu0 0.0
        %2324 = vmatprep.subr.mxu0 0.0
        %2325 = vmatpush2.msra.mxu0 0.0
        %2326 = vmatprep.subr.mxu0 0.0
        %2327 = vmatpush2.msra.mxu0 0.0
        %2328 = vmatprep.subr.mxu0 0.0
        %2329 = vmatpush2.msra.mxu0 0.0
        %2330 = vmatprep.subr.mxu0 0.0
        %2331 = vmatpush2.msra.mxu0 0.0
        %2332 = vmatprep.subr.mxu0 0.0
        %2333 = vmatpush2.msra.mxu0 0.0
        %2334 = vmatprep.subr.mxu0 0.0
        %2335 = vmatpush2.msra.mxu0 0.0
        %2336 = vmatprep.subr.mxu0 0.0
        %2337 = vmatpush2.msra.mxu0 0.0
        %2338 = vmatprep.mubr.f32.mxu0 0.0
        %v2339 = vand.u32 %v1172, 4294901760
        %v2340 = vsub.f32 %v1172, %v2339
        %v2341 = vand.u32 %v2340, 4294901760
        %2342 = vmatmul.mubr.f32.gmra.mxu0 %v2341
        %v2343 = vpop.f32.mrf.mxu0
        %v2344 = vadd.f32 %v2250, %v2343
        %v2345 = vpop.f32.mrf.mxu0
        %v2346 = vadd.f32 %v2252, %v2345
        %2347 = vdwg.mxu0
        %2348 = vmatprep.subr.mxu0 0.0
        %2349 = vmatpush1.msra.mxu0 0.0
        %2350 = vmatprep.subr.mxu0 0.0
        %2351 = vmatpush1.msra.mxu0 0.0
        %2352 = vmatprep.subr.mxu0 0.0
        %2353 = vmatpush1.msra.mxu0 0.0
        %2354 = vmatprep.subr.mxu0 0.0
        %2355 = vmatpush1.msra.mxu0 0.0
        %2356 = vmatprep.subr.mxu0 0.0
        %2357 = vmatpush1.msra.mxu0 0.0
        %2358 = vmatprep.subr.mxu0 0.0
        %2359 = vmatpush1.msra.mxu0 0.0
        %v2360 = vand.u32 %v1169, 4294901760
        %v2361 = vsub.f32 %v1169, %v2360
        %v2362 = vand.u32 %v2361, 4294901760
        %2363 = vmatprep.subr.mxu0 %v2362
        %v2364 = vand.u32 %v1168, 4294901760
        %v2365 = vsub.f32 %v1168, %v2364
        %v2366 = vand.u32 %v2365, 4294901760
        %2367 = vmatpush1.msra.mxu0 %v2366
        %v2368 = vand.u32 %v1165, 4294901760
        %v2369 = vsub.f32 %v1165, %v2368
        %v2370 = vand.u32 %v2369, 4294901760
        %2371 = vmatprep.subr.mxu0 %v2370
        %v2372 = vand.u32 %v1164, 4294901760
        %v2373 = vsub.f32 %v1164, %v2372
        %v2374 = vand.u32 %v2373, 4294901760
        %2375 = vmatpush1.msra.mxu0 %v2374
        %v2376 = vand.u32 %v1161, 4294901760
        %v2377 = vsub.f32 %v1161, %v2376
        %v2378 = vand.u32 %v2377, 4294901760
        %2379 = vmatprep.subr.mxu0 %v2378
        %v2380 = vand.u32 %v1160, 4294901760
        %v2381 = vsub.f32 %v1160, %v2380
        %v2382 = vand.u32 %v2381, 4294901760
        %2383 = vmatpush1.msra.mxu0 %v2382
        %v2384 = vand.u32 %v1157, 4294901760
        %v2385 = vsub.f32 %v1157, %v2384
        %v2386 = vand.u32 %v2385, 4294901760
        %2387 = vmatprep.subr.mxu0 %v2386
        %v2388 = vand.u32 %v1156, 4294901760
        %v2389 = vsub.f32 %v1156, %v2388
        %v2390 = vand.u32 %v2389, 4294901760
        %2391 = vmatpush1.msra.mxu0 %v2390
        %v2392 = vand.u32 %v1153, 4294901760
        %v2393 = vsub.f32 %v1153, %v2392
        %v2394 = vand.u32 %v2393, 4294901760
        %2395 = vmatprep.subr.mxu0 %v2394
        %v2396 = vand.u32 %v1152, 4294901760
        %v2397 = vsub.f32 %v1152, %v2396
        %v2398 = vand.u32 %v2397, 4294901760
        %2399 = vmatpush1.msra.mxu0 %v2398
        %v2400 = vand.u32 %v1149, 4294901760
        %v2401 = vsub.f32 %v1149, %v2400
        %v2402 = vand.u32 %v2401, 4294901760
        %2403 = vmatprep.subr.mxu0 %v2402
        %v2404 = vand.u32 %v1148, 4294901760
        %v2405 = vsub.f32 %v1148, %v2404
        %v2406 = vand.u32 %v2405, 4294901760
        %2407 = vmatpush1.msra.mxu0 %v2406
        %v2408 = vand.u32 %v1145, 4294901760
        %v2409 = vsub.f32 %v1145, %v2408
        %v2410 = vand.u32 %v2409, 4294901760
        %2411 = vmatprep.subr.mxu0 %v2410
        %v2412 = vand.u32 %v1144, 4294901760
        %v2413 = vsub.f32 %v1144, %v2412
        %v2414 = vand.u32 %v2413, 4294901760
        %2415 = vmatpush1.msra.mxu0 %v2414
        %v2416 = vand.u32 %v1141, 4294901760
        %v2417 = vsub.f32 %v1141, %v2416
        %v2418 = vand.u32 %v2417, 4294901760
        %2419 = vmatprep.subr.mxu0 %v2418
        %v2420 = vand.u32 %v1140, 4294901760
        %v2421 = vsub.f32 %v1140, %v2420
        %v2422 = vand.u32 %v2421, 4294901760
        %2423 = vmatpush1.msra.mxu0 %v2422
        %v2424 = vand.u32 %v1137, 4294901760
        %v2425 = vsub.f32 %v1137, %v2424
        %v2426 = vand.u32 %v2425, 4294901760
        %2427 = vmatprep.subr.mxu0 %v2426
        %v2428 = vand.u32 %v1136, 4294901760
        %v2429 = vsub.f32 %v1136, %v2428
        %v2430 = vand.u32 %v2429, 4294901760
        %2431 = vmatpush1.msra.mxu0 %v2430
        %v2432 = vand.u32 %v1133, 4294901760
        %v2433 = vsub.f32 %v1133, %v2432
        %v2434 = vand.u32 %v2433, 4294901760
        %2435 = vmatprep.subr.mxu0 %v2434
        %v2436 = vand.u32 %v1132, 4294901760
        %v2437 = vsub.f32 %v1132, %v2436
        %v2438 = vand.u32 %v2437, 4294901760
        %2439 = vmatpush1.msra.mxu0 %v2438
        %2440 = vmatprep.subr.mxu0 0.0
        %2441 = vmatpush2.msra.mxu0 0.0
        %2442 = vmatprep.subr.mxu0 0.0
        %2443 = vmatpush2.msra.mxu0 0.0
        %2444 = vmatprep.subr.mxu0 0.0
        %2445 = vmatpush2.msra.mxu0 0.0
        %2446 = vmatprep.subr.mxu0 0.0
        %2447 = vmatpush2.msra.mxu0 0.0
        %2448 = vmatprep.subr.mxu0 0.0
        %2449 = vmatpush2.msra.mxu0 0.0
        %2450 = vmatprep.subr.mxu0 0.0
        %2451 = vmatpush2.msra.mxu0 0.0
        %2452 = vmatprep.subr.mxu0 0.0
        %2453 = vmatpush2.msra.mxu0 0.0
        %2454 = vmatprep.subr.mxu0 0.0
        %2455 = vmatpush2.msra.mxu0 0.0
        %2456 = vmatprep.subr.mxu0 0.0
        %2457 = vmatpush2.msra.mxu0 0.0
        %2458 = vmatprep.subr.mxu0 0.0
        %2459 = vmatpush2.msra.mxu0 0.0
        %2460 = vmatprep.subr.mxu0 0.0
        %2461 = vmatpush2.msra.mxu0 0.0
        %2462 = vmatprep.subr.mxu0 0.0
        %2463 = vmatpush2.msra.mxu0 0.0
        %2464 = vmatprep.subr.mxu0 0.0
        %2465 = vmatpush2.msra.mxu0 0.0
        %2466 = vmatprep.subr.mxu0 0.0
        %2467 = vmatpush2.msra.mxu0 0.0
        %2468 = vmatprep.subr.mxu0 0.0
        %2469 = vmatpush2.msra.mxu0 0.0
        %2470 = vmatprep.subr.mxu0 0.0
        %2471 = vmatpush2.msra.mxu0 0.0
        %2472 = vmatprep.mubr.f32.mxu0 0.0
        %v2473 = vand.u32 %v1172, 4294901760
        %2474 = vmatmul.mubr.f32.gmra.mxu0 %v2473
        %v2475 = vpop.f32.mrf.mxu0
        %v2476 = vadd.f32 %v2344, %v2475
        %v2477 = vpop.f32.mrf.mxu0
        %v2478 = vadd.f32 %v2346, %v2477
        %2479 = vdwg.mxu0
        %2480 = vmatprep.subr.mxu0 0.0
        %2481 = vmatpush1.msra.mxu0 0.0
        %2482 = vmatprep.subr.mxu0 0.0
        %2483 = vmatpush1.msra.mxu0 0.0
        %2484 = vmatprep.subr.mxu0 0.0
        %2485 = vmatpush1.msra.mxu0 0.0
        %2486 = vmatprep.subr.mxu0 0.0
        %2487 = vmatpush1.msra.mxu0 0.0
        %2488 = vmatprep.subr.mxu0 0.0
        %2489 = vmatpush1.msra.mxu0 0.0
        %2490 = vmatprep.subr.mxu0 0.0
        %2491 = vmatpush1.msra.mxu0 0.0
        %v2492 = vand.u32 %v1169, 4294901760
        %2493 = vmatprep.subr.mxu0 %v2492
        %v2494 = vand.u32 %v1168, 4294901760
        %2495 = vmatpush1.msra.mxu0 %v2494
        %v2496 = vand.u32 %v1165, 4294901760
        %2497 = vmatprep.subr.mxu0 %v2496
        %v2498 = vand.u32 %v1164, 4294901760
        %2499 = vmatpush1.msra.mxu0 %v2498
        %v2500 = vand.u32 %v1161, 4294901760
        %2501 = vmatprep.subr.mxu0 %v2500
        %v2502 = vand.u32 %v1160, 4294901760
        %2503 = vmatpush1.msra.mxu0 %v2502
        %v2504 = vand.u32 %v1157, 4294901760
        %2505 = vmatprep.subr.mxu0 %v2504
        %v2506 = vand.u32 %v1156, 4294901760
        %2507 = vmatpush1.msra.mxu0 %v2506
        %v2508 = vand.u32 %v1153, 4294901760
        %2509 = vmatprep.subr.mxu0 %v2508
        %v2510 = vand.u32 %v1152, 4294901760
        %2511 = vmatpush1.msra.mxu0 %v2510
        %v2512 = vand.u32 %v1149, 4294901760
        %2513 = vmatprep.subr.mxu0 %v2512
        %v2514 = vand.u32 %v1148, 4294901760
        %2515 = vmatpush1.msra.mxu0 %v2514
        %v2516 = vand.u32 %v1145, 4294901760
        %2517 = vmatprep.subr.mxu0 %v2516
        %v2518 = vand.u32 %v1144, 4294901760
        %2519 = vmatpush1.msra.mxu0 %v2518
        %v2520 = vand.u32 %v1141, 4294901760
        %2521 = vmatprep.subr.mxu0 %v2520
        %v2522 = vand.u32 %v1140, 4294901760
        %2523 = vmatpush1.msra.mxu0 %v2522
        %v2524 = vand.u32 %v1137, 4294901760
        %2525 = vmatprep.subr.mxu0 %v2524
        %v2526 = vand.u32 %v1136, 4294901760
        %2527 = vmatpush1.msra.mxu0 %v2526
        %v2528 = vand.u32 %v1133, 4294901760
        %2529 = vmatprep.subr.mxu0 %v2528
        %v2530 = vand.u32 %v1132, 4294901760
        %2531 = vmatpush1.msra.mxu0 %v2530
        %2532 = vmatprep.subr.mxu0 0.0
        %2533 = vmatpush2.msra.mxu0 0.0
        %2534 = vmatprep.subr.mxu0 0.0
        %2535 = vmatpush2.msra.mxu0 0.0
        %2536 = vmatprep.subr.mxu0 0.0
        %2537 = vmatpush2.msra.mxu0 0.0
        %2538 = vmatprep.subr.mxu0 0.0
        %2539 = vmatpush2.msra.mxu0 0.0
        %2540 = vmatprep.subr.mxu0 0.0
        %2541 = vmatpush2.msra.mxu0 0.0
        %2542 = vmatprep.subr.mxu0 0.0
        %2543 = vmatpush2.msra.mxu0 0.0
        %2544 = vmatprep.subr.mxu0 0.0
        %2545 = vmatpush2.msra.mxu0 0.0
        %2546 = vmatprep.subr.mxu0 0.0
        %2547 = vmatpush2.msra.mxu0 0.0
        %2548 = vmatprep.subr.mxu0 0.0
        %2549 = vmatpush2.msra.mxu0 0.0
        %2550 = vmatprep.subr.mxu0 0.0
        %2551 = vmatpush2.msra.mxu0 0.0
        %2552 = vmatprep.subr.mxu0 0.0
        %2553 = vmatpush2.msra.mxu0 0.0
        %2554 = vmatprep.subr.mxu0 0.0
        %2555 = vmatpush2.msra.mxu0 0.0
        %2556 = vmatprep.subr.mxu0 0.0
        %2557 = vmatpush2.msra.mxu0 0.0
        %2558 = vmatprep.subr.mxu0 0.0
        %2559 = vmatpush2.msra.mxu0 0.0
        %2560 = vmatprep.subr.mxu0 0.0
        %2561 = vmatpush2.msra.mxu0 0.0
        %2562 = vmatprep.subr.mxu0 0.0
        %2563 = vmatpush2.msra.mxu0 0.0
        %2564 = vmatprep.mubr.f32.mxu0 0.0
        %v2565 = vand.u32 %v1172, 4294901760
        %2566 = vmatmul.mubr.f32.gmra.mxu0 %v2565
        %v2567 = vpop.f32.mrf.mxu0
        %v2568 = vadd.f32 %v2476, %v2567
        %v2569 = vpop.f32.mrf.mxu0
        %v2570 = vadd.f32 %v2478, %v2569
        %2571 = vdwg.mxu0
        %v2572 = vmax.f32 %v1869, 0.0
        %v2573 = vmax.f32 %v1871, 0.0
        %v2574 = vmax.f32 %v2568, 0.0
        %v2575 = vmax.f32 %v2570, 0.0
        %2576 = vst [vmem:[#allocation4] sm:$0xff] %v2572
        %2577 = vst [vmem:[#allocation4 + $0x8] sm:$0xff] %v2573
        %2578 = vst [vmem:[#allocation4 + $0x10] sm:$0xff] %v2574
        %2579 = vst [vmem:[#allocation4 + $0x18] sm:$0xff] %v2575
        %v2580 = vld [vmem:[#allocation4] sm:$0xff]
        %v2582 = vcombine.high %v2580, %v2580
        %v2584 = vunpack.c.l.s4 1966171168
        %v2585 = vunpack.c.0.s8 %v2584
        %v2586 = vlaneseq
        %v2587 = vshrl.u32 %v2586, 7
        %v2588 = vsub.s32 %v2585, %v2587
        %v2589 = vrot.slane %v2580, %v2588
        %v2591 = vunpack.c.l.s4 1966171168
        %v2592 = vunpack.c.0.s8 %v2591
        %v2593 = vlaneseq
        %v2594 = vshrl.u32 %v2593, 7
        %v2595 = vsub.s32 %v2592, %v2594
        %v2596 = vrot.slane %v2582, %v2595
        %v2597 = vcombine.high %v2589, %v2589
        %v2598 = vcombine.high %v2596, %v2596
        %v2600 = vunpack.c.l.s4 1966171168
        %v2601 = vunpack.c.0.s8 %v2600
        %v2602 = vlaneseq
        %v2603 = vshrl.u32 %v2602, 7
        %v2604 = vsub.s32 %v2601, %v2603
        %v2605 = vrot.slane %v2589, %v2604
        %v2607 = vunpack.c.l.s4 1966171168
        %v2608 = vunpack.c.0.s8 %v2607
        %v2609 = vlaneseq
        %v2610 = vshrl.u32 %v2609, 7
        %v2611 = vsub.s32 %v2608, %v2610
        %v2612 = vrot.slane %v2596, %v2611
        %v2614 = vunpack.c.l.s4 1966171168
        %v2615 = vunpack.c.0.s8 %v2614
        %v2616 = vlaneseq
        %v2617 = vshrl.u32 %v2616, 7
        %v2618 = vsub.s32 %v2615, %v2617
        %v2619 = vrot.slane %v2597, %v2618
        %v2621 = vunpack.c.l.s4 1966171168
        %v2622 = vunpack.c.0.s8 %v2621
        %v2623 = vlaneseq
        %v2624 = vshrl.u32 %v2623, 7
        %v2625 = vsub.s32 %v2622, %v2624
        %v2626 = vrot.slane %v2598, %v2625
        %v2627 = vcombine.high %v2605, %v2605
        %v2628 = vcombine.high %v2612, %v2612
        %v2629 = vcombine.high %v2619, %v2619
        %v2630 = vcombine.high %v2626, %v2626
        %vm2639 = vcmask 122880
        %2640 = vst.msk [vmem:[%s236] sm:$0x1] %vm2639, %v2605
        %2641 = vst.msk [vmem:[%s236 + $0x10] sm:$0x1] %vm2639, %v2619
        %2642 = vst.msk [vmem:[%s236 + $0x20] sm:$0x1] %vm2639, %v2627
        %2643 = vst.msk [vmem:[%s236 + $0x30] sm:$0x1] %vm2639, %v2629
        %2644 = vst.msk [vmem:[%s236 + $0x40] sm:$0x1] %vm2639, %v2612
        %2645 = vst.msk [vmem:[%s236 + $0x50] sm:$0x1] %vm2639, %v2626
        %2646 = vst.msk [vmem:[%s236 + $0x60] sm:$0x1] %vm2639, %v2628
        %2647 = vst.msk [vmem:[%s236 + $0x70] sm:$0x1] %vm2639, %v2630
        %v2648 = vld [vmem:[#allocation4] sm:$0xff]
        %v2650 = vcombine.high %v2648, %v2648
        %v2652 = vunpack.c.l.s4 1966171168
        %v2653 = vunpack.c.0.s8 %v2652
        %v2654 = vlaneseq
        %v2655 = vshrl.u32 %v2654, 7
        %v2656 = vsub.s32 %v2653, %v2655
        %v2657 = vrot.slane %v2648, %v2656
        %v2659 = vunpack.c.l.s4 1966171168
        %v2660 = vunpack.c.0.s8 %v2659
        %v2661 = vlaneseq
        %v2662 = vshrl.u32 %v2661, 7
        %v2663 = vsub.s32 %v2660, %v2662
        %v2664 = vrot.slane %v2650, %v2663
        %v2665 = vcombine.high %v2657, %v2657
        %v2666 = vcombine.high %v2664, %v2664
        %v2668 = vunpack.c.l.s4 1966171168
        %v2669 = vunpack.c.0.s8 %v2668
        %v2670 = vlaneseq
        %v2671 = vshrl.u32 %v2670, 7
        %v2672 = vsub.s32 %v2669, %v2671
        %v2673 = vrot.slane %v2657, %v2672
        %v2675 = vunpack.c.l.s4 1966171168
        %v2676 = vunpack.c.0.s8 %v2675
        %v2677 = vlaneseq
        %v2678 = vshrl.u32 %v2677, 7
        %v2679 = vsub.s32 %v2676, %v2678
        %v2680 = vrot.slane %v2664, %v2679
        %v2682 = vunpack.c.l.s4 1966171168
        %v2683 = vunpack.c.0.s8 %v2682
        %v2684 = vlaneseq
        %v2685 = vshrl.u32 %v2684, 7
        %v2686 = vsub.s32 %v2683, %v2685
        %v2687 = vrot.slane %v2665, %v2686
        %v2689 = vunpack.c.l.s4 1966171168
        %v2690 = vunpack.c.0.s8 %v2689
        %v2691 = vlaneseq
        %v2692 = vshrl.u32 %v2691, 7
        %v2693 = vsub.s32 %v2690, %v2692
        %v2694 = vrot.slane %v2666, %v2693
        %v2695 = vcombine.high %v2673, %v2673
        %v2696 = vcombine.high %v2680, %v2680
        %v2697 = vcombine.high %v2687, %v2687
        %v2698 = vcombine.high %v2694, %v2694
        %v2699 = vlaneseq
        %v2700 = vshrl.u32 %v2699, 7
        %v2701 = vsub.s32 0, %v2700
        %v2702 = vrot.slane %v2673, %v2701
        %v2703 = vlaneseq
        %v2704 = vshrl.u32 %v2703, 7
        %v2705 = vsub.s32 0, %v2704
        %v2706 = vrot.slane %v2687, %v2705
        %v2707 = vlaneseq
        %v2708 = vshrl.u32 %v2707, 7
        %v2709 = vsub.s32 0, %v2708
        %v2710 = vrot.slane %v2695, %v2709
        %v2711 = vlaneseq
        %v2712 = vshrl.u32 %v2711, 7
        %v2713 = vsub.s32 0, %v2712
        %v2714 = vrot.slane %v2697, %v2713
        %v2715 = vlaneseq
        %v2716 = vshrl.u32 %v2715, 7
        %v2717 = vsub.s32 0, %v2716
        %v2718 = vrot.slane %v2680, %v2717
        %v2719 = vlaneseq
        %v2720 = vshrl.u32 %v2719, 7
        %v2721 = vsub.s32 0, %v2720
        %v2722 = vrot.slane %v2694, %v2721
        %v2723 = vlaneseq
        %v2724 = vshrl.u32 %v2723, 7
        %v2725 = vsub.s32 0, %v2724
        %v2726 = vrot.slane %v2696, %v2725
        %v2727 = vlaneseq
        %v2728 = vshrl.u32 %v2727, 7
        %v2729 = vsub.s32 0, %v2728
        %v2730 = vrot.slane %v2698, %v2729
        %2731 = vrot.lane.b32.xlu0 %v2702, 96
        %v2732 = vpop.permute.xlu0 %2731
        %2733 = vrot.lane.b32.xlu0 %v2706, 96
        %v2734 = vpop.permute.xlu0 %2733
        %2735 = vrot.lane.b32.xlu0 %v2710, 96
        %v2736 = vpop.permute.xlu0 %2735
        %2737 = vrot.lane.b32.xlu0 %v2714, 96
        %v2738 = vpop.permute.xlu0 %2737
        %2739 = vrot.lane.b32.xlu0 %v2718, 96
        %v2740 = vpop.permute.xlu0 %2739
        %2741 = vrot.lane.b32.xlu0 %v2722, 96
        %v2742 = vpop.permute.xlu0 %2741
        %2743 = vrot.lane.b32.xlu0 %v2726, 96
        %v2744 = vpop.permute.xlu0 %2743
        %2745 = vrot.lane.b32.xlu0 %v2730, 96
        %v2746 = vpop.permute.xlu0 %2745
        %2755 = vst.msk [vmem:[%s236 + $0x1] sm:$0x1] %vm2639, %v2732
        %2756 = vst.msk [vmem:[%s236 + $0x11] sm:$0x1] %vm2639, %v2734
        %2757 = vst.msk [vmem:[%s236 + $0x21] sm:$0x1] %vm2639, %v2736
        %2758 = vst.msk [vmem:[%s236 + $0x31] sm:$0x1] %vm2639, %v2738
        %2759 = vst.msk [vmem:[%s236 + $0x41] sm:$0x1] %vm2639, %v2740
        %2760 = vst.msk [vmem:[%s236 + $0x51] sm:$0x1] %vm2639, %v2742
        %2761 = vst.msk [vmem:[%s236 + $0x61] sm:$0x1] %vm2639, %v2744
        %2762 = vst.msk [vmem:[%s236 + $0x71] sm:$0x1] %vm2639, %v2746
        %v2763 = vld [vmem:[#allocation4] sm:$0xff]
        %v2765 = vcombine.high %v2763, %v2763
        %v2767 = vunpack.c.l.s4 1966171168
        %v2768 = vunpack.c.0.s8 %v2767
        %v2769 = vlaneseq
        %v2770 = vshrl.u32 %v2769, 7
        %v2771 = vsub.s32 %v2768, %v2770
        %v2772 = vrot.slane %v2763, %v2771
        %v2774 = vunpack.c.l.s4 1966171168
        %v2775 = vunpack.c.0.s8 %v2774
        %v2776 = vlaneseq
        %v2777 = vshrl.u32 %v2776, 7
        %v2778 = vsub.s32 %v2775, %v2777
        %v2779 = vrot.slane %v2765, %v2778
        %v2780 = vcombine.high %v2772, %v2772
        %v2781 = vcombine.high %v2779, %v2779
        %v2783 = vunpack.c.l.s4 1966171168
        %v2784 = vunpack.c.0.s8 %v2783
        %v2785 = vlaneseq
        %v2786 = vshrl.u32 %v2785, 7
        %v2787 = vsub.s32 %v2784, %v2786
        %v2788 = vrot.slane %v2772, %v2787
        %v2790 = vunpack.c.l.s4 1966171168
        %v2791 = vunpack.c.0.s8 %v2790
        %v2792 = vlaneseq
        %v2793 = vshrl.u32 %v2792, 7
        %v2794 = vsub.s32 %v2791, %v2793
        %v2795 = vrot.slane %v2779, %v2794
        %v2797 = vunpack.c.l.s4 1966171168
        %v2798 = vunpack.c.0.s8 %v2797
        %v2799 = vlaneseq
        %v2800 = vshrl.u32 %v2799, 7
        %v2801 = vsub.s32 %v2798, %v2800
        %v2802 = vrot.slane %v2780, %v2801
        %v2804 = vunpack.c.l.s4 1966171168
        %v2805 = vunpack.c.0.s8 %v2804
        %v2806 = vlaneseq
        %v2807 = vshrl.u32 %v2806, 7
        %v2808 = vsub.s32 %v2805, %v2807
        %v2809 = vrot.slane %v2781, %v2808
        %v2810 = vcombine.high %v2788, %v2788
        %v2811 = vcombine.high %v2795, %v2795
        %v2812 = vcombine.high %v2802, %v2802
        %v2813 = vcombine.high %v2809, %v2809
        %v2814 = vlaneseq
        %v2815 = vshrl.u32 %v2814, 7
        %v2816 = vsub.s32 0, %v2815
        %v2817 = vrot.slane %v2788, %v2816
        %v2818 = vlaneseq
        %v2819 = vshrl.u32 %v2818, 7
        %v2820 = vsub.s32 0, %v2819
        %v2821 = vrot.slane %v2802, %v2820
        %v2822 = vlaneseq
        %v2823 = vshrl.u32 %v2822, 7
        %v2824 = vsub.s32 0, %v2823
        %v2825 = vrot.slane %v2810, %v2824
        %v2826 = vlaneseq
        %v2827 = vshrl.u32 %v2826, 7
        %v2828 = vsub.s32 0, %v2827
        %v2829 = vrot.slane %v2812, %v2828
        %v2830 = vlaneseq
        %v2831 = vshrl.u32 %v2830, 7
        %v2832 = vsub.s32 0, %v2831
        %v2833 = vrot.slane %v2795, %v2832
        %v2834 = vlaneseq
        %v2835 = vshrl.u32 %v2834, 7
        %v2836 = vsub.s32 0, %v2835
        %v2837 = vrot.slane %v2809, %v2836
        %v2838 = vlaneseq
        %v2839 = vshrl.u32 %v2838, 7
        %v2840 = vsub.s32 0, %v2839
        %v2841 = vrot.slane %v2811, %v2840
        %v2842 = vlaneseq
        %v2843 = vshrl.u32 %v2842, 7
        %v2844 = vsub.s32 0, %v2843
        %v2845 = vrot.slane %v2813, %v2844
        %2846 = vrot.lane.b32.xlu0 %v2817, 64
        %v2847 = vpop.permute.xlu0 %2846
        %2848 = vrot.lane.b32.xlu0 %v2821, 64
        %v2849 = vpop.permute.xlu0 %2848
        %2850 = vrot.lane.b32.xlu0 %v2825, 64
        %v2851 = vpop.permute.xlu0 %2850
        %2852 = vrot.lane.b32.xlu0 %v2829, 64
        %v2853 = vpop.permute.xlu0 %2852
        %2854 = vrot.lane.b32.xlu0 %v2833, 64
        %v2855 = vpop.permute.xlu0 %2854
        %2856 = vrot.lane.b32.xlu0 %v2837, 64
        %v2857 = vpop.permute.xlu0 %2856
        %2858 = vrot.lane.b32.xlu0 %v2841, 64
        %v2859 = vpop.permute.xlu0 %2858
        %2860 = vrot.lane.b32.xlu0 %v2845, 64
        %v2861 = vpop.permute.xlu0 %2860
        %2870 = vst.msk [vmem:[%s236 + $0x2] sm:$0x1] %vm2639, %v2847
        %2871 = vst.msk [vmem:[%s236 + $0x12] sm:$0x1] %vm2639, %v2849
        %2872 = vst.msk [vmem:[%s236 + $0x22] sm:$0x1] %vm2639, %v2851
        %2873 = vst.msk [vmem:[%s236 + $0x32] sm:$0x1] %vm2639, %v2853
        %2874 = vst.msk [vmem:[%s236 + $0x42] sm:$0x1] %vm2639, %v2855
        %2875 = vst.msk [vmem:[%s236 + $0x52] sm:$0x1] %vm2639, %v2857
        %2876 = vst.msk [vmem:[%s236 + $0x62] sm:$0x1] %vm2639, %v2859
        %2877 = vst.msk [vmem:[%s236 + $0x72] sm:$0x1] %vm2639, %v2861
        %v2878 = vld [vmem:[#allocation4] sm:$0xff]
        %v2880 = vcombine.high %v2878, %v2878
        %v2882 = vunpack.c.l.s4 1966171168
        %v2883 = vunpack.c.0.s8 %v2882
        %v2884 = vlaneseq
        %v2885 = vshrl.u32 %v2884, 7
        %v2886 = vsub.s32 %v2883, %v2885
        %v2887 = vrot.slane %v2878, %v2886
        %v2889 = vunpack.c.l.s4 1966171168
        %v2890 = vunpack.c.0.s8 %v2889
        %v2891 = vlaneseq
        %v2892 = vshrl.u32 %v2891, 7
        %v2893 = vsub.s32 %v2890, %v2892
        %v2894 = vrot.slane %v2880, %v2893
        %v2895 = vcombine.high %v2887, %v2887
        %v2896 = vcombine.high %v2894, %v2894
        %v2898 = vunpack.c.l.s4 1966171168
        %v2899 = vunpack.c.0.s8 %v2898
        %v2900 = vlaneseq
        %v2901 = vshrl.u32 %v2900, 7
        %v2902 = vsub.s32 %v2899, %v2901
        %v2903 = vrot.slane %v2887, %v2902
        %v2905 = vunpack.c.l.s4 1966171168
        %v2906 = vunpack.c.0.s8 %v2905
        %v2907 = vlaneseq
        %v2908 = vshrl.u32 %v2907, 7
        %v2909 = vsub.s32 %v2906, %v2908
        %v2910 = vrot.slane %v2894, %v2909
        %v2912 = vunpack.c.l.s4 1966171168
        %v2913 = vunpack.c.0.s8 %v2912
        %v2914 = vlaneseq
        %v2915 = vshrl.u32 %v2914, 7
        %v2916 = vsub.s32 %v2913, %v2915
        %v2917 = vrot.slane %v2895, %v2916
        %v2919 = vunpack.c.l.s4 1966171168
        %v2920 = vunpack.c.0.s8 %v2919
        %v2921 = vlaneseq
        %v2922 = vshrl.u32 %v2921, 7
        %v2923 = vsub.s32 %v2920, %v2922
        %v2924 = vrot.slane %v2896, %v2923
        %v2925 = vcombine.high %v2903, %v2903
        %v2926 = vcombine.high %v2910, %v2910
        %v2927 = vcombine.high %v2917, %v2917
        %v2928 = vcombine.high %v2924, %v2924
        %v2929 = vlaneseq
        %v2930 = vshrl.u32 %v2929, 7
        %v2931 = vsub.s32 0, %v2930
        %v2932 = vrot.slane %v2903, %v2931
        %v2933 = vlaneseq
        %v2934 = vshrl.u32 %v2933, 7
        %v2935 = vsub.s32 0, %v2934
        %v2936 = vrot.slane %v2917, %v2935
        %v2937 = vlaneseq
        %v2938 = vshrl.u32 %v2937, 7
        %v2939 = vsub.s32 0, %v2938
        %v2940 = vrot.slane %v2925, %v2939
        %v2941 = vlaneseq
        %v2942 = vshrl.u32 %v2941, 7
        %v2943 = vsub.s32 0, %v2942
        %v2944 = vrot.slane %v2927, %v2943
        %v2945 = vlaneseq
        %v2946 = vshrl.u32 %v2945, 7
        %v2947 = vsub.s32 0, %v2946
        %v2948 = vrot.slane %v2910, %v2947
        %v2949 = vlaneseq
        %v2950 = vshrl.u32 %v2949, 7
        %v2951 = vsub.s32 0, %v2950
        %v2952 = vrot.slane %v2924, %v2951
        %v2953 = vlaneseq
        %v2954 = vshrl.u32 %v2953, 7
        %v2955 = vsub.s32 0, %v2954
        %v2956 = vrot.slane %v2926, %v2955
        %v2957 = vlaneseq
        %v2958 = vshrl.u32 %v2957, 7
        %v2959 = vsub.s32 0, %v2958
        %v2960 = vrot.slane %v2928, %v2959
        %2961 = vrot.lane.b32.xlu0 %v2932, 32
        %v2962 = vpop.permute.xlu0 %2961
        %2963 = vrot.lane.b32.xlu0 %v2936, 32
        %v2964 = vpop.permute.xlu0 %2963
        %2965 = vrot.lane.b32.xlu0 %v2940, 32
        %v2966 = vpop.permute.xlu0 %2965
        %2967 = vrot.lane.b32.xlu0 %v2944, 32
        %v2968 = vpop.permute.xlu0 %2967
        %2969 = vrot.lane.b32.xlu0 %v2948, 32
        %v2970 = vpop.permute.xlu0 %2969
        %2971 = vrot.lane.b32.xlu0 %v2952, 32
        %v2972 = vpop.permute.xlu0 %2971
        %2973 = vrot.lane.b32.xlu0 %v2956, 32
        %v2974 = vpop.permute.xlu0 %2973
        %2975 = vrot.lane.b32.xlu0 %v2960, 32
        %v2976 = vpop.permute.xlu0 %2975
        %2985 = vst.msk [vmem:[%s236 + $0x3] sm:$0x1] %vm2639, %v2962
        %2986 = vst.msk [vmem:[%s236 + $0x13] sm:$0x1] %vm2639, %v2964
        %2987 = vst.msk [vmem:[%s236 + $0x23] sm:$0x1] %vm2639, %v2966
        %2988 = vst.msk [vmem:[%s236 + $0x33] sm:$0x1] %vm2639, %v2968
        %2989 = vst.msk [vmem:[%s236 + $0x43] sm:$0x1] %vm2639, %v2970
        %2990 = vst.msk [vmem:[%s236 + $0x53] sm:$0x1] %vm2639, %v2972
        %2991 = vst.msk [vmem:[%s236 + $0x63] sm:$0x1] %vm2639, %v2974
        %2992 = vst.msk [vmem:[%s236 + $0x73] sm:$0x1] %vm2639, %v2976
        %v2993 = vld [vmem:[#allocation4 + $0x8] sm:$0xff]
        %v2995 = vcombine.high %v2993, %v2993
        %v2997 = vunpack.c.l.s4 1966171168
        %v2998 = vunpack.c.0.s8 %v2997
        %v2999 = vlaneseq
        %v3000 = vshrl.u32 %v2999, 7
        %v3001 = vsub.s32 %v2998, %v3000
        %v3002 = vrot.slane %v2993, %v3001
        %v3004 = vunpack.c.l.s4 1966171168
        %v3005 = vunpack.c.0.s8 %v3004
        %v3006 = vlaneseq
        %v3007 = vshrl.u32 %v3006, 7
        %v3008 = vsub.s32 %v3005, %v3007
        %v3009 = vrot.slane %v2995, %v3008
        %v3010 = vcombine.high %v3002, %v3002
        %v3011 = vcombine.high %v3009, %v3009
        %v3013 = vunpack.c.l.s4 1966171168
        %v3014 = vunpack.c.0.s8 %v3013
        %v3015 = vlaneseq
        %v3016 = vshrl.u32 %v3015, 7
        %v3017 = vsub.s32 %v3014, %v3016
        %v3018 = vrot.slane %v3002, %v3017
        %v3020 = vunpack.c.l.s4 1966171168
        %v3021 = vunpack.c.0.s8 %v3020
        %v3022 = vlaneseq
        %v3023 = vshrl.u32 %v3022, 7
        %v3024 = vsub.s32 %v3021, %v3023
        %v3025 = vrot.slane %v3009, %v3024
        %v3027 = vunpack.c.l.s4 1966171168
        %v3028 = vunpack.c.0.s8 %v3027
        %v3029 = vlaneseq
        %v3030 = vshrl.u32 %v3029, 7
        %v3031 = vsub.s32 %v3028, %v3030
        %v3032 = vrot.slane %v3010, %v3031
        %v3034 = vunpack.c.l.s4 1966171168
        %v3035 = vunpack.c.0.s8 %v3034
        %v3036 = vlaneseq
        %v3037 = vshrl.u32 %v3036, 7
        %v3038 = vsub.s32 %v3035, %v3037
        %v3039 = vrot.slane %v3011, %v3038
        %v3040 = vcombine.high %v3018, %v3018
        %v3041 = vcombine.high %v3025, %v3025
        %v3042 = vcombine.high %v3032, %v3032
        %v3043 = vcombine.high %v3039, %v3039
        %3052 = vst.msk [vmem:[%s236 + $0x4] sm:$0x1] %vm2639, %v3018
        %3053 = vst.msk [vmem:[%s236 + $0x14] sm:$0x1] %vm2639, %v3032
        %3054 = vst.msk [vmem:[%s236 + $0x24] sm:$0x1] %vm2639, %v3040
        %3055 = vst.msk [vmem:[%s236 + $0x34] sm:$0x1] %vm2639, %v3042
        %3056 = vst.msk [vmem:[%s236 + $0x44] sm:$0x1] %vm2639, %v3025
        %3057 = vst.msk [vmem:[%s236 + $0x54] sm:$0x1] %vm2639, %v3039
        %3058 = vst.msk [vmem:[%s236 + $0x64] sm:$0x1] %vm2639, %v3041
        %3059 = vst.msk [vmem:[%s236 + $0x74] sm:$0x1] %vm2639, %v3043
        %v3060 = vld [vmem:[#allocation4 + $0x8] sm:$0xff]
        %v3062 = vcombine.high %v3060, %v3060
        %v3064 = vunpack.c.l.s4 1966171168
        %v3065 = vunpack.c.0.s8 %v3064
        %v3066 = vlaneseq
        %v3067 = vshrl.u32 %v3066, 7
        %v3068 = vsub.s32 %v3065, %v3067
        %v3069 = vrot.slane %v3060, %v3068
        %v3071 = vunpack.c.l.s4 1966171168
        %v3072 = vunpack.c.0.s8 %v3071
        %v3073 = vlaneseq
        %v3074 = vshrl.u32 %v3073, 7
        %v3075 = vsub.s32 %v3072, %v3074
        %v3076 = vrot.slane %v3062, %v3075
        %v3077 = vcombine.high %v3069, %v3069
        %v3078 = vcombine.high %v3076, %v3076
        %v3080 = vunpack.c.l.s4 1966171168
        %v3081 = vunpack.c.0.s8 %v3080
        %v3082 = vlaneseq
        %v3083 = vshrl.u32 %v3082, 7
        %v3084 = vsub.s32 %v3081, %v3083
        %v3085 = vrot.slane %v3069, %v3084
        %v3087 = vunpack.c.l.s4 1966171168
        %v3088 = vunpack.c.0.s8 %v3087
        %v3089 = vlaneseq
        %v3090 = vshrl.u32 %v3089, 7
        %v3091 = vsub.s32 %v3088, %v3090
        %v3092 = vrot.slane %v3076, %v3091
        %v3094 = vunpack.c.l.s4 1966171168
        %v3095 = vunpack.c.0.s8 %v3094
        %v3096 = vlaneseq
        %v3097 = vshrl.u32 %v3096, 7
        %v3098 = vsub.s32 %v3095, %v3097
        %v3099 = vrot.slane %v3077, %v3098
        %v3101 = vunpack.c.l.s4 1966171168
        %v3102 = vunpack.c.0.s8 %v3101
        %v3103 = vlaneseq
        %v3104 = vshrl.u32 %v3103, 7
        %v3105 = vsub.s32 %v3102, %v3104
        %v3106 = vrot.slane %v3078, %v3105
        %v3107 = vcombine.high %v3085, %v3085
        %v3108 = vcombine.high %v3092, %v3092
        %v3109 = vcombine.high %v3099, %v3099
        %v3110 = vcombine.high %v3106, %v3106
        %v3111 = vlaneseq
        %v3112 = vshrl.u32 %v3111, 7
        %v3113 = vsub.s32 0, %v3112
        %v3114 = vrot.slane %v3085, %v3113
        %v3115 = vlaneseq
        %v3116 = vshrl.u32 %v3115, 7
        %v3117 = vsub.s32 0, %v3116
        %v3118 = vrot.slane %v3099, %v3117
        %v3119 = vlaneseq
        %v3120 = vshrl.u32 %v3119, 7
        %v3121 = vsub.s32 0, %v3120
        %v3122 = vrot.slane %v3107, %v3121
        %v3123 = vlaneseq
        %v3124 = vshrl.u32 %v3123, 7
        %v3125 = vsub.s32 0, %v3124
        %v3126 = vrot.slane %v3109, %v3125
        %v3127 = vlaneseq
        %v3128 = vshrl.u32 %v3127, 7
        %v3129 = vsub.s32 0, %v3128
        %v3130 = vrot.slane %v3092, %v3129
        %v3131 = vlaneseq
        %v3132 = vshrl.u32 %v3131, 7
        %v3133 = vsub.s32 0, %v3132
        %v3134 = vrot.slane %v3106, %v3133
        %v3135 = vlaneseq
        %v3136 = vshrl.u32 %v3135, 7
        %v3137 = vsub.s32 0, %v3136
        %v3138 = vrot.slane %v3108, %v3137
        %v3139 = vlaneseq
        %v3140 = vshrl.u32 %v3139, 7
        %v3141 = vsub.s32 0, %v3140
        %v3142 = vrot.slane %v3110, %v3141
        %3143 = vrot.lane.b32.xlu0 %v3114, 96
        %v3144 = vpop.permute.xlu0 %3143
        %3145 = vrot.lane.b32.xlu0 %v3118, 96
        %v3146 = vpop.permute.xlu0 %3145
        %3147 = vrot.lane.b32.xlu0 %v3122, 96
        %v3148 = vpop.permute.xlu0 %3147
        %3149 = vrot.lane.b32.xlu0 %v3126, 96
        %v3150 = vpop.permute.xlu0 %3149
        %3151 = vrot.lane.b32.xlu0 %v3130, 96
        %v3152 = vpop.permute.xlu0 %3151
        %3153 = vrot.lane.b32.xlu0 %v3134, 96
        %v3154 = vpop.permute.xlu0 %3153
        %3155 = vrot.lane.b32.xlu0 %v3138, 96
        %v3156 = vpop.permute.xlu0 %3155
        %3157 = vrot.lane.b32.xlu0 %v3142, 96
        %v3158 = vpop.permute.xlu0 %3157
        %3167 = vst.msk [vmem:[%s236 + $0x5] sm:$0x1] %vm2639, %v3144
        %3168 = vst.msk [vmem:[%s236 + $0x15] sm:$0x1] %vm2639, %v3146
        %3169 = vst.msk [vmem:[%s236 + $0x25] sm:$0x1] %vm2639, %v3148
        %3170 = vst.msk [vmem:[%s236 + $0x35] sm:$0x1] %vm2639, %v3150
        %3171 = vst.msk [vmem:[%s236 + $0x45] sm:$0x1] %vm2639, %v3152
        %3172 = vst.msk [vmem:[%s236 + $0x55] sm:$0x1] %vm2639, %v3154
        %3173 = vst.msk [vmem:[%s236 + $0x65] sm:$0x1] %vm2639, %v3156
        %3174 = vst.msk [vmem:[%s236 + $0x75] sm:$0x1] %vm2639, %v3158
        %v3175 = vld [vmem:[#allocation4 + $0x8] sm:$0xff]
        %v3177 = vcombine.high %v3175, %v3175
        %v3179 = vunpack.c.l.s4 1966171168
        %v3180 = vunpack.c.0.s8 %v3179
        %v3181 = vlaneseq
        %v3182 = vshrl.u32 %v3181, 7
        %v3183 = vsub.s32 %v3180, %v3182
        %v3184 = vrot.slane %v3175, %v3183
        %v3186 = vunpack.c.l.s4 1966171168
        %v3187 = vunpack.c.0.s8 %v3186
        %v3188 = vlaneseq
        %v3189 = vshrl.u32 %v3188, 7
        %v3190 = vsub.s32 %v3187, %v3189
        %v3191 = vrot.slane %v3177, %v3190
        %v3192 = vcombine.high %v3184, %v3184
        %v3193 = vcombine.high %v3191, %v3191
        %v3195 = vunpack.c.l.s4 1966171168
        %v3196 = vunpack.c.0.s8 %v3195
        %v3197 = vlaneseq
        %v3198 = vshrl.u32 %v3197, 7
        %v3199 = vsub.s32 %v3196, %v3198
        %v3200 = vrot.slane %v3184, %v3199
        %v3202 = vunpack.c.l.s4 1966171168
        %v3203 = vunpack.c.0.s8 %v3202
        %v3204 = vlaneseq
        %v3205 = vshrl.u32 %v3204, 7
        %v3206 = vsub.s32 %v3203, %v3205
        %v3207 = vrot.slane %v3191, %v3206
        %v3209 = vunpack.c.l.s4 1966171168
        %v3210 = vunpack.c.0.s8 %v3209
        %v3211 = vlaneseq
        %v3212 = vshrl.u32 %v3211, 7
        %v3213 = vsub.s32 %v3210, %v3212
        %v3214 = vrot.slane %v3192, %v3213
        %v3216 = vunpack.c.l.s4 1966171168
        %v3217 = vunpack.c.0.s8 %v3216
        %v3218 = vlaneseq
        %v3219 = vshrl.u32 %v3218, 7
        %v3220 = vsub.s32 %v3217, %v3219
        %v3221 = vrot.slane %v3193, %v3220
        %v3222 = vcombine.high %v3200, %v3200
        %v3223 = vcombine.high %v3207, %v3207
        %v3224 = vcombine.high %v3214, %v3214
        %v3225 = vcombine.high %v3221, %v3221
        %v3226 = vlaneseq
        %v3227 = vshrl.u32 %v3226, 7
        %v3228 = vsub.s32 0, %v3227
        %v3229 = vrot.slane %v3200, %v3228
        %v3230 = vlaneseq
        %v3231 = vshrl.u32 %v3230, 7
        %v3232 = vsub.s32 0, %v3231
        %v3233 = vrot.slane %v3214, %v3232
        %v3234 = vlaneseq
        %v3235 = vshrl.u32 %v3234, 7
        %v3236 = vsub.s32 0, %v3235
        %v3237 = vrot.slane %v3222, %v3236
        %v3238 = vlaneseq
        %v3239 = vshrl.u32 %v3238, 7
        %v3240 = vsub.s32 0, %v3239
        %v3241 = vrot.slane %v3224, %v3240
        %v3242 = vlaneseq
        %v3243 = vshrl.u32 %v3242, 7
        %v3244 = vsub.s32 0, %v3243
        %v3245 = vrot.slane %v3207, %v3244
        %v3246 = vlaneseq
        %v3247 = vshrl.u32 %v3246, 7
        %v3248 = vsub.s32 0, %v3247
        %v3249 = vrot.slane %v3221, %v3248
        %v3250 = vlaneseq
        %v3251 = vshrl.u32 %v3250, 7
        %v3252 = vsub.s32 0, %v3251
        %v3253 = vrot.slane %v3223, %v3252
        %v3254 = vlaneseq
        %v3255 = vshrl.u32 %v3254, 7
        %v3256 = vsub.s32 0, %v3255
        %v3257 = vrot.slane %v3225, %v3256
        %3258 = vrot.lane.b32.xlu0 %v3229, 64
        %v3259 = vpop.permute.xlu0 %3258
        %3260 = vrot.lane.b32.xlu0 %v3233, 64
        %v3261 = vpop.permute.xlu0 %3260
        %3262 = vrot.lane.b32.xlu0 %v3237, 64
        %v3263 = vpop.permute.xlu0 %3262
        %3264 = vrot.lane.b32.xlu0 %v3241, 64
        %v3265 = vpop.permute.xlu0 %3264
        %3266 = vrot.lane.b32.xlu0 %v3245, 64
        %v3267 = vpop.permute.xlu0 %3266
        %3268 = vrot.lane.b32.xlu0 %v3249, 64
        %v3269 = vpop.permute.xlu0 %3268
        %3270 = vrot.lane.b32.xlu0 %v3253, 64
        %v3271 = vpop.permute.xlu0 %3270
        %3272 = vrot.lane.b32.xlu0 %v3257, 64
        %v3273 = vpop.permute.xlu0 %3272
        %3282 = vst.msk [vmem:[%s236 + $0x6] sm:$0x1] %vm2639, %v3259
        %3283 = vst.msk [vmem:[%s236 + $0x16] sm:$0x1] %vm2639, %v3261
        %3284 = vst.msk [vmem:[%s236 + $0x26] sm:$0x1] %vm2639, %v3263
        %3285 = vst.msk [vmem:[%s236 + $0x36] sm:$0x1] %vm2639, %v3265
        %3286 = vst.msk [vmem:[%s236 + $0x46] sm:$0x1] %vm2639, %v3267
        %3287 = vst.msk [vmem:[%s236 + $0x56] sm:$0x1] %vm2639, %v3269
        %3288 = vst.msk [vmem:[%s236 + $0x66] sm:$0x1] %vm2639, %v3271
        %3289 = vst.msk [vmem:[%s236 + $0x76] sm:$0x1] %vm2639, %v3273
        %v3290 = vld [vmem:[#allocation4 + $0x8] sm:$0xff]
        %v3292 = vcombine.high %v3290, %v3290
        %v3294 = vunpack.c.l.s4 1966171168
        %v3295 = vunpack.c.0.s8 %v3294
        %v3296 = vlaneseq
        %v3297 = vshrl.u32 %v3296, 7
        %v3298 = vsub.s32 %v3295, %v3297
        %v3299 = vrot.slane %v3290, %v3298
        %v3301 = vunpack.c.l.s4 1966171168
        %v3302 = vunpack.c.0.s8 %v3301
        %v3303 = vlaneseq
        %v3304 = vshrl.u32 %v3303, 7
        %v3305 = vsub.s32 %v3302, %v3304
        %v3306 = vrot.slane %v3292, %v3305
        %v3307 = vcombine.high %v3299, %v3299
        %v3308 = vcombine.high %v3306, %v3306
        %v3310 = vunpack.c.l.s4 1966171168
        %v3311 = vunpack.c.0.s8 %v3310
        %v3312 = vlaneseq
        %v3313 = vshrl.u32 %v3312, 7
        %v3314 = vsub.s32 %v3311, %v3313
        %v3315 = vrot.slane %v3299, %v3314
        %v3317 = vunpack.c.l.s4 1966171168
        %v3318 = vunpack.c.0.s8 %v3317
        %v3319 = vlaneseq
        %v3320 = vshrl.u32 %v3319, 7
        %v3321 = vsub.s32 %v3318, %v3320
        %v3322 = vrot.slane %v3306, %v3321
        %v3324 = vunpack.c.l.s4 1966171168
        %v3325 = vunpack.c.0.s8 %v3324
        %v3326 = vlaneseq
        %v3327 = vshrl.u32 %v3326, 7
        %v3328 = vsub.s32 %v3325, %v3327
        %v3329 = vrot.slane %v3307, %v3328
        %v3331 = vunpack.c.l.s4 1966171168
        %v3332 = vunpack.c.0.s8 %v3331
        %v3333 = vlaneseq
        %v3334 = vshrl.u32 %v3333, 7
        %v3335 = vsub.s32 %v3332, %v3334
        %v3336 = vrot.slane %v3308, %v3335
        %v3337 = vcombine.high %v3315, %v3315
        %v3338 = vcombine.high %v3322, %v3322
        %v3339 = vcombine.high %v3329, %v3329
        %v3340 = vcombine.high %v3336, %v3336
        %v3341 = vlaneseq
        %v3342 = vshrl.u32 %v3341, 7
        %v3343 = vsub.s32 0, %v3342
        %v3344 = vrot.slane %v3315, %v3343
        %v3345 = vlaneseq
        %v3346 = vshrl.u32 %v3345, 7
        %v3347 = vsub.s32 0, %v3346
        %v3348 = vrot.slane %v3329, %v3347
        %v3349 = vlaneseq
        %v3350 = vshrl.u32 %v3349, 7
        %v3351 = vsub.s32 0, %v3350
        %v3352 = vrot.slane %v3337, %v3351
        %v3353 = vlaneseq
        %v3354 = vshrl.u32 %v3353, 7
        %v3355 = vsub.s32 0, %v3354
        %v3356 = vrot.slane %v3339, %v3355
        %v3357 = vlaneseq
        %v3358 = vshrl.u32 %v3357, 7
        %v3359 = vsub.s32 0, %v3358
        %v3360 = vrot.slane %v3322, %v3359
        %v3361 = vlaneseq
        %v3362 = vshrl.u32 %v3361, 7
        %v3363 = vsub.s32 0, %v3362
        %v3364 = vrot.slane %v3336, %v3363
        %v3365 = vlaneseq
        %v3366 = vshrl.u32 %v3365, 7
        %v3367 = vsub.s32 0, %v3366
        %v3368 = vrot.slane %v3338, %v3367
        %v3369 = vlaneseq
        %v3370 = vshrl.u32 %v3369, 7
        %v3371 = vsub.s32 0, %v3370
        %v3372 = vrot.slane %v3340, %v3371
        %3373 = vrot.lane.b32.xlu0 %v3344, 32
        %v3374 = vpop.permute.xlu0 %3373
        %3375 = vrot.lane.b32.xlu0 %v3348, 32
        %v3376 = vpop.permute.xlu0 %3375
        %3377 = vrot.lane.b32.xlu0 %v3352, 32
        %v3378 = vpop.permute.xlu0 %3377
        %3379 = vrot.lane.b32.xlu0 %v3356, 32
        %v3380 = vpop.permute.xlu0 %3379
        %3381 = vrot.lane.b32.xlu0 %v3360, 32
        %v3382 = vpop.permute.xlu0 %3381
        %3383 = vrot.lane.b32.xlu0 %v3364, 32
        %v3384 = vpop.permute.xlu0 %3383
        %3385 = vrot.lane.b32.xlu0 %v3368, 32
        %v3386 = vpop.permute.xlu0 %3385
        %3387 = vrot.lane.b32.xlu0 %v3372, 32
        %v3388 = vpop.permute.xlu0 %3387
        %3397 = vst.msk [vmem:[%s236 + $0x7] sm:$0x1] %vm2639, %v3374
        %3398 = vst.msk [vmem:[%s236 + $0x17] sm:$0x1] %vm2639, %v3376
        %3399 = vst.msk [vmem:[%s236 + $0x27] sm:$0x1] %vm2639, %v3378
        %3400 = vst.msk [vmem:[%s236 + $0x37] sm:$0x1] %vm2639, %v3380
        %3401 = vst.msk [vmem:[%s236 + $0x47] sm:$0x1] %vm2639, %v3382
        %3402 = vst.msk [vmem:[%s236 + $0x57] sm:$0x1] %vm2639, %v3384
        %3403 = vst.msk [vmem:[%s236 + $0x67] sm:$0x1] %vm2639, %v3386
        %3404 = vst.msk [vmem:[%s236 + $0x77] sm:$0x1] %vm2639, %v3388
        %v3405 = vld [vmem:[#allocation4 + $0x10] sm:$0xff]
        %v3407 = vcombine.high %v3405, %v3405
        %v3409 = vunpack.c.l.s4 1966171168
        %v3410 = vunpack.c.0.s8 %v3409
        %v3411 = vlaneseq
        %v3412 = vshrl.u32 %v3411, 7
        %v3413 = vsub.s32 %v3410, %v3412
        %v3414 = vrot.slane %v3405, %v3413
        %v3416 = vunpack.c.l.s4 1966171168
        %v3417 = vunpack.c.0.s8 %v3416
        %v3418 = vlaneseq
        %v3419 = vshrl.u32 %v3418, 7
        %v3420 = vsub.s32 %v3417, %v3419
        %v3421 = vrot.slane %v3407, %v3420
        %v3422 = vcombine.high %v3414, %v3414
        %v3423 = vcombine.high %v3421, %v3421
        %v3425 = vunpack.c.l.s4 1966171168
        %v3426 = vunpack.c.0.s8 %v3425
        %v3427 = vlaneseq
        %v3428 = vshrl.u32 %v3427, 7
        %v3429 = vsub.s32 %v3426, %v3428
        %v3430 = vrot.slane %v3414, %v3429
        %v3432 = vunpack.c.l.s4 1966171168
        %v3433 = vunpack.c.0.s8 %v3432
        %v3434 = vlaneseq
        %v3435 = vshrl.u32 %v3434, 7
        %v3436 = vsub.s32 %v3433, %v3435
        %v3437 = vrot.slane %v3421, %v3436
        %v3439 = vunpack.c.l.s4 1966171168
        %v3440 = vunpack.c.0.s8 %v3439
        %v3441 = vlaneseq
        %v3442 = vshrl.u32 %v3441, 7
        %v3443 = vsub.s32 %v3440, %v3442
        %v3444 = vrot.slane %v3422, %v3443
        %v3446 = vunpack.c.l.s4 1966171168
        %v3447 = vunpack.c.0.s8 %v3446
        %v3448 = vlaneseq
        %v3449 = vshrl.u32 %v3448, 7
        %v3450 = vsub.s32 %v3447, %v3449
        %v3451 = vrot.slane %v3423, %v3450
        %v3452 = vcombine.high %v3430, %v3430
        %v3453 = vcombine.high %v3437, %v3437
        %v3454 = vcombine.high %v3444, %v3444
        %v3455 = vcombine.high %v3451, %v3451
        %3464 = vst.msk [vmem:[%s236 + $0x8] sm:$0x1] %vm2639, %v3430
        %3465 = vst.msk [vmem:[%s236 + $0x18] sm:$0x1] %vm2639, %v3444
        %3466 = vst.msk [vmem:[%s236 + $0x28] sm:$0x1] %vm2639, %v3452
        %3467 = vst.msk [vmem:[%s236 + $0x38] sm:$0x1] %vm2639, %v3454
        %3468 = vst.msk [vmem:[%s236 + $0x48] sm:$0x1] %vm2639, %v3437
        %3469 = vst.msk [vmem:[%s236 + $0x58] sm:$0x1] %vm2639, %v3451
        %3470 = vst.msk [vmem:[%s236 + $0x68] sm:$0x1] %vm2639, %v3453
        %3471 = vst.msk [vmem:[%s236 + $0x78] sm:$0x1] %vm2639, %v3455
        %v3472 = vld [vmem:[#allocation4 + $0x10] sm:$0xff]
        %v3474 = vcombine.high %v3472, %v3472
        %v3476 = vunpack.c.l.s4 1966171168
        %v3477 = vunpack.c.0.s8 %v3476
        %v3478 = vlaneseq
        %v3479 = vshrl.u32 %v3478, 7
        %v3480 = vsub.s32 %v3477, %v3479
        %v3481 = vrot.slane %v3472, %v3480
        %v3483 = vunpack.c.l.s4 1966171168
        %v3484 = vunpack.c.0.s8 %v3483
        %v3485 = vlaneseq
        %v3486 = vshrl.u32 %v3485, 7
        %v3487 = vsub.s32 %v3484, %v3486
        %v3488 = vrot.slane %v3474, %v3487
        %v3489 = vcombine.high %v3481, %v3481
        %v3490 = vcombine.high %v3488, %v3488
        %v3492 = vunpack.c.l.s4 1966171168
        %v3493 = vunpack.c.0.s8 %v3492
        %v3494 = vlaneseq
        %v3495 = vshrl.u32 %v3494, 7
        %v3496 = vsub.s32 %v3493, %v3495
        %v3497 = vrot.slane %v3481, %v3496
        %v3499 = vunpack.c.l.s4 1966171168
        %v3500 = vunpack.c.0.s8 %v3499
        %v3501 = vlaneseq
        %v3502 = vshrl.u32 %v3501, 7
        %v3503 = vsub.s32 %v3500, %v3502
        %v3504 = vrot.slane %v3488, %v3503
        %v3506 = vunpack.c.l.s4 1966171168
        %v3507 = vunpack.c.0.s8 %v3506
        %v3508 = vlaneseq
        %v3509 = vshrl.u32 %v3508, 7
        %v3510 = vsub.s32 %v3507, %v3509
        %v3511 = vrot.slane %v3489, %v3510
        %v3513 = vunpack.c.l.s4 1966171168
        %v3514 = vunpack.c.0.s8 %v3513
        %v3515 = vlaneseq
        %v3516 = vshrl.u32 %v3515, 7
        %v3517 = vsub.s32 %v3514, %v3516
        %v3518 = vrot.slane %v3490, %v3517
        %v3519 = vcombine.high %v3497, %v3497
        %v3520 = vcombine.high %v3504, %v3504
        %v3521 = vcombine.high %v3511, %v3511
        %v3522 = vcombine.high %v3518, %v3518
        %v3523 = vlaneseq
        %v3524 = vshrl.u32 %v3523, 7
        %v3525 = vsub.s32 0, %v3524
        %v3526 = vrot.slane %v3497, %v3525
        %v3527 = vlaneseq
        %v3528 = vshrl.u32 %v3527, 7
        %v3529 = vsub.s32 0, %v3528
        %v3530 = vrot.slane %v3511, %v3529
        %v3531 = vlaneseq
        %v3532 = vshrl.u32 %v3531, 7
        %v3533 = vsub.s32 0, %v3532
        %v3534 = vrot.slane %v3519, %v3533
        %v3535 = vlaneseq
        %v3536 = vshrl.u32 %v3535, 7
        %v3537 = vsub.s32 0, %v3536
        %v3538 = vrot.slane %v3521, %v3537
        %v3539 = vlaneseq
        %v3540 = vshrl.u32 %v3539, 7
        %v3541 = vsub.s32 0, %v3540
        %v3542 = vrot.slane %v3504, %v3541
        %v3543 = vlaneseq
        %v3544 = vshrl.u32 %v3543, 7
        %v3545 = vsub.s32 0, %v3544
        %v3546 = vrot.slane %v3518, %v3545
        %v3547 = vlaneseq
        %v3548 = vshrl.u32 %v3547, 7
        %v3549 = vsub.s32 0, %v3548
        %v3550 = vrot.slane %v3520, %v3549
        %v3551 = vlaneseq
        %v3552 = vshrl.u32 %v3551, 7
        %v3553 = vsub.s32 0, %v3552
        %v3554 = vrot.slane %v3522, %v3553
        %3555 = vrot.lane.b32.xlu0 %v3526, 96
        %v3556 = vpop.permute.xlu0 %3555
        %3557 = vrot.lane.b32.xlu0 %v3530, 96
        %v3558 = vpop.permute.xlu0 %3557
        %3559 = vrot.lane.b32.xlu0 %v3534, 96
        %v3560 = vpop.permute.xlu0 %3559
        %3561 = vrot.lane.b32.xlu0 %v3538, 96
        %v3562 = vpop.permute.xlu0 %3561
        %3563 = vrot.lane.b32.xlu0 %v3542, 96
        %v3564 = vpop.permute.xlu0 %3563
        %3565 = vrot.lane.b32.xlu0 %v3546, 96
        %v3566 = vpop.permute.xlu0 %3565
        %3567 = vrot.lane.b32.xlu0 %v3550, 96
        %v3568 = vpop.permute.xlu0 %3567
        %3569 = vrot.lane.b32.xlu0 %v3554, 96
        %v3570 = vpop.permute.xlu0 %3569
        %3579 = vst.msk [vmem:[%s236 + $0x9] sm:$0x1] %vm2639, %v3556
        %3580 = vst.msk [vmem:[%s236 + $0x19] sm:$0x1] %vm2639, %v3558
        %3581 = vst.msk [vmem:[%s236 + $0x29] sm:$0x1] %vm2639, %v3560
        %3582 = vst.msk [vmem:[%s236 + $0x39] sm:$0x1] %vm2639, %v3562
        %3583 = vst.msk [vmem:[%s236 + $0x49] sm:$0x1] %vm2639, %v3564
        %3584 = vst.msk [vmem:[%s236 + $0x59] sm:$0x1] %vm2639, %v3566
        %3585 = vst.msk [vmem:[%s236 + $0x69] sm:$0x1] %vm2639, %v3568
        %3586 = vst.msk [vmem:[%s236 + $0x79] sm:$0x1] %vm2639, %v3570
        %v3587 = vld [vmem:[#allocation4 + $0x10] sm:$0xff]
        %v3589 = vcombine.high %v3587, %v3587
        %v3591 = vunpack.c.l.s4 1966171168
        %v3592 = vunpack.c.0.s8 %v3591
        %v3593 = vlaneseq
        %v3594 = vshrl.u32 %v3593, 7
        %v3595 = vsub.s32 %v3592, %v3594
        %v3596 = vrot.slane %v3587, %v3595
        %v3598 = vunpack.c.l.s4 1966171168
        %v3599 = vunpack.c.0.s8 %v3598
        %v3600 = vlaneseq
        %v3601 = vshrl.u32 %v3600, 7
        %v3602 = vsub.s32 %v3599, %v3601
        %v3603 = vrot.slane %v3589, %v3602
        %v3604 = vcombine.high %v3596, %v3596
        %v3605 = vcombine.high %v3603, %v3603
        %v3607 = vunpack.c.l.s4 1966171168
        %v3608 = vunpack.c.0.s8 %v3607
        %v3609 = vlaneseq
        %v3610 = vshrl.u32 %v3609, 7
        %v3611 = vsub.s32 %v3608, %v3610
        %v3612 = vrot.slane %v3596, %v3611
        %v3614 = vunpack.c.l.s4 1966171168
        %v3615 = vunpack.c.0.s8 %v3614
        %v3616 = vlaneseq
        %v3617 = vshrl.u32 %v3616, 7
        %v3618 = vsub.s32 %v3615, %v3617
        %v3619 = vrot.slane %v3603, %v3618
        %v3621 = vunpack.c.l.s4 1966171168
        %v3622 = vunpack.c.0.s8 %v3621
        %v3623 = vlaneseq
        %v3624 = vshrl.u32 %v3623, 7
        %v3625 = vsub.s32 %v3622, %v3624
        %v3626 = vrot.slane %v3604, %v3625
        %v3628 = vunpack.c.l.s4 1966171168
        %v3629 = vunpack.c.0.s8 %v3628
        %v3630 = vlaneseq
        %v3631 = vshrl.u32 %v3630, 7
        %v3632 = vsub.s32 %v3629, %v3631
        %v3633 = vrot.slane %v3605, %v3632
        %v3634 = vcombine.high %v3612, %v3612
        %v3635 = vcombine.high %v3619, %v3619
        %v3636 = vcombine.high %v3626, %v3626
        %v3637 = vcombine.high %v3633, %v3633
        %v3638 = vlaneseq
        %v3639 = vshrl.u32 %v3638, 7
        %v3640 = vsub.s32 0, %v3639
        %v3641 = vrot.slane %v3612, %v3640
        %v3642 = vlaneseq
        %v3643 = vshrl.u32 %v3642, 7
        %v3644 = vsub.s32 0, %v3643
        %v3645 = vrot.slane %v3626, %v3644
        %v3646 = vlaneseq
        %v3647 = vshrl.u32 %v3646, 7
        %v3648 = vsub.s32 0, %v3647
        %v3649 = vrot.slane %v3634, %v3648
        %v3650 = vlaneseq
        %v3651 = vshrl.u32 %v3650, 7
        %v3652 = vsub.s32 0, %v3651
        %v3653 = vrot.slane %v3636, %v3652
        %v3654 = vlaneseq
        %v3655 = vshrl.u32 %v3654, 7
        %v3656 = vsub.s32 0, %v3655
        %v3657 = vrot.slane %v3619, %v3656
        %v3658 = vlaneseq
        %v3659 = vshrl.u32 %v3658, 7
        %v3660 = vsub.s32 0, %v3659
        %v3661 = vrot.slane %v3633, %v3660
        %v3662 = vlaneseq
        %v3663 = vshrl.u32 %v3662, 7
        %v3664 = vsub.s32 0, %v3663
        %v3665 = vrot.slane %v3635, %v3664
        %v3666 = vlaneseq
        %v3667 = vshrl.u32 %v3666, 7
        %v3668 = vsub.s32 0, %v3667
        %v3669 = vrot.slane %v3637, %v3668
        %3670 = vrot.lane.b32.xlu0 %v3641, 64
        %v3671 = vpop.permute.xlu0 %3670
        %3672 = vrot.lane.b32.xlu0 %v3645, 64
        %v3673 = vpop.permute.xlu0 %3672
        %3674 = vrot.lane.b32.xlu0 %v3649, 64
        %v3675 = vpop.permute.xlu0 %3674
        %3676 = vrot.lane.b32.xlu0 %v3653, 64
        %v3677 = vpop.permute.xlu0 %3676
        %3678 = vrot.lane.b32.xlu0 %v3657, 64
        %v3679 = vpop.permute.xlu0 %3678
        %3680 = vrot.lane.b32.xlu0 %v3661, 64
        %v3681 = vpop.permute.xlu0 %3680
        %3682 = vrot.lane.b32.xlu0 %v3665, 64
        %v3683 = vpop.permute.xlu0 %3682
        %3684 = vrot.lane.b32.xlu0 %v3669, 64
        %v3685 = vpop.permute.xlu0 %3684
        %3694 = vst.msk [vmem:[%s236 + $0xa] sm:$0x1] %vm2639, %v3671
        %3695 = vst.msk [vmem:[%s236 + $0x1a] sm:$0x1] %vm2639, %v3673
        %3696 = vst.msk [vmem:[%s236 + $0x2a] sm:$0x1] %vm2639, %v3675
        %3697 = vst.msk [vmem:[%s236 + $0x3a] sm:$0x1] %vm2639, %v3677
        %3698 = vst.msk [vmem:[%s236 + $0x4a] sm:$0x1] %vm2639, %v3679
        %3699 = vst.msk [vmem:[%s236 + $0x5a] sm:$0x1] %vm2639, %v3681
        %3700 = vst.msk [vmem:[%s236 + $0x6a] sm:$0x1] %vm2639, %v3683
        %3701 = vst.msk [vmem:[%s236 + $0x7a] sm:$0x1] %vm2639, %v3685
        %v3702 = vld [vmem:[#allocation4 + $0x10] sm:$0xff]
        %v3704 = vcombine.high %v3702, %v3702
        %v3706 = vunpack.c.l.s4 1966171168
        %v3707 = vunpack.c.0.s8 %v3706
        %v3708 = vlaneseq
        %v3709 = vshrl.u32 %v3708, 7
        %v3710 = vsub.s32 %v3707, %v3709
        %v3711 = vrot.slane %v3702, %v3710
        %v3713 = vunpack.c.l.s4 1966171168
        %v3714 = vunpack.c.0.s8 %v3713
        %v3715 = vlaneseq
        %v3716 = vshrl.u32 %v3715, 7
        %v3717 = vsub.s32 %v3714, %v3716
        %v3718 = vrot.slane %v3704, %v3717
        %v3719 = vcombine.high %v3711, %v3711
        %v3720 = vcombine.high %v3718, %v3718
        %v3722 = vunpack.c.l.s4 1966171168
        %v3723 = vunpack.c.0.s8 %v3722
        %v3724 = vlaneseq
        %v3725 = vshrl.u32 %v3724, 7
        %v3726 = vsub.s32 %v3723, %v3725
        %v3727 = vrot.slane %v3711, %v3726
        %v3729 = vunpack.c.l.s4 1966171168
        %v3730 = vunpack.c.0.s8 %v3729
        %v3731 = vlaneseq
        %v3732 = vshrl.u32 %v3731, 7
        %v3733 = vsub.s32 %v3730, %v3732
        %v3734 = vrot.slane %v3718, %v3733
        %v3736 = vunpack.c.l.s4 1966171168
        %v3737 = vunpack.c.0.s8 %v3736
        %v3738 = vlaneseq
        %v3739 = vshrl.u32 %v3738, 7
        %v3740 = vsub.s32 %v3737, %v3739
        %v3741 = vrot.slane %v3719, %v3740
        %v3743 = vunpack.c.l.s4 1966171168
        %v3744 = vunpack.c.0.s8 %v3743
        %v3745 = vlaneseq
        %v3746 = vshrl.u32 %v3745, 7
        %v3747 = vsub.s32 %v3744, %v3746
        %v3748 = vrot.slane %v3720, %v3747
        %v3749 = vcombine.high %v3727, %v3727
        %v3750 = vcombine.high %v3734, %v3734
        %v3751 = vcombine.high %v3741, %v3741
        %v3752 = vcombine.high %v3748, %v3748
        %v3753 = vlaneseq
        %v3754 = vshrl.u32 %v3753, 7
        %v3755 = vsub.s32 0, %v3754
        %v3756 = vrot.slane %v3727, %v3755
        %v3757 = vlaneseq
        %v3758 = vshrl.u32 %v3757, 7
        %v3759 = vsub.s32 0, %v3758
        %v3760 = vrot.slane %v3741, %v3759
        %v3761 = vlaneseq
        %v3762 = vshrl.u32 %v3761, 7
        %v3763 = vsub.s32 0, %v3762
        %v3764 = vrot.slane %v3749, %v3763
        %v3765 = vlaneseq
        %v3766 = vshrl.u32 %v3765, 7
        %v3767 = vsub.s32 0, %v3766
        %v3768 = vrot.slane %v3751, %v3767
        %v3769 = vlaneseq
        %v3770 = vshrl.u32 %v3769, 7
        %v3771 = vsub.s32 0, %v3770
        %v3772 = vrot.slane %v3734, %v3771
        %v3773 = vlaneseq
        %v3774 = vshrl.u32 %v3773, 7
        %v3775 = vsub.s32 0, %v3774
        %v3776 = vrot.slane %v3748, %v3775
        %v3777 = vlaneseq
        %v3778 = vshrl.u32 %v3777, 7
        %v3779 = vsub.s32 0, %v3778
        %v3780 = vrot.slane %v3750, %v3779
        %v3781 = vlaneseq
        %v3782 = vshrl.u32 %v3781, 7
        %v3783 = vsub.s32 0, %v3782
        %v3784 = vrot.slane %v3752, %v3783
        %3785 = vrot.lane.b32.xlu0 %v3756, 32
        %v3786 = vpop.permute.xlu0 %3785
        %3787 = vrot.lane.b32.xlu0 %v3760, 32
        %v3788 = vpop.permute.xlu0 %3787
        %3789 = vrot.lane.b32.xlu0 %v3764, 32
        %v3790 = vpop.permute.xlu0 %3789
        %3791 = vrot.lane.b32.xlu0 %v3768, 32
        %v3792 = vpop.permute.xlu0 %3791
        %3793 = vrot.lane.b32.xlu0 %v3772, 32
        %v3794 = vpop.permute.xlu0 %3793
        %3795 = vrot.lane.b32.xlu0 %v3776, 32
        %v3796 = vpop.permute.xlu0 %3795
        %3797 = vrot.lane.b32.xlu0 %v3780, 32
        %v3798 = vpop.permute.xlu0 %3797
        %3799 = vrot.lane.b32.xlu0 %v3784, 32
        %v3800 = vpop.permute.xlu0 %3799
        %3809 = vst.msk [vmem:[%s236 + $0xb] sm:$0x1] %vm2639, %v3786
        %3810 = vst.msk [vmem:[%s236 + $0x1b] sm:$0x1] %vm2639, %v3788
        %3811 = vst.msk [vmem:[%s236 + $0x2b] sm:$0x1] %vm2639, %v3790
        %3812 = vst.msk [vmem:[%s236 + $0x3b] sm:$0x1] %vm2639, %v3792
        %3813 = vst.msk [vmem:[%s236 + $0x4b] sm:$0x1] %vm2639, %v3794
        %3814 = vst.msk [vmem:[%s236 + $0x5b] sm:$0x1] %vm2639, %v3796
        %3815 = vst.msk [vmem:[%s236 + $0x6b] sm:$0x1] %vm2639, %v3798
        %3816 = vst.msk [vmem:[%s236 + $0x7b] sm:$0x1] %vm2639, %v3800
        %v3817 = vld [vmem:[#allocation4 + $0x18] sm:$0xff]
        %v3819 = vcombine.high %v3817, %v3817
        %v3821 = vunpack.c.l.s4 1966171168
        %v3822 = vunpack.c.0.s8 %v3821
        %v3823 = vlaneseq
        %v3824 = vshrl.u32 %v3823, 7
        %v3825 = vsub.s32 %v3822, %v3824
        %v3826 = vrot.slane %v3817, %v3825
        %v3828 = vunpack.c.l.s4 1966171168
        %v3829 = vunpack.c.0.s8 %v3828
        %v3830 = vlaneseq
        %v3831 = vshrl.u32 %v3830, 7
        %v3832 = vsub.s32 %v3829, %v3831
        %v3833 = vrot.slane %v3819, %v3832
        %v3834 = vcombine.high %v3826, %v3826
        %v3835 = vcombine.high %v3833, %v3833
        %v3837 = vunpack.c.l.s4 1966171168
        %v3838 = vunpack.c.0.s8 %v3837
        %v3839 = vlaneseq
        %v3840 = vshrl.u32 %v3839, 7
        %v3841 = vsub.s32 %v3838, %v3840
        %v3842 = vrot.slane %v3826, %v3841
        %v3844 = vunpack.c.l.s4 1966171168
        %v3845 = vunpack.c.0.s8 %v3844
        %v3846 = vlaneseq
        %v3847 = vshrl.u32 %v3846, 7
        %v3848 = vsub.s32 %v3845, %v3847
        %v3849 = vrot.slane %v3833, %v3848
        %v3851 = vunpack.c.l.s4 1966171168
        %v3852 = vunpack.c.0.s8 %v3851
        %v3853 = vlaneseq
        %v3854 = vshrl.u32 %v3853, 7
        %v3855 = vsub.s32 %v3852, %v3854
        %v3856 = vrot.slane %v3834, %v3855
        %v3858 = vunpack.c.l.s4 1966171168
        %v3859 = vunpack.c.0.s8 %v3858
        %v3860 = vlaneseq
        %v3861 = vshrl.u32 %v3860, 7
        %v3862 = vsub.s32 %v3859, %v3861
        %v3863 = vrot.slane %v3835, %v3862
        %v3864 = vcombine.high %v3842, %v3842
        %v3865 = vcombine.high %v3849, %v3849
        %v3866 = vcombine.high %v3856, %v3856
        %v3867 = vcombine.high %v3863, %v3863
        %3876 = vst.msk [vmem:[%s236 + $0xc] sm:$0x1] %vm2639, %v3842
        %3877 = vst.msk [vmem:[%s236 + $0x1c] sm:$0x1] %vm2639, %v3856
        %3878 = vst.msk [vmem:[%s236 + $0x2c] sm:$0x1] %vm2639, %v3864
        %3879 = vst.msk [vmem:[%s236 + $0x3c] sm:$0x1] %vm2639, %v3866
        %3880 = vst.msk [vmem:[%s236 + $0x4c] sm:$0x1] %vm2639, %v3849
        %3881 = vst.msk [vmem:[%s236 + $0x5c] sm:$0x1] %vm2639, %v3863
        %3882 = vst.msk [vmem:[%s236 + $0x6c] sm:$0x1] %vm2639, %v3865
        %3883 = vst.msk [vmem:[%s236 + $0x7c] sm:$0x1] %vm2639, %v3867
        %v3884 = vld [vmem:[#allocation4 + $0x18] sm:$0xff]
        %v3886 = vcombine.high %v3884, %v3884
        %v3888 = vunpack.c.l.s4 1966171168
        %v3889 = vunpack.c.0.s8 %v3888
        %v3890 = vlaneseq
        %v3891 = vshrl.u32 %v3890, 7
        %v3892 = vsub.s32 %v3889, %v3891
        %v3893 = vrot.slane %v3884, %v3892
        %v3895 = vunpack.c.l.s4 1966171168
        %v3896 = vunpack.c.0.s8 %v3895
        %v3897 = vlaneseq
        %v3898 = vshrl.u32 %v3897, 7
        %v3899 = vsub.s32 %v3896, %v3898
        %v3900 = vrot.slane %v3886, %v3899
        %v3901 = vcombine.high %v3893, %v3893
        %v3902 = vcombine.high %v3900, %v3900
        %v3904 = vunpack.c.l.s4 1966171168
        %v3905 = vunpack.c.0.s8 %v3904
        %v3906 = vlaneseq
        %v3907 = vshrl.u32 %v3906, 7
        %v3908 = vsub.s32 %v3905, %v3907
        %v3909 = vrot.slane %v3893, %v3908
        %v3911 = vunpack.c.l.s4 1966171168
        %v3912 = vunpack.c.0.s8 %v3911
        %v3913 = vlaneseq
        %v3914 = vshrl.u32 %v3913, 7
        %v3915 = vsub.s32 %v3912, %v3914
        %v3916 = vrot.slane %v3900, %v3915
        %v3918 = vunpack.c.l.s4 1966171168
        %v3919 = vunpack.c.0.s8 %v3918
        %v3920 = vlaneseq
        %v3921 = vshrl.u32 %v3920, 7
        %v3922 = vsub.s32 %v3919, %v3921
        %v3923 = vrot.slane %v3901, %v3922
        %v3925 = vunpack.c.l.s4 1966171168
        %v3926 = vunpack.c.0.s8 %v3925
        %v3927 = vlaneseq
        %v3928 = vshrl.u32 %v3927, 7
        %v3929 = vsub.s32 %v3926, %v3928
        %v3930 = vrot.slane %v3902, %v3929
        %v3931 = vcombine.high %v3909, %v3909
        %v3932 = vcombine.high %v3916, %v3916
        %v3933 = vcombine.high %v3923, %v3923
        %v3934 = vcombine.high %v3930, %v3930
        %v3935 = vlaneseq
        %v3936 = vshrl.u32 %v3935, 7
        %v3937 = vsub.s32 0, %v3936
        %v3938 = vrot.slane %v3909, %v3937
        %v3939 = vlaneseq
        %v3940 = vshrl.u32 %v3939, 7
        %v3941 = vsub.s32 0, %v3940
        %v3942 = vrot.slane %v3923, %v3941
        %v3943 = vlaneseq
        %v3944 = vshrl.u32 %v3943, 7
        %v3945 = vsub.s32 0, %v3944
        %v3946 = vrot.slane %v3931, %v3945
        %v3947 = vlaneseq
        %v3948 = vshrl.u32 %v3947, 7
        %v3949 = vsub.s32 0, %v3948
        %v3950 = vrot.slane %v3933, %v3949
        %v3951 = vlaneseq
        %v3952 = vshrl.u32 %v3951, 7
        %v3953 = vsub.s32 0, %v3952
        %v3954 = vrot.slane %v3916, %v3953
        %v3955 = vlaneseq
        %v3956 = vshrl.u32 %v3955, 7
        %v3957 = vsub.s32 0, %v3956
        %v3958 = vrot.slane %v3930, %v3957
        %v3959 = vlaneseq
        %v3960 = vshrl.u32 %v3959, 7
        %v3961 = vsub.s32 0, %v3960
        %v3962 = vrot.slane %v3932, %v3961
        %v3963 = vlaneseq
        %v3964 = vshrl.u32 %v3963, 7
        %v3965 = vsub.s32 0, %v3964
        %v3966 = vrot.slane %v3934, %v3965
        %3967 = vrot.lane.b32.xlu0 %v3938, 96
        %v3968 = vpop.permute.xlu0 %3967
        %3969 = vrot.lane.b32.xlu0 %v3942, 96
        %v3970 = vpop.permute.xlu0 %3969
        %3971 = vrot.lane.b32.xlu0 %v3946, 96
        %v3972 = vpop.permute.xlu0 %3971
        %3973 = vrot.lane.b32.xlu0 %v3950, 96
        %v3974 = vpop.permute.xlu0 %3973
        %3975 = vrot.lane.b32.xlu0 %v3954, 96
        %v3976 = vpop.permute.xlu0 %3975
        %3977 = vrot.lane.b32.xlu0 %v3958, 96
        %v3978 = vpop.permute.xlu0 %3977
        %3979 = vrot.lane.b32.xlu0 %v3962, 96
        %v3980 = vpop.permute.xlu0 %3979
        %3981 = vrot.lane.b32.xlu0 %v3966, 96
        %v3982 = vpop.permute.xlu0 %3981
        %3991 = vst.msk [vmem:[%s236 + $0xd] sm:$0x1] %vm2639, %v3968
        %3992 = vst.msk [vmem:[%s236 + $0x1d] sm:$0x1] %vm2639, %v3970
        %3993 = vst.msk [vmem:[%s236 + $0x2d] sm:$0x1] %vm2639, %v3972
        %3994 = vst.msk [vmem:[%s236 + $0x3d] sm:$0x1] %vm2639, %v3974
        %3995 = vst.msk [vmem:[%s236 + $0x4d] sm:$0x1] %vm2639, %v3976
        %3996 = vst.msk [vmem:[%s236 + $0x5d] sm:$0x1] %vm2639, %v3978
        %3997 = vst.msk [vmem:[%s236 + $0x6d] sm:$0x1] %vm2639, %v3980
        %3998 = vst.msk [vmem:[%s236 + $0x7d] sm:$0x1] %vm2639, %v3982
        %v3999 = vld [vmem:[#allocation4 + $0x18] sm:$0xff]
        %v4001 = vcombine.high %v3999, %v3999
        %v4003 = vunpack.c.l.s4 1966171168
        %v4004 = vunpack.c.0.s8 %v4003
        %v4005 = vlaneseq
        %v4006 = vshrl.u32 %v4005, 7
        %v4007 = vsub.s32 %v4004, %v4006
        %v4008 = vrot.slane %v3999, %v4007
        %v4010 = vunpack.c.l.s4 1966171168
        %v4011 = vunpack.c.0.s8 %v4010
        %v4012 = vlaneseq
        %v4013 = vshrl.u32 %v4012, 7
        %v4014 = vsub.s32 %v4011, %v4013
        %v4015 = vrot.slane %v4001, %v4014
        %v4016 = vcombine.high %v4008, %v4008
        %v4017 = vcombine.high %v4015, %v4015
        %v4019 = vunpack.c.l.s4 1966171168
        %v4020 = vunpack.c.0.s8 %v4019
        %v4021 = vlaneseq
        %v4022 = vshrl.u32 %v4021, 7
        %v4023 = vsub.s32 %v4020, %v4022
        %v4024 = vrot.slane %v4008, %v4023
        %v4026 = vunpack.c.l.s4 1966171168
        %v4027 = vunpack.c.0.s8 %v4026
        %v4028 = vlaneseq
        %v4029 = vshrl.u32 %v4028, 7
        %v4030 = vsub.s32 %v4027, %v4029
        %v4031 = vrot.slane %v4015, %v4030
        %v4033 = vunpack.c.l.s4 1966171168
        %v4034 = vunpack.c.0.s8 %v4033
        %v4035 = vlaneseq
        %v4036 = vshrl.u32 %v4035, 7
        %v4037 = vsub.s32 %v4034, %v4036
        %v4038 = vrot.slane %v4016, %v4037
        %v4040 = vunpack.c.l.s4 1966171168
        %v4041 = vunpack.c.0.s8 %v4040
        %v4042 = vlaneseq
        %v4043 = vshrl.u32 %v4042, 7
        %v4044 = vsub.s32 %v4041, %v4043
        %v4045 = vrot.slane %v4017, %v4044
        %v4046 = vcombine.high %v4024, %v4024
        %v4047 = vcombine.high %v4031, %v4031
        %v4048 = vcombine.high %v4038, %v4038
        %v4049 = vcombine.high %v4045, %v4045
        %v4050 = vlaneseq
        %v4051 = vshrl.u32 %v4050, 7
        %v4052 = vsub.s32 0, %v4051
        %v4053 = vrot.slane %v4024, %v4052
        %v4054 = vlaneseq
        %v4055 = vshrl.u32 %v4054, 7
        %v4056 = vsub.s32 0, %v4055
        %v4057 = vrot.slane %v4038, %v4056
        %v4058 = vlaneseq
        %v4059 = vshrl.u32 %v4058, 7
        %v4060 = vsub.s32 0, %v4059
        %v4061 = vrot.slane %v4046, %v4060
        %v4062 = vlaneseq
        %v4063 = vshrl.u32 %v4062, 7
        %v4064 = vsub.s32 0, %v4063
        %v4065 = vrot.slane %v4048, %v4064
        %v4066 = vlaneseq
        %v4067 = vshrl.u32 %v4066, 7
        %v4068 = vsub.s32 0, %v4067
        %v4069 = vrot.slane %v4031, %v4068
        %v4070 = vlaneseq
        %v4071 = vshrl.u32 %v4070, 7
        %v4072 = vsub.s32 0, %v4071
        %v4073 = vrot.slane %v4045, %v4072
        %v4074 = vlaneseq
        %v4075 = vshrl.u32 %v4074, 7
        %v4076 = vsub.s32 0, %v4075
        %v4077 = vrot.slane %v4047, %v4076
        %v4078 = vlaneseq
        %v4079 = vshrl.u32 %v4078, 7
        %v4080 = vsub.s32 0, %v4079
        %v4081 = vrot.slane %v4049, %v4080
        %4082 = vrot.lane.b32.xlu0 %v4053, 64
        %v4083 = vpop.permute.xlu0 %4082
        %4084 = vrot.lane.b32.xlu0 %v4057, 64
        %v4085 = vpop.permute.xlu0 %4084
        %4086 = vrot.lane.b32.xlu0 %v4061, 64
        %v4087 = vpop.permute.xlu0 %4086
        %4088 = vrot.lane.b32.xlu0 %v4065, 64
        %v4089 = vpop.permute.xlu0 %4088
        %4090 = vrot.lane.b32.xlu0 %v4069, 64
        %v4091 = vpop.permute.xlu0 %4090
        %4092 = vrot.lane.b32.xlu0 %v4073, 64
        %v4093 = vpop.permute.xlu0 %4092
        %4094 = vrot.lane.b32.xlu0 %v4077, 64
        %v4095 = vpop.permute.xlu0 %4094
        %4096 = vrot.lane.b32.xlu0 %v4081, 64
        %v4097 = vpop.permute.xlu0 %4096
        %4106 = vst.msk [vmem:[%s236 + $0xe] sm:$0x1] %vm2639, %v4083
        %4107 = vst.msk [vmem:[%s236 + $0x1e] sm:$0x1] %vm2639, %v4085
        %4108 = vst.msk [vmem:[%s236 + $0x2e] sm:$0x1] %vm2639, %v4087
        %4109 = vst.msk [vmem:[%s236 + $0x3e] sm:$0x1] %vm2639, %v4089
        %4110 = vst.msk [vmem:[%s236 + $0x4e] sm:$0x1] %vm2639, %v4091
        %4111 = vst.msk [vmem:[%s236 + $0x5e] sm:$0x1] %vm2639, %v4093
        %4112 = vst.msk [vmem:[%s236 + $0x6e] sm:$0x1] %vm2639, %v4095
        %4113 = vst.msk [vmem:[%s236 + $0x7e] sm:$0x1] %vm2639, %v4097
        %v4114 = vld [vmem:[#allocation4 + $0x18] sm:$0xff]
        %v4116 = vcombine.high %v4114, %v4114
        %v4118 = vunpack.c.l.s4 1966171168
        %v4119 = vunpack.c.0.s8 %v4118
        %v4120 = vlaneseq
        %v4121 = vshrl.u32 %v4120, 7
        %v4122 = vsub.s32 %v4119, %v4121
        %v4123 = vrot.slane %v4114, %v4122
        %v4125 = vunpack.c.l.s4 1966171168
        %v4126 = vunpack.c.0.s8 %v4125
        %v4127 = vlaneseq
        %v4128 = vshrl.u32 %v4127, 7
        %v4129 = vsub.s32 %v4126, %v4128
        %v4130 = vrot.slane %v4116, %v4129
        %v4131 = vcombine.high %v4123, %v4123
        %v4132 = vcombine.high %v4130, %v4130
        %v4134 = vunpack.c.l.s4 1966171168
        %v4135 = vunpack.c.0.s8 %v4134
        %v4136 = vlaneseq
        %v4137 = vshrl.u32 %v4136, 7
        %v4138 = vsub.s32 %v4135, %v4137
        %v4139 = vrot.slane %v4123, %v4138
        %v4141 = vunpack.c.l.s4 1966171168
        %v4142 = vunpack.c.0.s8 %v4141
        %v4143 = vlaneseq
        %v4144 = vshrl.u32 %v4143, 7
        %v4145 = vsub.s32 %v4142, %v4144
        %v4146 = vrot.slane %v4130, %v4145
        %v4148 = vunpack.c.l.s4 1966171168
        %v4149 = vunpack.c.0.s8 %v4148
        %v4150 = vlaneseq
        %v4151 = vshrl.u32 %v4150, 7
        %v4152 = vsub.s32 %v4149, %v4151
        %v4153 = vrot.slane %v4131, %v4152
        %v4155 = vunpack.c.l.s4 1966171168
        %v4156 = vunpack.c.0.s8 %v4155
        %v4157 = vlaneseq
        %v4158 = vshrl.u32 %v4157, 7
        %v4159 = vsub.s32 %v4156, %v4158
        %v4160 = vrot.slane %v4132, %v4159
        %v4161 = vcombine.high %v4139, %v4139
        %v4162 = vcombine.high %v4146, %v4146
        %v4163 = vcombine.high %v4153, %v4153
        %v4164 = vcombine.high %v4160, %v4160
        %v4165 = vlaneseq
        %v4166 = vshrl.u32 %v4165, 7
        %v4167 = vsub.s32 0, %v4166
        %v4168 = vrot.slane %v4139, %v4167
        %v4169 = vlaneseq
        %v4170 = vshrl.u32 %v4169, 7
        %v4171 = vsub.s32 0, %v4170
        %v4172 = vrot.slane %v4153, %v4171
        %v4173 = vlaneseq
        %v4174 = vshrl.u32 %v4173, 7
        %v4175 = vsub.s32 0, %v4174
        %v4176 = vrot.slane %v4161, %v4175
        %v4177 = vlaneseq
        %v4178 = vshrl.u32 %v4177, 7
        %v4179 = vsub.s32 0, %v4178
        %v4180 = vrot.slane %v4163, %v4179
        %v4181 = vlaneseq
        %v4182 = vshrl.u32 %v4181, 7
        %v4183 = vsub.s32 0, %v4182
        %v4184 = vrot.slane %v4146, %v4183
        %v4185 = vlaneseq
        %v4186 = vshrl.u32 %v4185, 7
        %v4187 = vsub.s32 0, %v4186
        %v4188 = vrot.slane %v4160, %v4187
        %v4189 = vlaneseq
        %v4190 = vshrl.u32 %v4189, 7
        %v4191 = vsub.s32 0, %v4190
        %v4192 = vrot.slane %v4162, %v4191
        %v4193 = vlaneseq
        %v4194 = vshrl.u32 %v4193, 7
        %v4195 = vsub.s32 0, %v4194
        %v4196 = vrot.slane %v4164, %v4195
        %4197 = vrot.lane.b32.xlu0 %v4168, 32
        %v4198 = vpop.permute.xlu0 %4197
        %4199 = vrot.lane.b32.xlu0 %v4172, 32
        %v4200 = vpop.permute.xlu0 %4199
        %4201 = vrot.lane.b32.xlu0 %v4176, 32
        %v4202 = vpop.permute.xlu0 %4201
        %4203 = vrot.lane.b32.xlu0 %v4180, 32
        %v4204 = vpop.permute.xlu0 %4203
        %4205 = vrot.lane.b32.xlu0 %v4184, 32
        %v4206 = vpop.permute.xlu0 %4205
        %4207 = vrot.lane.b32.xlu0 %v4188, 32
        %v4208 = vpop.permute.xlu0 %4207
        %4209 = vrot.lane.b32.xlu0 %v4192, 32
        %v4210 = vpop.permute.xlu0 %4209
        %4211 = vrot.lane.b32.xlu0 %v4196, 32
        %v4212 = vpop.permute.xlu0 %4211
        %4221 = vst.msk [vmem:[%s236 + $0xf] sm:$0x1] %vm2639, %v4198
        %4222 = vst.msk [vmem:[%s236 + $0x1f] sm:$0x1] %vm2639, %v4200
        %4223 = vst.msk [vmem:[%s236 + $0x2f] sm:$0x1] %vm2639, %v4202
        %4224 = vst.msk [vmem:[%s236 + $0x3f] sm:$0x1] %vm2639, %v4204
        %4225 = vst.msk [vmem:[%s236 + $0x4f] sm:$0x1] %vm2639, %v4206
        %4226 = vst.msk [vmem:[%s236 + $0x5f] sm:$0x1] %vm2639, %v4208
        %4227 = vst.msk [vmem:[%s236 + $0x6f] sm:$0x1] %vm2639, %v4210
        %4228 = vst.msk [vmem:[%s236 + $0x7f] sm:$0x1] %vm2639, %v4212
        %s4229 = sand.u32 %s120, 1
        %s4230 = scalar_lea.sflag [#allocation6], %s4229
        %s4231 = sand.u32 %s120, 1
        %s4232 = smul.addr %s4231, 128
        %s4233 = scalar_lea.vmem [#allocation5], %s4232
        // Predicated region
        $region33: #{ppdm_pallas.1} parent=31 // pred_check
          %p4234 = pneg %p130
        $region34: #{ppdm_pallas.1} parent=31 // pred_check_branch
          %4236 = sbr.rel (%p4234) target = $region36
        $region35: #{ppdm_pallas.1} parent=31 // pred_region
          %s4237 = smul.u32 2, %s22
          %s4239 = ssub.s32 2048, 2048
          %4240 = vsyncadd %s4230, %s4239
          %s4241 = smul.addr %s21, 16
          %s4242 = sadd.s32 %s4237, %s4241
          %s4243 = smul.addr %s4242, 128
          %s4244 = scalar_lea.hbm %s3, %s4243
          %s4245 = sshll.u32 %s4233, 4
          %s4246 = int_to_ptr.vmem [resolvable:$true] %s4245
          %4251 = dma.vmem_to_hbm [thread:$0]  %s4246, 2048, %s4244, %s4230, 128, 128, 8
        $region36: #{ppdm_pallas.1} parent=31 // pred_fallthru
          _
      $region32: #{ppdm_pallas.1} parent=5 // pred_fallthru
        _
      %p4252 = scmp.le.s32.totalorder 2, %s12
      // Predicated region
      $region37: #{ppdm_pallas.1} parent=5 // pred_check
        %p4253 = pneg %p4252
      $region38: #{ppdm_pallas.1} parent=5 // pred_check_branch
        %4255 = sbr.rel (%p4253) target = $region40
      $region39: #{ppdm_pallas.1} parent=5 // pred_region
        %s4256 = ssub.s32 %s12, 2
        // Predicated region
        $region41: #{ppdm_pallas.1} parent=39 // pred_check
          %p4257 = pneg %p136
        $region42: #{ppdm_pallas.1} parent=39 // pred_check_branch
          %4259 = sbr.rel (%p4257) target = $region44
        $region43: #{ppdm_pallas.1} parent=39 // pred_region
          %s4260 = sand.u32 %s121, 1
          %s4261 = scalar_lea.sflag [#allocation6], %s4260
          %s4262 = sand.u32 %s121, 1
          %s4263 = smul.addr %s4262, 128
          %s4264 = scalar_lea.vmem [#allocation5], %s4263
          %4265 = dma.done %s4261, 2048
        $region44: #{ppdm_pallas.1} parent=39 // pred_fallthru
          _
      $region40: #{ppdm_pallas.1} parent=5 // pred_fallthru
        _
    $region6: #{ppdm_pallas.1} parent=1 // loop_footer
      %s16 = sadd.s32 1, %s12
    $region7: #{ppdm_pallas.1} parent=1 // loop_footer_branch
      %11 = sbr.rel target = $region3
    $region8: #{ppdm_pallas.1} parent=1 // loop_exit
      _
    %4266 = vsyncpa [#allocation6], 1
    %s4267 = scalar_lea.sflag [#allocation6], 1
    %4268 = vsyncpa %s4267, 1

</llo_original>
